<compile_context>
chip_gen: v6e
topology: v6e:2x2x1
jax: 0.10.0
libtpu: 0.0.40
codegen_flags: <defaults>
</compile_context>

<pallas_src>
import functools

import jax
import jax.numpy as jnp
from jax.experimental import pallas as pl
from jax.experimental.pallas import tpu as pltpu

GN_GROUPS = 32
GN_EPS = 1e-5
P0 = 128          # lane-aligned left halo of the padded flat activation buffer


def _round_up(x, m):
    return ((x + m - 1) // m) * m


# ---------------------------------------------------------------------------
# In-kernel helpers (traced inside the Pallas kernel bodies)
# ---------------------------------------------------------------------------
def _group_avg(v, gsize):
    """Group-mean broadcast of a per-channel column vector v: [C, 1] f32.

    Only traced when gsize > 1 (GroupNorm groups < channels); pure VPU/XLU."""
    c = v.shape[0]
    g = v.reshape(c // gsize, gsize)
    m = jnp.mean(g, axis=1, keepdims=True)
    return jnp.broadcast_to(m, (c // gsize, gsize)).reshape(c, 1)


def _gn_relu(y, gamma, beta, gsize):
    """GroupNorm(32) + ReLU on channel-major y: [C, HW] f32, single full-size pass."""
    mean = jnp.mean(y, axis=1, keepdims=True)            # [C, 1]
    msq = jnp.mean(y * y, axis=1, keepdims=True)         # [C, 1]
    if gsize > 1:
        mean = _group_avg(mean, gsize)
        msq = _group_avg(msq, gsize)
    var = jnp.maximum(msq - mean * mean, 0.0)
    inv = jax.lax.rsqrt(var + GN_EPS)
    a = inv * gamma                                       # [C, 1]
    b = beta - mean * a                                   # [C, 1]
    return jnp.maximum(y * a + b, 0.0)


def _conv3x3(pbuf_ref, cin, w_ref, base, masks, W, HW, mask_tb):
    """3x3 conv (pad=1, stride=1) as 9 accumulating matmuls.

    pbuf_ref holds the current activation channel-major in columns [P0, P0+HW) of a
    zero-halo buffer; the 9 shifted taps are static lane-offset slices of it.  Per-tap
    weight blocks w_ref[base + 3*dy + dx] are [Cout, cin] bf16.  Column wrap-around
    (and, when mask_tb, cross-image row wrap for the batch-folded layout) is killed by
    multiplying the f32 partial product with precomputed [1, HW] masks."""
    left, right, top, bottom = masks
    acc = None
    for dy in range(3):
        for dx in range(3):
            start = P0 + (dy - 1) * W + (dx - 1)
            tap = pbuf_ref[:cin, start:start + HW]                    # bf16 [cin, HW]
            p = jnp.dot(w_ref[base + 3 * dy + dx], tap,
                        preferred_element_type=jnp.float32)           # f32 [Cout, HW]
            m = None
            if dx == 0:
                m = left
            elif dx == 2:
                m = right
            if mask_tb:
                if dy == 0:
                    m = top if m is None else m * top
                elif dy == 2:
                    m = bottom if m is None else m * bottom
            if m is not None:
                p = p * m
            acc = p if acc is None else acc + p
    return acc


def _stacked_convs(x_ref, mask_ref, w0_ref, wrest_ref, gamma_ref, beta_ref,
                   pbuf_ref, *, W, HW, gsize, n_layers, mask_tb):
    """Runs the whole stack of 3x3 Conv+GN+ReLU layers; returns bf16 [C, HW]."""
    rows, cols = pbuf_ref.shape
    # Zero only the halo columns each grid step; the interior is overwritten every layer.
    pbuf_ref[:, :P0] = jnp.zeros((rows, P0), jnp.bfloat16)
    pbuf_ref[:, P0 + HW:] = jnp.zeros((rows, cols - P0 - HW), jnp.bfloat16)

    masks = (mask_ref[0:1, :], mask_ref[1:2, :],
             mask_ref[2:3, :], mask_ref[3:4, :])          # [1, HW] f32 each

    # layer 0 (input channels = in_channels + 2, zero-padded to a multiple of 8)
    c0p = x_ref.shape[0]
    pbuf_ref[:c0p, P0:P0 + HW] = x_ref[...]
    y = _conv3x3(pbuf_ref, c0p, w0_ref, 0, masks, W, HW, mask_tb)
    a = _gn_relu(y, gamma_ref[0], beta_ref[0], gsize).astype(jnp.bfloat16)

    # layers 1 .. n_layers-1 (channels = C throughout)
    c = a.shape[0]
    for i in range(1, n_layers):
        pbuf_ref[:c, P0:P0 + HW] = a
        y = _conv3x3(pbuf_ref, c, wrest_ref, (i - 1) * 9, masks, W, HW, mask_tb)
        a = _gn_relu(y, gamma_ref[i], beta_ref[i], gsize).astype(jnp.bfloat16)
    return a                                              # [C, HW] bf16


# ---------------------------------------------------------------------------
# Pallas kernel bodies
# ---------------------------------------------------------------------------
def _feature_branch_kernel(x_ref, mask_ref, w0_ref, wrest_ref, gamma_ref, beta_ref,
                           fw_ref, fg_ref, fb_ref, o_ref, pbuf_ref,
                           *, W, HW, gsize, n_layers, mask_tb):
    a = _stacked_convs(x_ref, mask_ref, w0_ref, wrest_ref, gamma_ref, beta_ref,
                       pbuf_ref, W=W, HW=HW, gsize=gsize, n_layers=n_layers,
                       mask_tb=mask_tb)
    # feature_out: 1x1 conv (no bias) + GN + ReLU, emitted lane-dense as [C, HW]
    y = jnp.dot(fw_ref[...], a, preferred_element_type=jnp.float32)
    y = _gn_relu(y, fg_ref[...], fb_ref[...], gsize)
    o_ref[...] = y.astype(o_ref.dtype)


def _kernal_branch_kernel(x_ref, mask_ref, w0_ref, wrest_ref, gamma_ref, beta_ref,
                          kw_ref, kb_ref, o_ref, pbuf_ref,
                          *, W, HW, gsize, n_layers, mask_tb):
    a = _stacked_convs(x_ref, mask_ref, w0_ref, wrest_ref, gamma_ref, beta_ref,
                       pbuf_ref, W=W, HW=HW, gsize=gsize, n_layers=n_layers,
                       mask_tb=mask_tb)
    # kernal_out: plain 1x1 conv with bias, emitted channel-major [C*L, B*S*S]
    y = jnp.dot(kw_ref[...], a, preferred_element_type=jnp.float32) + kb_ref[...]
    o_ref[...] = y.astype(o_ref.dtype)


def _dynamic_conv_kernel(k_ref, f_ref, o_ref):
    # SOLOv2-style dynamic 1x1 conv (grouped by batch), all batches in one step.
    # k_ref: [B, K*L, C] bf16, f_ref: [B, C, HW] bf16, o_ref: [B, K*L, HW] f32
    o_ref[...] = jnp.einsum("bkc,bch->bkh", k_ref[...], f_ref[...],
                            preferred_element_type=jnp.float32)


# ---------------------------------------------------------------------------
# pallas_call wrappers
# ---------------------------------------------------------------------------
def _run_branch(kernel_body, x_cm, masks, w0, wrest, gamma, beta, head_inputs,
                *, W, out_rows, mask_tb):
    """Fused branch: x_cm [Bg, C0p, HW] bf16 -> [Bg, out_rows, HW] bf16."""
    Bg, C0p, HW = x_cm.shape
    C = w0.shape[1]
    n_layers = wrest.shape[0] // 9 + 1
    assert n_layers >= 2
    gsize = C // GN_GROUPS
    assert P0 >= W + 1, "image width too large for the fixed halo pad"
    hw_pad = P0 + _round_up(HW + W + 2, 128)
    rows = max(C0p, C)

    kernel = functools.partial(kernel_body, W=W, HW=HW, gsize=gsize,
                               n_layers=n_layers, mask_tb=mask_tb)

    def _const_spec(arr):
        nd = arr.ndim
        return pl.BlockSpec(arr.shape, lambda b, _nd=nd: (0,) * _nd)

    in_specs = [
        pl.BlockSpec((None, C0p, HW), lambda b: (b, 0, 0)),
        pl.BlockSpec((4, HW), lambda b: (0, 0)),
        pl.BlockSpec(w0.shape, lambda b: (0, 0, 0)),
        pl.BlockSpec(wrest.shape, lambda b: (0, 0, 0)),
        pl.BlockSpec(gamma.shape, lambda b: (0, 0, 0)),
        pl.BlockSpec(beta.shape, lambda b: (0, 0, 0)),
    ] + [_const_spec(h) for h in head_inputs]

    return pl.pallas_call(
        kernel,
        out_shape=jax.ShapeDtypeStruct((Bg, out_rows, HW), jnp.bfloat16),
        grid_spec=pltpu.PrefetchScalarGridSpec(
            num_scalar_prefetch=0,
            grid=(Bg,),
            in_specs=in_specs,
            out_specs=pl.BlockSpec((None, out_rows, HW), lambda b: (b, 0, 0)),
            scratch_shapes=[pltpu.VMEM((rows, hw_pad), jnp.bfloat16)],
        ),
        compiler_params=pltpu.CompilerParams(
            dimension_semantics=("parallel",)),
    )(x_cm, masks, w0, wrest, gamma, beta, *head_inputs)


def dynamic_conv(kernels, feat_cm):
    """kernels: [B, K*L, C] bf16; feat_cm: [B, C, HW] bf16 -> [B, K*L, HW] f32."""
    B, KL, _ = kernels.shape
    HW = feat_cm.shape[-1]
    return pl.pallas_call(
        _dynamic_conv_kernel,
        out_shape=jax.ShapeDtypeStruct((B, KL, HW), jnp.float32),
    )(kernels, feat_cm)


# ---------------------------------------------------------------------------
# Plain-JAX glue (tiny tensors / layout plumbing only)
# ---------------------------------------------------------------------------
def bilinear_resize_nchw(x, out_h, out_w):
    """Matches F.interpolate(mode='bilinear', align_corners=False) on NCHW."""
    _, _, H, W = x.shape

    def make(out_size, in_size):
        o = jnp.arange(out_size, dtype=jnp.float32)
        src = (o + 0.5) * (in_size / out_size) - 0.5
        src = jnp.clip(src, 0.0, float(in_size - 1))
        lo = jnp.floor(src).astype(jnp.int32)
        hi = jnp.minimum(lo + 1, in_size - 1)
        frac = src - lo.astype(jnp.float32)
        return lo, hi, frac

    y0, y1, fy = make(out_h, H)
    x0, x1, fx = make(out_w, W)
    rows = (x[:, :, y0, :] * (1.0 - fy)[None, None, :, None]
            + x[:, :, y1, :] * fy[None, None, :, None])
    out = (rows[:, :, :, x0] * (1.0 - fx)[None, None, None, :]
           + rows[:, :, :, x1] * fx[None, None, None, :])
    return out


def _edge_masks(h, w, repeat=1):
    """[4, repeat*h*w] f32 masks: rows = left/right/top/bottom neighbor-valid masks."""
    idx = jnp.arange(repeat * h * w, dtype=jnp.int32) % (h * w)
    x = idx % w
    y = idx // w
    return jnp.stack([x != 0, x != (w - 1), y != 0, y != (h - 1)]).astype(jnp.float32)


# ---------------------------------------------------------------------------
# Parameters (natural layouts) + packing into kernel layouts
# ---------------------------------------------------------------------------
def init_params(key, in_channels, conv_out_channels, stacked_convs, text_max_length):
    C = conv_out_channels
    assert C % GN_GROUPS == 0, "GroupNorm(32) requires conv_out_channels % 32 == 0"
    assert stacked_convs >= 2
    keys = jax.random.split(key, 2 * stacked_convs + 3)
    ki = 0
    params = {"kernal_convs": [], "feature_convs": []}
    for i in range(stacked_convs):
        chn = in_channels + 2 if i == 0 else C
        w_k = 0.05 * jax.random.normal(keys[ki], (3, 3, chn, C), jnp.float32); ki += 1
        w_f = 0.05 * jax.random.normal(keys[ki], (3, 3, chn, C), jnp.float32); ki += 1
        params["kernal_convs"].append(
            {"w": w_k, "gamma": jnp.ones((C,), jnp.float32),
             "beta": jnp.zeros((C,), jnp.float32)})
        params["feature_convs"].append(
            {"w": w_f, "gamma": jnp.ones((C,), jnp.float32),
             "beta": jnp.zeros((C,), jnp.float32)})
    kout = C * text_max_length
    params["kernal_out"] = {
        "w": 0.05 * jax.random.normal(keys[ki], (kout, C), jnp.float32),   # [Cout, Cin]
        "b": 0.05 * jax.random.normal(keys[ki + 1], (kout,), jnp.float32)}
    ki += 2
    params["feature_out"] = {
        "w": 0.05 * jax.random.normal(keys[ki], (C, C), jnp.float32),      # [Cout, Cin]
        "gamma": jnp.ones((C,), jnp.float32),
        "beta": jnp.zeros((C,), jnp.float32)}
    return params


def pack_params(params, in_channels):
    """Builds bf16 per-tap weights / stacked GN params in kernel layouts."""
    C = params["feature_out"]["gamma"].shape[0]
    n = len(params["kernal_convs"])
    C0 = in_channels + 2
    C0p = _round_up(C0, 8)

    def tap_w(w):                 # [3, 3, cin, C] -> [9, C, cin_pad] bf16 (tap-major)
        cin = w.shape[2]
        cinp = _round_up(cin, 8)
        w = jnp.pad(w, ((0, 0), (0, 0), (0, cinp - cin), (0, 0)))
        return jnp.transpose(w, (0, 1, 3, 2)).reshape(9, C, cinp).astype(jnp.bfloat16)

    def pack_branch(layers):
        w0 = tap_w(layers[0]["w"])                                       # [9, C, C0p]
        wrest = jnp.concatenate([tap_w(l["w"]) for l in layers[1:]], 0)  # [(n-1)*9, C, C]
        gamma = jnp.stack([l["gamma"] for l in layers]).reshape(n, C, 1).astype(jnp.float32)
        beta = jnp.stack([l["beta"] for l in layers]).reshape(n, C, 1).astype(jnp.float32)
        return w0, wrest, gamma, beta

    packed = {
        "kernal": pack_branch(params["kernal_convs"]),
        "feature": pack_branch(params["feature_convs"]),
        "kernal_out": (params["kernal_out"]["w"].astype(jnp.bfloat16),          # [C*L, C]
                       params["kernal_out"]["b"].reshape(-1, 1).astype(jnp.float32)),
        "feature_out": (params["feature_out"]["w"].astype(jnp.bfloat16),        # [C, C]
                        params["feature_out"]["gamma"].reshape(C, 1).astype(jnp.float32),
                        params["feature_out"]["beta"].reshape(C, 1).astype(jnp.float32)),
        "C": C,
        "C0": C0,
        "C0p": C0p,
    }
    return packed


# ---------------------------------------------------------------------------
# Head forward (matches CharacterMaskAttentionHead.forward_single / forward)
# ---------------------------------------------------------------------------
def forward_single(packed, feats, matched_bboxes, num_grid, text_max_length,
                   max_category_num=None):
    """feats: [B, C, H, W] NCHW; matched_bboxes: [B, S^2] -> [B, K, L, H, W]."""
    B, _, H, W = feats.shape
    L = text_max_length
    S = num_grid
    C = packed["C"]
    C0 = packed["C0"]
    C0p = packed["C0p"]

    # Coord channels at input resolution (x first, then y), like the reference.
    xr = jnp.linspace(-1.0, 1.0, W, dtype=jnp.float32)
    yr = jnp.linspace(-1.0, 1.0, H, dtype=jnp.float32)
    yc, xc = jnp.meshgrid(yr, xr, indexing="ij")
    coord = jnp.broadcast_to(jnp.stack([xc, yc])[None], (B, 2, H, W))
    x_aug = jnp.concatenate([feats.astype(jnp.float32), coord], axis=1)    # [B, C0, H, W]
    x_grid = bilinear_resize_nchw(x_aug, S, S)                             # kernal input

    # Feature branch input: per-image channel-major flat [B, C0p, H*W] bf16.
    xf = jnp.pad(x_aug.reshape(B, C0, H * W), ((0, 0), (0, C0p - C0), (0, 0)))
    xf_cm = xf.astype(jnp.bfloat16)
    # Kernal branch input: batch folded into the lane axis -> [1, C0p, B*S*S] bf16.
    xk = jnp.pad(x_grid.reshape(B, C0, S * S), ((0, 0), (0, C0p - C0), (0, 0)))
    xk_cm = jnp.transpose(xk, (1, 0, 2)).reshape(C0p, B * S * S)[None].astype(jnp.bfloat16)

    w0_f, wrest_f, g_f, b_f = packed["feature"]
    w0_k, wrest_k, g_k, b_k = packed["kernal"]
    fo_w, fo_g, fo_b = packed["feature_out"]
    ko_w, ko_b = packed["kernal_out"]

    # Fused branch kernels: no intermediate HBM traffic.
    feat_cm = _run_branch(_feature_branch_kernel, xf_cm, _edge_masks(H, W),
                          w0_f, wrest_f, g_f, b_f, [fo_w, fo_g, fo_b],
                          W=W, out_rows=C, mask_tb=False)                  # [B, C, H*W]
    kern_cm = _run_branch(_kernal_branch_kernel, xk_cm, _edge_masks(S, S, B),
                          w0_k, wrest_k, g_k, b_k, [ko_w, ko_b],
                          W=S, out_rows=C * L, mask_tb=True)               # [1, C*L, B*S*S]

    kernal_flat = jnp.transpose(kern_cm[0].reshape(C * L, B, S * S), (1, 2, 0))  # [B, S^2, C*L]

    if max_category_num is None:
        # Data-dependent K (torch.topk output size), resolved on host like the reference.
        # Pass max_category_num statically to make this jit-able.
        counts = jnp.sum(matched_bboxes >= 1, axis=1)
        max_category_num = max(int(jnp.max(counts)), 1)
    K = max_category_num
    _, indices = jax.lax.top_k(matched_bboxes, K)                          # [B, K]
    idx = jnp.broadcast_to(indices[:, :, None], (B, K, C * L))
    gathered = jnp.take_along_axis(kernal_flat, idx, axis=1)               # [B, K, C*L]
    kernels = gathered.reshape(B, K * L, C)                                # (L, C) split

    mask_pred = dynamic_conv(kernels, feat_cm)                             # [B, K*L, HW] f32
    return mask_pred.reshape(B, K, L, H, W)


def forward(packed, feats_list, matched_bboxes_list, num_grids, text_max_length):
    preds = []
    for i in range(len(feats_list)):
        preds.append(forward_single(packed, feats_list[i], matched_bboxes_list[i],
                                    num_grids[i], text_max_length))
    return preds


# ---------------------------------------------------------------------------
if __name__ == "__main__":
    key = jax.random.PRNGKey(0)
    k_par, k_f0, k_f1 = jax.random.split(key, 3)

    B = 2
    in_channels = 32
    conv_out_channels = 32
    stacked_convs = 4
    text_max_length = 25
    num_grids = [8, 8]                 # S = 8 per level (S^2 = 64 grid cells)

    params = init_params(k_par, in_channels, conv_out_channels,
                         stacked_convs, text_max_length)
    packed = pack_params(params, in_channels)

    feats = [
        jax.random.normal(k_f0, (B, in_channels, 16, 16), jnp.float32),
        jax.random.normal(k_f1, (B, in_channels, 8, 8), jnp.float32),
    ]
    matched_bboxes = []
    for lvl in range(2):
        mb = jnp.zeros((B, num_grids[lvl] ** 2), jnp.int32)
        mb = (mb.at[0, 3].set(1).at[0, 10].set(2)
                .at[1, 5].set(1).at[1, 20].set(3).at[1, 33].set(2))
        matched_bboxes.append(mb)

    preds = forward(packed, feats, matched_bboxes, num_grids, text_max_length)
    for p in preds:
        jax.block_until_ready(p)
        assert bool(jnp.all(jnp.isfinite(p)))
    assert preds[0].shape == (2, 3, 25, 16, 16)
    assert preds[1].shape == (2, 3, 25, 8, 8)
    print("KERNEL_OK")
</pallas_src>

<mosaic_0001>
module attributes {stable_mosaic.version = 11 : i64} {
  func.func @_feature_branch_kernel(%arg0: i32, %arg1: memref<1x40x256xbf16, #tpu.memory_space<vmem>>, %arg2: memref<4x256xf32, #tpu.memory_space<vmem>>, %arg3: memref<9x32x40xbf16, #tpu.memory_space<vmem>>, %arg4: memref<27x32x32xbf16, #tpu.memory_space<vmem>>, %arg5: memref<4x32x1xf32, #tpu.memory_space<vmem>>, %arg6: memref<4x32x1xf32, #tpu.memory_space<vmem>>, %arg7: memref<32x32xbf16, #tpu.memory_space<vmem>>, %arg8: memref<32x1xf32, #tpu.memory_space<vmem>>, %arg9: memref<32x1xf32, #tpu.memory_space<vmem>>, %arg10: memref<1x32x256xbf16, #tpu.memory_space<vmem>>, %arg11: memref<40x512xbf16, #tpu.memory_space<vmem>>) attributes {dimension_semantics = [#tpu.dimension_semantics<parallel>], iteration_bounds = array<i64: 2>, scalar_prefetch = 0 : i64, scratch_operands = 1 : i64, tpu.core_type = #tpu.core_type<tc>, window_params = [{transform_indices = @transform_0, window_bounds = array<i64: 1, 40, 256>}, {pipeline_mode = #tpu.pipeline_mode<synchronous>, transform_indices = @transform_1, window_bounds = array<i64: 4, 256>}, {pipeline_mode = #tpu.pipeline_mode<synchronous>, transform_indices = @transform_2, window_bounds = array<i64: 9, 32, 40>}, {pipeline_mode = #tpu.pipeline_mode<synchronous>, transform_indices = @transform_3, window_bounds = array<i64: 27, 32, 32>}, {pipeline_mode = #tpu.pipeline_mode<synchronous>, transform_indices = @transform_4, window_bounds = array<i64: 4, 32, 1>}, {pipeline_mode = #tpu.pipeline_mode<synchronous>, transform_indices = @transform_5, window_bounds = array<i64: 4, 32, 1>}, {pipeline_mode = #tpu.pipeline_mode<synchronous>, transform_indices = @transform_6, window_bounds = array<i64: 32, 32>}, {pipeline_mode = #tpu.pipeline_mode<synchronous>, transform_indices = @transform_7, window_bounds = array<i64: 32, 1>}, {pipeline_mode = #tpu.pipeline_mode<synchronous>, transform_indices = @transform_8, window_bounds = array<i64: 32, 1>}, {transform_indices = @transform_9, window_bounds = array<i64: 1, 32, 256>}]} {
    %cst = arith.constant 0.000000e+00 : bf16
    %0 = vector.broadcast %cst : bf16 to vector<40x128xbf16>
    %c0 = arith.constant 0 : index
    %c0_0 = arith.constant 0 : index
    %1 = vector.load %arg11[%c0, %c0_0] : memref<40x512xbf16, #tpu.memory_space<vmem>>, vector<40x128xbf16>
    tpu.vector_store %arg11[%c0, %c0_0], %0 {strides = array<i32>} : memref<40x512xbf16, #tpu.memory_space<vmem>>, vector<40x128xbf16>,
    %cst_1 = arith.constant 0.000000e+00 : bf16
    %2 = vector.broadcast %cst_1 : bf16 to vector<40x128xbf16>
    %c0_2 = arith.constant 0 : index
    %c384 = arith.constant 384 : index
    %3 = vector.load %arg11[%c0_2, %c384] : memref<40x512xbf16, #tpu.memory_space<vmem>>, vector<40x128xbf16>
    tpu.vector_store %arg11[%c0_2, %c384], %2 {strides = array<i32>} : memref<40x512xbf16, #tpu.memory_space<vmem>>, vector<40x128xbf16>,
    %c0_3 = arith.constant 0 : index
    %c0_4 = arith.constant 0 : index
    %4 = vector.load %arg2[%c0_3, %c0_4] : memref<4x256xf32, #tpu.memory_space<vmem>>, vector<1x256xf32>
    %c1 = arith.constant 1 : index
    %c0_5 = arith.constant 0 : index
    %5 = vector.load %arg2[%c1, %c0_5] : memref<4x256xf32, #tpu.memory_space<vmem>>, vector<1x256xf32>
    %c0_6 = arith.constant 0 : index
    %c0_7 = arith.constant 0 : index
    %c0_8 = arith.constant 0 : index
    %6 = vector.load %arg1[%c0_6, %c0_7, %c0_8] : memref<1x40x256xbf16, #tpu.memory_space<vmem>>, vector<1x40x256xbf16>
    %7 = vector.shape_cast %6 : vector<1x40x256xbf16> to vector<40x256xbf16>
    %c0_9 = arith.constant 0 : index
    %c128 = arith.constant 128 : index
    %8 = vector.load %arg11[%c0_9, %c128] : memref<40x512xbf16, #tpu.memory_space<vmem>>, vector<40x256xbf16>
    tpu.vector_store %arg11[%c0_9, %c128], %7 {strides = array<i32>} : memref<40x512xbf16, #tpu.memory_space<vmem>>, vector<40x256xbf16>,
    %c0_10 = arith.constant 0 : index
    %c111 = arith.constant 111 : index
    %9 = vector.load %arg11[%c0_10, %c111] : memref<40x512xbf16, #tpu.memory_space<vmem>>, vector<40x256xbf16>
    %c0_11 = arith.constant 0 : index
    %c0_12 = arith.constant 0 : index
    %c0_13 = arith.constant 0 : index
    %10 = vector.load %arg3[%c0_11, %c0_12, %c0_13] : memref<9x32x40xbf16, #tpu.memory_space<vmem>>, vector<1x32x40xbf16>
    %11 = vector.shape_cast %10 : vector<1x32x40xbf16> to vector<32x40xbf16>
    %cst_14 = arith.constant dense<0.000000e+00> : vector<32x256xf32>
    %12 = tpu.matmul %11, %9, %cst_14 {dimension_numbers = #tpu.dot_dimension_numbers<[1], [0], [0], [1], [0, 0, 1, 1], [], []>} : vector<32x40xbf16>, vector<40x256xbf16>, vector<32x256xf32> -> vector<32x256xf32>
    %13 = vector.broadcast %4 : vector<1x256xf32> to vector<32x256xf32>
    %14 = arith.mulf %12, %13 : vector<32x256xf32>
    %c0_15 = arith.constant 0 : index
    %c112 = arith.constant 112 : index
    %15 = vector.load %arg11[%c0_15, %c112] : memref<40x512xbf16, #tpu.memory_space<vmem>>, vector<40x256xbf16>
    %c1_16 = arith.constant 1 : index
    %c0_17 = arith.constant 0 : index
    %c0_18 = arith.constant 0 : index
    %16 = vector.load %arg3[%c1_16, %c0_17, %c0_18] : memref<9x32x40xbf16, #tpu.memory_space<vmem>>, vector<1x32x40xbf16>
    %17 = vector.shape_cast %16 : vector<1x32x40xbf16> to vector<32x40xbf16>
    %cst_19 = arith.constant dense<0.000000e+00> : vector<32x256xf32>
    %18 = tpu.matmul %17, %15, %cst_19 {dimension_numbers = #tpu.dot_dimension_numbers<[1], [0], [0], [1], [0, 0, 1, 1], [], []>} : vector<32x40xbf16>, vector<40x256xbf16>, vector<32x256xf32> -> vector<32x256xf32>
    %19 = arith.addf %14, %18 : vector<32x256xf32>
    %c0_20 = arith.constant 0 : index
    %c113 = arith.constant 113 : index
    %20 = vector.load %arg11[%c0_20, %c113] : memref<40x512xbf16, #tpu.memory_space<vmem>>, vector<40x256xbf16>
    %c2 = arith.constant 2 : index
    %c0_21 = arith.constant 0 : index
    %c0_22 = arith.constant 0 : index
    %21 = vector.load %arg3[%c2, %c0_21, %c0_22] : memref<9x32x40xbf16, #tpu.memory_space<vmem>>, vector<1x32x40xbf16>
    %22 = vector.shape_cast %21 : vector<1x32x40xbf16> to vector<32x40xbf16>
    %cst_23 = arith.constant dense<0.000000e+00> : vector<32x256xf32>
    %23 = tpu.matmul %22, %20, %cst_23 {dimension_numbers = #tpu.dot_dimension_numbers<[1], [0], [0], [1], [0, 0, 1, 1], [], []>} : vector<32x40xbf16>, vector<40x256xbf16>, vector<32x256xf32> -> vector<32x256xf32>
    %24 = vector.broadcast %5 : vector<1x256xf32> to vector<32x256xf32>
    %25 = arith.mulf %23, %24 : vector<32x256xf32>
    %26 = arith.addf %19, %25 : vector<32x256xf32>
    %c0_24 = arith.constant 0 : index
    %c127 = arith.constant 127 : index
    %27 = vector.load %arg11[%c0_24, %c127] : memref<40x512xbf16, #tpu.memory_space<vmem>>, vector<40x256xbf16>
    %c3 = arith.constant 3 : index
    %c0_25 = arith.constant 0 : index
    %c0_26 = arith.constant 0 : index
    %28 = vector.load %arg3[%c3, %c0_25, %c0_26] : memref<9x32x40xbf16, #tpu.memory_space<vmem>>, vector<1x32x40xbf16>
    %29 = vector.shape_cast %28 : vector<1x32x40xbf16> to vector<32x40xbf16>
    %cst_27 = arith.constant dense<0.000000e+00> : vector<32x256xf32>
    %30 = tpu.matmul %29, %27, %cst_27 {dimension_numbers = #tpu.dot_dimension_numbers<[1], [0], [0], [1], [0, 0, 1, 1], [], []>} : vector<32x40xbf16>, vector<40x256xbf16>, vector<32x256xf32> -> vector<32x256xf32>
    %31 = vector.broadcast %4 : vector<1x256xf32> to vector<32x256xf32>
    %32 = arith.mulf %30, %31 : vector<32x256xf32>
    %33 = arith.addf %26, %32 : vector<32x256xf32>
    %c0_28 = arith.constant 0 : index
    %c128_29 = arith.constant 128 : index
    %34 = vector.load %arg11[%c0_28, %c128_29] : memref<40x512xbf16, #tpu.memory_space<vmem>>, vector<40x256xbf16>
    %c4 = arith.constant 4 : index
    %c0_30 = arith.constant 0 : index
    %c0_31 = arith.constant 0 : index
    %35 = vector.load %arg3[%c4, %c0_30, %c0_31] : memref<9x32x40xbf16, #tpu.memory_space<vmem>>, vector<1x32x40xbf16>
    %36 = vector.shape_cast %35 : vector<1x32x40xbf16> to vector<32x40xbf16>
    %cst_32 = arith.constant dense<0.000000e+00> : vector<32x256xf32>
    %37 = tpu.matmul %36, %34, %cst_32 {dimension_numbers = #tpu.dot_dimension_numbers<[1], [0], [0], [1], [0, 0, 1, 1], [], []>} : vector<32x40xbf16>, vector<40x256xbf16>, vector<32x256xf32> -> vector<32x256xf32>
    %38 = arith.addf %33, %37 : vector<32x256xf32>
    %c0_33 = arith.constant 0 : index
    %c129 = arith.constant 129 : index
    %39 = vector.load %arg11[%c0_33, %c129] : memref<40x512xbf16, #tpu.memory_space<vmem>>, vector<40x256xbf16>
    %c5 = arith.constant 5 : index
    %c0_34 = arith.constant 0 : index
    %c0_35 = arith.constant 0 : index
    %40 = vector.load %arg3[%c5, %c0_34, %c0_35] : memref<9x32x40xbf16, #tpu.memory_space<vmem>>, vector<1x32x40xbf16>
    %41 = vector.shape_cast %40 : vector<1x32x40xbf16> to vector<32x40xbf16>
    %cst_36 = arith.constant dense<0.000000e+00> : vector<32x256xf32>
    %42 = tpu.matmul %41, %39, %cst_36 {dimension_numbers = #tpu.dot_dimension_numbers<[1], [0], [0], [1], [0, 0, 1, 1], [], []>} : vector<32x40xbf16>, vector<40x256xbf16>, vector<32x256xf32> -> vector<32x256xf32>
    %43 = vector.broadcast %5 : vector<1x256xf32> to vector<32x256xf32>
    %44 = arith.mulf %42, %43 : vector<32x256xf32>
    %45 = arith.addf %38, %44 : vector<32x256xf32>
    %c0_37 = arith.constant 0 : index
    %c143 = arith.constant 143 : index
    %46 = vector.load %arg11[%c0_37, %c143] : memref<40x512xbf16, #tpu.memory_space<vmem>>, vector<40x256xbf16>
    %c6 = arith.constant 6 : index
    %c0_38 = arith.constant 0 : index
    %c0_39 = arith.constant 0 : index
    %47 = vector.load %arg3[%c6, %c0_38, %c0_39] : memref<9x32x40xbf16, #tpu.memory_space<vmem>>, vector<1x32x40xbf16>
    %48 = vector.shape_cast %47 : vector<1x32x40xbf16> to vector<32x40xbf16>
    %cst_40 = arith.constant dense<0.000000e+00> : vector<32x256xf32>
    %49 = tpu.matmul %48, %46, %cst_40 {dimension_numbers = #tpu.dot_dimension_numbers<[1], [0], [0], [1], [0, 0, 1, 1], [], []>} : vector<32x40xbf16>, vector<40x256xbf16>, vector<32x256xf32> -> vector<32x256xf32>
    %50 = vector.broadcast %4 : vector<1x256xf32> to vector<32x256xf32>
    %51 = arith.mulf %49, %50 : vector<32x256xf32>
    %52 = arith.addf %45, %51 : vector<32x256xf32>
    %c0_41 = arith.constant 0 : index
    %c144 = arith.constant 144 : index
    %53 = vector.load %arg11[%c0_41, %c144] : memref<40x512xbf16, #tpu.memory_space<vmem>>, vector<40x256xbf16>
    %c7 = arith.constant 7 : index
    %c0_42 = arith.constant 0 : index
    %c0_43 = arith.constant 0 : index
    %54 = vector.load %arg3[%c7, %c0_42, %c0_43] : memref<9x32x40xbf16, #tpu.memory_space<vmem>>, vector<1x32x40xbf16>
    %55 = vector.shape_cast %54 : vector<1x32x40xbf16> to vector<32x40xbf16>
    %cst_44 = arith.constant dense<0.000000e+00> : vector<32x256xf32>
    %56 = tpu.matmul %55, %53, %cst_44 {dimension_numbers = #tpu.dot_dimension_numbers<[1], [0], [0], [1], [0, 0, 1, 1], [], []>} : vector<32x40xbf16>, vector<40x256xbf16>, vector<32x256xf32> -> vector<32x256xf32>
    %57 = arith.addf %52, %56 : vector<32x256xf32>
    %c0_45 = arith.constant 0 : index
    %c145 = arith.constant 145 : index
    %58 = vector.load %arg11[%c0_45, %c145] : memref<40x512xbf16, #tpu.memory_space<vmem>>, vector<40x256xbf16>
    %c8 = arith.constant 8 : index
    %c0_46 = arith.constant 0 : index
    %c0_47 = arith.constant 0 : index
    %59 = vector.load %arg3[%c8, %c0_46, %c0_47] : memref<9x32x40xbf16, #tpu.memory_space<vmem>>, vector<1x32x40xbf16>
    %60 = vector.shape_cast %59 : vector<1x32x40xbf16> to vector<32x40xbf16>
    %cst_48 = arith.constant dense<0.000000e+00> : vector<32x256xf32>
    %61 = tpu.matmul %60, %58, %cst_48 {dimension_numbers = #tpu.dot_dimension_numbers<[1], [0], [0], [1], [0, 0, 1, 1], [], []>} : vector<32x40xbf16>, vector<40x256xbf16>, vector<32x256xf32> -> vector<32x256xf32>
    %62 = vector.broadcast %5 : vector<1x256xf32> to vector<32x256xf32>
    %63 = arith.mulf %61, %62 : vector<32x256xf32>
    %64 = arith.addf %57, %63 : vector<32x256xf32>
    %c0_49 = arith.constant 0 : index
    %c0_50 = arith.constant 0 : index
    %c0_51 = arith.constant 0 : index
    %65 = vector.load %arg5[%c0_49, %c0_50, %c0_51] : memref<4x32x1xf32, #tpu.memory_space<vmem>>, vector<1x32x1xf32>
    %66 = vector.shape_cast %65 : vector<1x32x1xf32> to vector<32x1xf32>
    %c0_52 = arith.constant 0 : index
    %c0_53 = arith.constant 0 : index
    %c0_54 = arith.constant 0 : index
    %67 = vector.load %arg6[%c0_52, %c0_53, %c0_54] : memref<4x32x1xf32, #tpu.memory_space<vmem>>, vector<1x32x1xf32>
    %68 = vector.shape_cast %67 : vector<1x32x1xf32> to vector<32x1xf32>
    %cst_55 = arith.constant dense<0.000000e+00> : vector<32xf32>
    %69 = vector.multi_reduction <add>, %64, %cst_55 [1] : vector<32x256xf32> to vector<32xf32>
    %70 = vector.shape_cast %69 : vector<32xf32> to vector<32x1xf32>
    %cst_56 = arith.constant 2.560000e+02 : f32
    %71 = vector.broadcast %cst_56 : f32 to vector<32x1xf32>
    %72 = arith.divf %70, %71 : vector<32x1xf32>
    %73 = arith.mulf %64, %64 : vector<32x256xf32>
    %cst_57 = arith.constant dense<0.000000e+00> : vector<32xf32>
    %74 = vector.multi_reduction <add>, %73, %cst_57 [1] : vector<32x256xf32> to vector<32xf32>
    %75 = vector.shape_cast %74 : vector<32xf32> to vector<32x1xf32>
    %cst_58 = arith.constant 2.560000e+02 : f32
    %76 = vector.broadcast %cst_58 : f32 to vector<32x1xf32>
    %77 = arith.divf %75, %76 : vector<32x1xf32>
    %78 = arith.mulf %72, %72 : vector<32x1xf32>
    %79 = arith.subf %77, %78 : vector<32x1xf32>
    %cst_59 = arith.constant 0.000000e+00 : f32
    %80 = vector.broadcast %cst_59 : f32 to vector<32x1xf32>
    %81 = arith.maximumf %79, %80 : vector<32x1xf32>
    %cst_60 = arith.constant 9.99999974E-6 : f32
    %82 = vector.broadcast %cst_60 : f32 to vector<32x1xf32>
    %83 = arith.addf %81, %82 : vector<32x1xf32>
    %84 = math.rsqrt %83 : vector<32x1xf32>
    %85 = arith.mulf %84, %66 : vector<32x1xf32>
    %86 = arith.mulf %72, %85 : vector<32x1xf32>
    %87 = arith.subf %68, %86 : vector<32x1xf32>
    %88 = vector.broadcast %85 : vector<32x1xf32> to vector<32x256xf32>
    %89 = arith.mulf %64, %88 : vector<32x256xf32>
    %90 = vector.broadcast %87 : vector<32x1xf32> to vector<32x256xf32>
    %91 = arith.addf %89, %90 : vector<32x256xf32>
    %cst_61 = arith.constant 0.000000e+00 : f32
    %92 = vector.broadcast %cst_61 : f32 to vector<32x256xf32>
    %93 = arith.maximumf %91, %92 : vector<32x256xf32>
    %94 = arith.truncf %93 : vector<32x256xf32> to vector<32x256xbf16>
    %c0_62 = arith.constant 0 : index
    %c128_63 = arith.constant 128 : index
    %95 = vector.load %arg11[%c0_62, %c128_63] : memref<40x512xbf16, #tpu.memory_space<vmem>>, vector<32x256xbf16>
    tpu.vector_store %arg11[%c0_62, %c128_63], %94 {strides = array<i32>} : memref<40x512xbf16, #tpu.memory_space<vmem>>, vector<32x256xbf16>,
    %c0_64 = arith.constant 0 : index
    %c111_65 = arith.constant 111 : index
    %96 = vector.load %arg11[%c0_64, %c111_65] : memref<40x512xbf16, #tpu.memory_space<vmem>>, vector<32x256xbf16>
    %c0_66 = arith.constant 0 : index
    %c0_67 = arith.constant 0 : index
    %c0_68 = arith.constant 0 : index
    %97 = vector.load %arg4[%c0_66, %c0_67, %c0_68] : memref<27x32x32xbf16, #tpu.memory_space<vmem>>, vector<1x32x32xbf16>
    %98 = vector.shape_cast %97 : vector<1x32x32xbf16> to vector<32x32xbf16>
    %cst_69 = arith.constant dense<0.000000e+00> : vector<32x256xf32>
    %99 = tpu.matmul %98, %96, %cst_69 {dimension_numbers = #tpu.dot_dimension_numbers<[1], [0], [0], [1], [0, 0, 1, 1], [], []>} : vector<32x32xbf16>, vector<32x256xbf16>, vector<32x256xf32> -> vector<32x256xf32>
    %100 = vector.broadcast %4 : vector<1x256xf32> to vector<32x256xf32>
    %101 = arith.mulf %99, %100 : vector<32x256xf32>
    %c0_70 = arith.constant 0 : index
    %c112_71 = arith.constant 112 : index
    %102 = vector.load %arg11[%c0_70, %c112_71] : memref<40x512xbf16, #tpu.memory_space<vmem>>, vector<32x256xbf16>
    %c1_72 = arith.constant 1 : index
    %c0_73 = arith.constant 0 : index
    %c0_74 = arith.constant 0 : index
    %103 = vector.load %arg4[%c1_72, %c0_73, %c0_74] : memref<27x32x32xbf16, #tpu.memory_space<vmem>>, vector<1x32x32xbf16>
    %104 = vector.shape_cast %103 : vector<1x32x32xbf16> to vector<32x32xbf16>
    %cst_75 = arith.constant dense<0.000000e+00> : vector<32x256xf32>
    %105 = tpu.matmul %104, %102, %cst_75 {dimension_numbers = #tpu.dot_dimension_numbers<[1], [0], [0], [1], [0, 0, 1, 1], [], []>} : vector<32x32xbf16>, vector<32x256xbf16>, vector<32x256xf32> -> vector<32x256xf32>
    %106 = arith.addf %101, %105 : vector<32x256xf32>
    %c0_76 = arith.constant 0 : index
    %c113_77 = arith.constant 113 : index
    %107 = vector.load %arg11[%c0_76, %c113_77] : memref<40x512xbf16, #tpu.memory_space<vmem>>, vector<32x256xbf16>
    %c2_78 = arith.constant 2 : index
    %c0_79 = arith.constant 0 : index
    %c0_80 = arith.constant 0 : index
    %108 = vector.load %arg4[%c2_78, %c0_79, %c0_80] : memref<27x32x32xbf16, #tpu.memory_space<vmem>>, vector<1x32x32xbf16>
    %109 = vector.shape_cast %108 : vector<1x32x32xbf16> to vector<32x32xbf16>
    %cst_81 = arith.constant dense<0.000000e+00> : vector<32x256xf32>
    %110 = tpu.matmul %109, %107, %cst_81 {dimension_numbers = #tpu.dot_dimension_numbers<[1], [0], [0], [1], [0, 0, 1, 1], [], []>} : vector<32x32xbf16>, vector<32x256xbf16>, vector<32x256xf32> -> vector<32x256xf32>
    %111 = vector.broadcast %5 : vector<1x256xf32> to vector<32x256xf32>
    %112 = arith.mulf %110, %111 : vector<32x256xf32>
    %113 = arith.addf %106, %112 : vector<32x256xf32>
    %c0_82 = arith.constant 0 : index
    %c127_83 = arith.constant 127 : index
    %114 = vector.load %arg11[%c0_82, %c127_83] : memref<40x512xbf16, #tpu.memory_space<vmem>>, vector<32x256xbf16>
    %c3_84 = arith.constant 3 : index
    %c0_85 = arith.constant 0 : index
    %c0_86 = arith.constant 0 : index
    %115 = vector.load %arg4[%c3_84, %c0_85, %c0_86] : memref<27x32x32xbf16, #tpu.memory_space<vmem>>, vector<1x32x32xbf16>
    %116 = vector.shape_cast %115 : vector<1x32x32xbf16> to vector<32x32xbf16>
    %cst_87 = arith.constant dense<0.000000e+00> : vector<32x256xf32>
    %117 = tpu.matmul %116, %114, %cst_87 {dimension_numbers = #tpu.dot_dimension_numbers<[1], [0], [0], [1], [0, 0, 1, 1], [], []>} : vector<32x32xbf16>, vector<32x256xbf16>, vector<32x256xf32> -> vector<32x256xf32>
    %118 = vector.broadcast %4 : vector<1x256xf32> to vector<32x256xf32>
    %119 = arith.mulf %117, %118 : vector<32x256xf32>
    %120 = arith.addf %113, %119 : vector<32x256xf32>
    %c0_88 = arith.constant 0 : index
    %c128_89 = arith.constant 128 : index
    %121 = vector.load %arg11[%c0_88, %c128_89] : memref<40x512xbf16, #tpu.memory_space<vmem>>, vector<32x256xbf16>
    %c4_90 = arith.constant 4 : index
    %c0_91 = arith.constant 0 : index
    %c0_92 = arith.constant 0 : index
    %122 = vector.load %arg4[%c4_90, %c0_91, %c0_92] : memref<27x32x32xbf16, #tpu.memory_space<vmem>>, vector<1x32x32xbf16>
    %123 = vector.shape_cast %122 : vector<1x32x32xbf16> to vector<32x32xbf16>
    %cst_93 = arith.constant dense<0.000000e+00> : vector<32x256xf32>
    %124 = tpu.matmul %123, %121, %cst_93 {dimension_numbers = #tpu.dot_dimension_numbers<[1], [0], [0], [1], [0, 0, 1, 1], [], []>} : vector<32x32xbf16>, vector<32x256xbf16>, vector<32x256xf32> -> vector<32x256xf32>
    %125 = arith.addf %120, %124 : vector<32x256xf32>
    %c0_94 = arith.constant 0 : index
    %c129_95 = arith.constant 129 : index
    %126 = vector.load %arg11[%c0_94, %c129_95] : memref<40x512xbf16, #tpu.memory_space<vmem>>, vector<32x256xbf16>
    %c5_96 = arith.constant 5 : index
    %c0_97 = arith.constant 0 : index
    %c0_98 = arith.constant 0 : index
    %127 = vector.load %arg4[%c5_96, %c0_97, %c0_98] : memref<27x32x32xbf16, #tpu.memory_space<vmem>>, vector<1x32x32xbf16>
    %128 = vector.shape_cast %127 : vector<1x32x32xbf16> to vector<32x32xbf16>
    %cst_99 = arith.constant dense<0.000000e+00> : vector<32x256xf32>
    %129 = tpu.matmul %128, %126, %cst_99 {dimension_numbers = #tpu.dot_dimension_numbers<[1], [0], [0], [1], [0, 0, 1, 1], [], []>} : vector<32x32xbf16>, vector<32x256xbf16>, vector<32x256xf32> -> vector<32x256xf32>
    %130 = vector.broadcast %5 : vector<1x256xf32> to vector<32x256xf32>
    %131 = arith.mulf %129, %130 : vector<32x256xf32>
    %132 = arith.addf %125, %131 : vector<32x256xf32>
    %c0_100 = arith.constant 0 : index
    %c143_101 = arith.constant 143 : index
    %133 = vector.load %arg11[%c0_100, %c143_101] : memref<40x512xbf16, #tpu.memory_space<vmem>>, vector<32x256xbf16>
    %c6_102 = arith.constant 6 : index
    %c0_103 = arith.constant 0 : index
    %c0_104 = arith.constant 0 : index
    %134 = vector.load %arg4[%c6_102, %c0_103, %c0_104] : memref<27x32x32xbf16, #tpu.memory_space<vmem>>, vector<1x32x32xbf16>
    %135 = vector.shape_cast %134 : vector<1x32x32xbf16> to vector<32x32xbf16>
    %cst_105 = arith.constant dense<0.000000e+00> : vector<32x256xf32>
    %136 = tpu.matmul %135, %133, %cst_105 {dimension_numbers = #tpu.dot_dimension_numbers<[1], [0], [0], [1], [0, 0, 1, 1], [], []>} : vector<32x32xbf16>, vector<32x256xbf16>, vector<32x256xf32> -> vector<32x256xf32>
    %137 = vector.broadcast %4 : vector<1x256xf32> to vector<32x256xf32>
    %138 = arith.mulf %136, %137 : vector<32x256xf32>
    %139 = arith.addf %132, %138 : vector<32x256xf32>
    %c0_106 = arith.constant 0 : index
    %c144_107 = arith.constant 144 : index
    %140 = vector.load %arg11[%c0_106, %c144_107] : memref<40x512xbf16, #tpu.memory_space<vmem>>, vector<32x256xbf16>
    %c7_108 = arith.constant 7 : index
    %c0_109 = arith.constant 0 : index
    %c0_110 = arith.constant 0 : index
    %141 = vector.load %arg4[%c7_108, %c0_109, %c0_110] : memref<27x32x32xbf16, #tpu.memory_space<vmem>>, vector<1x32x32xbf16>
    %142 = vector.shape_cast %141 : vector<1x32x32xbf16> to vector<32x32xbf16>
    %cst_111 = arith.constant dense<0.000000e+00> : vector<32x256xf32>
    %143 = tpu.matmul %142, %140, %cst_111 {dimension_numbers = #tpu.dot_dimension_numbers<[1], [0], [0], [1], [0, 0, 1, 1], [], []>} : vector<32x32xbf16>, vector<32x256xbf16>, vector<32x256xf32> -> vector<32x256xf32>
    %144 = arith.addf %139, %143 : vector<32x256xf32>
    %c0_112 = arith.constant 0 : index
    %c145_113 = arith.constant 145 : index
    %145 = vector.load %arg11[%c0_112, %c145_113] : memref<40x512xbf16, #tpu.memory_space<vmem>>, vector<32x256xbf16>
    %c8_114 = arith.constant 8 : index
    %c0_115 = arith.constant 0 : index
    %c0_116 = arith.constant 0 : index
    %146 = vector.load %arg4[%c8_114, %c0_115, %c0_116] : memref<27x32x32xbf16, #tpu.memory_space<vmem>>, vector<1x32x32xbf16>
    %147 = vector.shape_cast %146 : vector<1x32x32xbf16> to vector<32x32xbf16>
    %cst_117 = arith.constant dense<0.000000e+00> : vector<32x256xf32>
    %148 = tpu.matmul %147, %145, %cst_117 {dimension_numbers = #tpu.dot_dimension_numbers<[1], [0], [0], [1], [0, 0, 1, 1], [], []>} : vector<32x32xbf16>, vector<32x256xbf16>, vector<32x256xf32> -> vector<32x256xf32>
    %149 = vector.broadcast %5 : vector<1x256xf32> to vector<32x256xf32>
    %150 = arith.mulf %148, %149 : vector<32x256xf32>
    %151 = arith.addf %144, %150 : vector<32x256xf32>
    %c1_118 = arith.constant 1 : index
    %c0_119 = arith.constant 0 : index
    %c0_120 = arith.constant 0 : index
    %152 = vector.load %arg5[%c1_118, %c0_119, %c0_120] : memref<4x32x1xf32, #tpu.memory_space<vmem>>, vector<1x32x1xf32>
    %153 = vector.shape_cast %152 : vector<1x32x1xf32> to vector<32x1xf32>
    %c1_121 = arith.constant 1 : index
    %c0_122 = arith.constant 0 : index
    %c0_123 = arith.constant 0 : index
    %154 = vector.load %arg6[%c1_121, %c0_122, %c0_123] : memref<4x32x1xf32, #tpu.memory_space<vmem>>, vector<1x32x1xf32>
    %155 = vector.shape_cast %154 : vector<1x32x1xf32> to vector<32x1xf32>
    %cst_124 = arith.constant dense<0.000000e+00> : vector<32xf32>
    %156 = vector.multi_reduction <add>, %151, %cst_124 [1] : vector<32x256xf32> to vector<32xf32>
    %157 = vector.shape_cast %156 : vector<32xf32> to vector<32x1xf32>
    %cst_125 = arith.constant 2.560000e+02 : f32
    %158 = vector.broadcast %cst_125 : f32 to vector<32x1xf32>
    %159 = arith.divf %157, %158 : vector<32x1xf32>
    %160 = arith.mulf %151, %151 : vector<32x256xf32>
    %cst_126 = arith.constant dense<0.000000e+00> : vector<32xf32>
    %161 = vector.multi_reduction <add>, %160, %cst_126 [1] : vector<32x256xf32> to vector<32xf32>
    %162 = vector.shape_cast %161 : vector<32xf32> to vector<32x1xf32>
    %cst_127 = arith.constant 2.560000e+02 : f32
    %163 = vector.broadcast %cst_127 : f32 to vector<32x1xf32>
    %164 = arith.divf %162, %163 : vector<32x1xf32>
    %165 = arith.mulf %159, %159 : vector<32x1xf32>
    %166 = arith.subf %164, %165 : vector<32x1xf32>
    %cst_128 = arith.constant 0.000000e+00 : f32
    %167 = vector.broadcast %cst_128 : f32 to vector<32x1xf32>
    %168 = arith.maximumf %166, %167 : vector<32x1xf32>
    %cst_129 = arith.constant 9.99999974E-6 : f32
    %169 = vector.broadcast %cst_129 : f32 to vector<32x1xf32>
    %170 = arith.addf %168, %169 : vector<32x1xf32>
    %171 = math.rsqrt %170 : vector<32x1xf32>
    %172 = arith.mulf %171, %153 : vector<32x1xf32>
    %173 = arith.mulf %159, %172 : vector<32x1xf32>
    %174 = arith.subf %155, %173 : vector<32x1xf32>
    %175 = vector.broadcast %172 : vector<32x1xf32> to vector<32x256xf32>
    %176 = arith.mulf %151, %175 : vector<32x256xf32>
    %177 = vector.broadcast %174 : vector<32x1xf32> to vector<32x256xf32>
    %178 = arith.addf %176, %177 : vector<32x256xf32>
    %cst_130 = arith.constant 0.000000e+00 : f32
    %179 = vector.broadcast %cst_130 : f32 to vector<32x256xf32>
    %180 = arith.maximumf %178, %179 : vector<32x256xf32>
    %181 = arith.truncf %180 : vector<32x256xf32> to vector<32x256xbf16>
    %c0_131 = arith.constant 0 : index
    %c128_132 = arith.constant 128 : index
    %182 = vector.load %arg11[%c0_131, %c128_132] : memref<40x512xbf16, #tpu.memory_space<vmem>>, vector<32x256xbf16>
    tpu.vector_store %arg11[%c0_131, %c128_132], %181 {strides = array<i32>} : memref<40x512xbf16, #tpu.memory_space<vmem>>, vector<32x256xbf16>,
    %c0_133 = arith.constant 0 : index
    %c111_134 = arith.constant 111 : index
    %183 = vector.load %arg11[%c0_133, %c111_134] : memref<40x512xbf16, #tpu.memory_space<vmem>>, vector<32x256xbf16>
    %c9 = arith.constant 9 : index
    %c0_135 = arith.constant 0 : index
    %c0_136 = arith.constant 0 : index
    %184 = vector.load %arg4[%c9, %c0_135, %c0_136] : memref<27x32x32xbf16, #tpu.memory_space<vmem>>, vector<1x32x32xbf16>
    %185 = vector.shape_cast %184 : vector<1x32x32xbf16> to vector<32x32xbf16>
    %cst_137 = arith.constant dense<0.000000e+00> : vector<32x256xf32>
    %186 = tpu.matmul %185, %183, %cst_137 {dimension_numbers = #tpu.dot_dimension_numbers<[1], [0], [0], [1], [0, 0, 1, 1], [], []>} : vector<32x32xbf16>, vector<32x256xbf16>, vector<32x256xf32> -> vector<32x256xf32>
    %187 = vector.broadcast %4 : vector<1x256xf32> to vector<32x256xf32>
    %188 = arith.mulf %186, %187 : vector<32x256xf32>
    %c0_138 = arith.constant 0 : index
    %c112_139 = arith.constant 112 : index
    %189 = vector.load %arg11[%c0_138, %c112_139] : memref<40x512xbf16, #tpu.memory_space<vmem>>, vector<32x256xbf16>
    %c10 = arith.constant 10 : index
    %c0_140 = arith.constant 0 : index
    %c0_141 = arith.constant 0 : index
    %190 = vector.load %arg4[%c10, %c0_140, %c0_141] : memref<27x32x32xbf16, #tpu.memory_space<vmem>>, vector<1x32x32xbf16>
    %191 = vector.shape_cast %190 : vector<1x32x32xbf16> to vector<32x32xbf16>
    %cst_142 = arith.constant dense<0.000000e+00> : vector<32x256xf32>
    %192 = tpu.matmul %191, %189, %cst_142 {dimension_numbers = #tpu.dot_dimension_numbers<[1], [0], [0], [1], [0, 0, 1, 1], [], []>} : vector<32x32xbf16>, vector<32x256xbf16>, vector<32x256xf32> -> vector<32x256xf32>
    %193 = arith.addf %188, %192 : vector<32x256xf32>
    %c0_143 = arith.constant 0 : index
    %c113_144 = arith.constant 113 : index
    %194 = vector.load %arg11[%c0_143, %c113_144] : memref<40x512xbf16, #tpu.memory_space<vmem>>, vector<32x256xbf16>
    %c11 = arith.constant 11 : index
    %c0_145 = arith.constant 0 : index
    %c0_146 = arith.constant 0 : index
    %195 = vector.load %arg4[%c11, %c0_145, %c0_146] : memref<27x32x32xbf16, #tpu.memory_space<vmem>>, vector<1x32x32xbf16>
    %196 = vector.shape_cast %195 : vector<1x32x32xbf16> to vector<32x32xbf16>
    %cst_147 = arith.constant dense<0.000000e+00> : vector<32x256xf32>
    %197 = tpu.matmul %196, %194, %cst_147 {dimension_numbers = #tpu.dot_dimension_numbers<[1], [0], [0], [1], [0, 0, 1, 1], [], []>} : vector<32x32xbf16>, vector<32x256xbf16>, vector<32x256xf32> -> vector<32x256xf32>
    %198 = vector.broadcast %5 : vector<1x256xf32> to vector<32x256xf32>
    %199 = arith.mulf %197, %198 : vector<32x256xf32>
    %200 = arith.addf %193, %199 : vector<32x256xf32>
    %c0_148 = arith.constant 0 : index
    %c127_149 = arith.constant 127 : index
    %201 = vector.load %arg11[%c0_148, %c127_149] : memref<40x512xbf16, #tpu.memory_space<vmem>>, vector<32x256xbf16>
    %c12 = arith.constant 12 : index
    %c0_150 = arith.constant 0 : index
    %c0_151 = arith.constant 0 : index
    %202 = vector.load %arg4[%c12, %c0_150, %c0_151] : memref<27x32x32xbf16, #tpu.memory_space<vmem>>, vector<1x32x32xbf16>
    %203 = vector.shape_cast %202 : vector<1x32x32xbf16> to vector<32x32xbf16>
    %cst_152 = arith.constant dense<0.000000e+00> : vector<32x256xf32>
    %204 = tpu.matmul %203, %201, %cst_152 {dimension_numbers = #tpu.dot_dimension_numbers<[1], [0], [0], [1], [0, 0, 1, 1], [], []>} : vector<32x32xbf16>, vector<32x256xbf16>, vector<32x256xf32> -> vector<32x256xf32>
    %205 = vector.broadcast %4 : vector<1x256xf32> to vector<32x256xf32>
    %206 = arith.mulf %204, %205 : vector<32x256xf32>
    %207 = arith.addf %200, %206 : vector<32x256xf32>
    %c0_153 = arith.constant 0 : index
    %c128_154 = arith.constant 128 : index
    %208 = vector.load %arg11[%c0_153, %c128_154] : memref<40x512xbf16, #tpu.memory_space<vmem>>, vector<32x256xbf16>
    %c13 = arith.constant 13 : index
    %c0_155 = arith.constant 0 : index
    %c0_156 = arith.constant 0 : index
    %209 = vector.load %arg4[%c13, %c0_155, %c0_156] : memref<27x32x32xbf16, #tpu.memory_space<vmem>>, vector<1x32x32xbf16>
    %210 = vector.shape_cast %209 : vector<1x32x32xbf16> to vector<32x32xbf16>
    %cst_157 = arith.constant dense<0.000000e+00> : vector<32x256xf32>
    %211 = tpu.matmul %210, %208, %cst_157 {dimension_numbers = #tpu.dot_dimension_numbers<[1], [0], [0], [1], [0, 0, 1, 1], [], []>} : vector<32x32xbf16>, vector<32x256xbf16>, vector<32x256xf32> -> vector<32x256xf32>
    %212 = arith.addf %207, %211 : vector<32x256xf32>
    %c0_158 = arith.constant 0 : index
    %c129_159 = arith.constant 129 : index
    %213 = vector.load %arg11[%c0_158, %c129_159] : memref<40x512xbf16, #tpu.memory_space<vmem>>, vector<32x256xbf16>
    %c14 = arith.constant 14 : index
    %c0_160 = arith.constant 0 : index
    %c0_161 = arith.constant 0 : index
    %214 = vector.load %arg4[%c14, %c0_160, %c0_161] : memref<27x32x32xbf16, #tpu.memory_space<vmem>>, vector<1x32x32xbf16>
    %215 = vector.shape_cast %214 : vector<1x32x32xbf16> to vector<32x32xbf16>
    %cst_162 = arith.constant dense<0.000000e+00> : vector<32x256xf32>
    %216 = tpu.matmul %215, %213, %cst_162 {dimension_numbers = #tpu.dot_dimension_numbers<[1], [0], [0], [1], [0, 0, 1, 1], [], []>} : vector<32x32xbf16>, vector<32x256xbf16>, vector<32x256xf32> -> vector<32x256xf32>
    %217 = vector.broadcast %5 : vector<1x256xf32> to vector<32x256xf32>
    %218 = arith.mulf %216, %217 : vector<32x256xf32>
    %219 = arith.addf %212, %218 : vector<32x256xf32>
    %c0_163 = arith.constant 0 : index
    %c143_164 = arith.constant 143 : index
    %220 = vector.load %arg11[%c0_163, %c143_164] : memref<40x512xbf16, #tpu.memory_space<vmem>>, vector<32x256xbf16>
    %c15 = arith.constant 15 : index
    %c0_165 = arith.constant 0 : index
    %c0_166 = arith.constant 0 : index
    %221 = vector.load %arg4[%c15, %c0_165, %c0_166] : memref<27x32x32xbf16, #tpu.memory_space<vmem>>, vector<1x32x32xbf16>
    %222 = vector.shape_cast %221 : vector<1x32x32xbf16> to vector<32x32xbf16>
    %cst_167 = arith.constant dense<0.000000e+00> : vector<32x256xf32>
    %223 = tpu.matmul %222, %220, %cst_167 {dimension_numbers = #tpu.dot_dimension_numbers<[1], [0], [0], [1], [0, 0, 1, 1], [], []>} : vector<32x32xbf16>, vector<32x256xbf16>, vector<32x256xf32> -> vector<32x256xf32>
    %224 = vector.broadcast %4 : vector<1x256xf32> to vector<32x256xf32>
    %225 = arith.mulf %223, %224 : vector<32x256xf32>
    %226 = arith.addf %219, %225 : vector<32x256xf32>
    %c0_168 = arith.constant 0 : index
    %c144_169 = arith.constant 144 : index
    %227 = vector.load %arg11[%c0_168, %c144_169] : memref<40x512xbf16, #tpu.memory_space<vmem>>, vector<32x256xbf16>
    %c16 = arith.constant 16 : index
    %c0_170 = arith.constant 0 : index
    %c0_171 = arith.constant 0 : index
    %228 = vector.load %arg4[%c16, %c0_170, %c0_171] : memref<27x32x32xbf16, #tpu.memory_space<vmem>>, vector<1x32x32xbf16>
    %229 = vector.shape_cast %228 : vector<1x32x32xbf16> to vector<32x32xbf16>
    %cst_172 = arith.constant dense<0.000000e+00> : vector<32x256xf32>
    %230 = tpu.matmul %229, %227, %cst_172 {dimension_numbers = #tpu.dot_dimension_numbers<[1], [0], [0], [1], [0, 0, 1, 1], [], []>} : vector<32x32xbf16>, vector<32x256xbf16>, vector<32x256xf32> -> vector<32x256xf32>
    %231 = arith.addf %226, %230 : vector<32x256xf32>
    %c0_173 = arith.constant 0 : index
    %c145_174 = arith.constant 145 : index
    %232 = vector.load %arg11[%c0_173, %c145_174] : memref<40x512xbf16, #tpu.memory_space<vmem>>, vector<32x256xbf16>
    %c17 = arith.constant 17 : index
    %c0_175 = arith.constant 0 : index
    %c0_176 = arith.constant 0 : index
    %233 = vector.load %arg4[%c17, %c0_175, %c0_176] : memref<27x32x32xbf16, #tpu.memory_space<vmem>>, vector<1x32x32xbf16>
    %234 = vector.shape_cast %233 : vector<1x32x32xbf16> to vector<32x32xbf16>
    %cst_177 = arith.constant dense<0.000000e+00> : vector<32x256xf32>
    %235 = tpu.matmul %234, %232, %cst_177 {dimension_numbers = #tpu.dot_dimension_numbers<[1], [0], [0], [1], [0, 0, 1, 1], [], []>} : vector<32x32xbf16>, vector<32x256xbf16>, vector<32x256xf32> -> vector<32x256xf32>
    %236 = vector.broadcast %5 : vector<1x256xf32> to vector<32x256xf32>
    %237 = arith.mulf %235, %236 : vector<32x256xf32>
    %238 = arith.addf %231, %237 : vector<32x256xf32>
    %c2_178 = arith.constant 2 : index
    %c0_179 = arith.constant 0 : index
    %c0_180 = arith.constant 0 : index
    %239 = vector.load %arg5[%c2_178, %c0_179, %c0_180] : memref<4x32x1xf32, #tpu.memory_space<vmem>>, vector<1x32x1xf32>
    %240 = vector.shape_cast %239 : vector<1x32x1xf32> to vector<32x1xf32>
    %c2_181 = arith.constant 2 : index
    %c0_182 = arith.constant 0 : index
    %c0_183 = arith.constant 0 : index
    %241 = vector.load %arg6[%c2_181, %c0_182, %c0_183] : memref<4x32x1xf32, #tpu.memory_space<vmem>>, vector<1x32x1xf32>
    %242 = vector.shape_cast %241 : vector<1x32x1xf32> to vector<32x1xf32>
    %cst_184 = arith.constant dense<0.000000e+00> : vector<32xf32>
    %243 = vector.multi_reduction <add>, %238, %cst_184 [1] : vector<32x256xf32> to vector<32xf32>
    %244 = vector.shape_cast %243 : vector<32xf32> to vector<32x1xf32>
    %cst_185 = arith.constant 2.560000e+02 : f32
    %245 = vector.broadcast %cst_185 : f32 to vector<32x1xf32>
    %246 = arith.divf %244, %245 : vector<32x1xf32>
    %247 = arith.mulf %238, %238 : vector<32x256xf32>
    %cst_186 = arith.constant dense<0.000000e+00> : vector<32xf32>
    %248 = vector.multi_reduction <add>, %247, %cst_186 [1] : vector<32x256xf32> to vector<32xf32>
    %249 = vector.shape_cast %248 : vector<32xf32> to vector<32x1xf32>
    %cst_187 = arith.constant 2.560000e+02 : f32
    %250 = vector.broadcast %cst_187 : f32 to vector<32x1xf32>
    %251 = arith.divf %249, %250 : vector<32x1xf32>
    %252 = arith.mulf %246, %246 : vector<32x1xf32>
    %253 = arith.subf %251, %252 : vector<32x1xf32>
    %cst_188 = arith.constant 0.000000e+00 : f32
    %254 = vector.broadcast %cst_188 : f32 to vector<32x1xf32>
    %255 = arith.maximumf %253, %254 : vector<32x1xf32>
    %cst_189 = arith.constant 9.99999974E-6 : f32
    %256 = vector.broadcast %cst_189 : f32 to vector<32x1xf32>
    %257 = arith.addf %255, %256 : vector<32x1xf32>
    %258 = math.rsqrt %257 : vector<32x1xf32>
    %259 = arith.mulf %258, %240 : vector<32x1xf32>
    %260 = arith.mulf %246, %259 : vector<32x1xf32>
    %261 = arith.subf %242, %260 : vector<32x1xf32>
    %262 = vector.broadcast %259 : vector<32x1xf32> to vector<32x256xf32>
    %263 = arith.mulf %238, %262 : vector<32x256xf32>
    %264 = vector.broadcast %261 : vector<32x1xf32> to vector<32x256xf32>
    %265 = arith.addf %263, %264 : vector<32x256xf32>
    %cst_190 = arith.constant 0.000000e+00 : f32
    %266 = vector.broadcast %cst_190 : f32 to vector<32x256xf32>
    %267 = arith.maximumf %265, %266 : vector<32x256xf32>
    %268 = arith.truncf %267 : vector<32x256xf32> to vector<32x256xbf16>
    %c0_191 = arith.constant 0 : index
    %c128_192 = arith.constant 128 : index
    %269 = vector.load %arg11[%c0_191, %c128_192] : memref<40x512xbf16, #tpu.memory_space<vmem>>, vector<32x256xbf16>
    tpu.vector_store %arg11[%c0_191, %c128_192], %268 {strides = array<i32>} : memref<40x512xbf16, #tpu.memory_space<vmem>>, vector<32x256xbf16>,
    %c0_193 = arith.constant 0 : index
    %c111_194 = arith.constant 111 : index
    %270 = vector.load %arg11[%c0_193, %c111_194] : memref<40x512xbf16, #tpu.memory_space<vmem>>, vector<32x256xbf16>
    %c18 = arith.constant 18 : index
    %c0_195 = arith.constant 0 : index
    %c0_196 = arith.constant 0 : index
    %271 = vector.load %arg4[%c18, %c0_195, %c0_196] : memref<27x32x32xbf16, #tpu.memory_space<vmem>>, vector<1x32x32xbf16>
    %272 = vector.shape_cast %271 : vector<1x32x32xbf16> to vector<32x32xbf16>
    %cst_197 = arith.constant dense<0.000000e+00> : vector<32x256xf32>
    %273 = tpu.matmul %272, %270, %cst_197 {dimension_numbers = #tpu.dot_dimension_numbers<[1], [0], [0], [1], [0, 0, 1, 1], [], []>} : vector<32x32xbf16>, vector<32x256xbf16>, vector<32x256xf32> -> vector<32x256xf32>
    %274 = vector.broadcast %4 : vector<1x256xf32> to vector<32x256xf32>
    %275 = arith.mulf %273, %274 : vector<32x256xf32>
    %c0_198 = arith.constant 0 : index
    %c112_199 = arith.constant 112 : index
    %276 = vector.load %arg11[%c0_198, %c112_199] : memref<40x512xbf16, #tpu.memory_space<vmem>>, vector<32x256xbf16>
    %c19 = arith.constant 19 : index
    %c0_200 = arith.constant 0 : index
    %c0_201 = arith.constant 0 : index
    %277 = vector.load %arg4[%c19, %c0_200, %c0_201] : memref<27x32x32xbf16, #tpu.memory_space<vmem>>, vector<1x32x32xbf16>
    %278 = vector.shape_cast %277 : vector<1x32x32xbf16> to vector<32x32xbf16>
    %cst_202 = arith.constant dense<0.000000e+00> : vector<32x256xf32>
    %279 = tpu.matmul %278, %276, %cst_202 {dimension_numbers = #tpu.dot_dimension_numbers<[1], [0], [0], [1], [0, 0, 1, 1], [], []>} : vector<32x32xbf16>, vector<32x256xbf16>, vector<32x256xf32> -> vector<32x256xf32>
    %280 = arith.addf %275, %279 : vector<32x256xf32>
    %c0_203 = arith.constant 0 : index
    %c113_204 = arith.constant 113 : index
    %281 = vector.load %arg11[%c0_203, %c113_204] : memref<40x512xbf16, #tpu.memory_space<vmem>>, vector<32x256xbf16>
    %c20 = arith.constant 20 : index
    %c0_205 = arith.constant 0 : index
    %c0_206 = arith.constant 0 : index
    %282 = vector.load %arg4[%c20, %c0_205, %c0_206] : memref<27x32x32xbf16, #tpu.memory_space<vmem>>, vector<1x32x32xbf16>
    %283 = vector.shape_cast %282 : vector<1x32x32xbf16> to vector<32x32xbf16>
    %cst_207 = arith.constant dense<0.000000e+00> : vector<32x256xf32>
    %284 = tpu.matmul %283, %281, %cst_207 {dimension_numbers = #tpu.dot_dimension_numbers<[1], [0], [0], [1], [0, 0, 1, 1], [], []>} : vector<32x32xbf16>, vector<32x256xbf16>, vector<32x256xf32> -> vector<32x256xf32>
    %285 = vector.broadcast %5 : vector<1x256xf32> to vector<32x256xf32>
    %286 = arith.mulf %284, %285 : vector<32x256xf32>
    %287 = arith.addf %280, %286 : vector<32x256xf32>
    %c0_208 = arith.constant 0 : index
    %c127_209 = arith.constant 127 : index
    %288 = vector.load %arg11[%c0_208, %c127_209] : memref<40x512xbf16, #tpu.memory_space<vmem>>, vector<32x256xbf16>
    %c21 = arith.constant 21 : index
    %c0_210 = arith.constant 0 : index
    %c0_211 = arith.constant 0 : index
    %289 = vector.load %arg4[%c21, %c0_210, %c0_211] : memref<27x32x32xbf16, #tpu.memory_space<vmem>>, vector<1x32x32xbf16>
    %290 = vector.shape_cast %289 : vector<1x32x32xbf16> to vector<32x32xbf16>
    %cst_212 = arith.constant dense<0.000000e+00> : vector<32x256xf32>
    %291 = tpu.matmul %290, %288, %cst_212 {dimension_numbers = #tpu.dot_dimension_numbers<[1], [0], [0], [1], [0, 0, 1, 1], [], []>} : vector<32x32xbf16>, vector<32x256xbf16>, vector<32x256xf32> -> vector<32x256xf32>
    %292 = vector.broadcast %4 : vector<1x256xf32> to vector<32x256xf32>
    %293 = arith.mulf %291, %292 : vector<32x256xf32>
    %294 = arith.addf %287, %293 : vector<32x256xf32>
    %c0_213 = arith.constant 0 : index
    %c128_214 = arith.constant 128 : index
    %295 = vector.load %arg11[%c0_213, %c128_214] : memref<40x512xbf16, #tpu.memory_space<vmem>>, vector<32x256xbf16>
    %c22 = arith.constant 22 : index
    %c0_215 = arith.constant 0 : index
    %c0_216 = arith.constant 0 : index
    %296 = vector.load %arg4[%c22, %c0_215, %c0_216] : memref<27x32x32xbf16, #tpu.memory_space<vmem>>, vector<1x32x32xbf16>
    %297 = vector.shape_cast %296 : vector<1x32x32xbf16> to vector<32x32xbf16>
    %cst_217 = arith.constant dense<0.000000e+00> : vector<32x256xf32>
    %298 = tpu.matmul %297, %295, %cst_217 {dimension_numbers = #tpu.dot_dimension_numbers<[1], [0], [0], [1], [0, 0, 1, 1], [], []>} : vector<32x32xbf16>, vector<32x256xbf16>, vector<32x256xf32> -> vector<32x256xf32>
    %299 = arith.addf %294, %298 : vector<32x256xf32>
    %c0_218 = arith.constant 0 : index
    %c129_219 = arith.constant 129 : index
    %300 = vector.load %arg11[%c0_218, %c129_219] : memref<40x512xbf16, #tpu.memory_space<vmem>>, vector<32x256xbf16>
    %c23 = arith.constant 23 : index
    %c0_220 = arith.constant 0 : index
    %c0_221 = arith.constant 0 : index
    %301 = vector.load %arg4[%c23, %c0_220, %c0_221] : memref<27x32x32xbf16, #tpu.memory_space<vmem>>, vector<1x32x32xbf16>
    %302 = vector.shape_cast %301 : vector<1x32x32xbf16> to vector<32x32xbf16>
    %cst_222 = arith.constant dense<0.000000e+00> : vector<32x256xf32>
    %303 = tpu.matmul %302, %300, %cst_222 {dimension_numbers = #tpu.dot_dimension_numbers<[1], [0], [0], [1], [0, 0, 1, 1], [], []>} : vector<32x32xbf16>, vector<32x256xbf16>, vector<32x256xf32> -> vector<32x256xf32>
    %304 = vector.broadcast %5 : vector<1x256xf32> to vector<32x256xf32>
    %305 = arith.mulf %303, %304 : vector<32x256xf32>
    %306 = arith.addf %299, %305 : vector<32x256xf32>
    %c0_223 = arith.constant 0 : index
    %c143_224 = arith.constant 143 : index
    %307 = vector.load %arg11[%c0_223, %c143_224] : memref<40x512xbf16, #tpu.memory_space<vmem>>, vector<32x256xbf16>
    %c24 = arith.constant 24 : index
    %c0_225 = arith.constant 0 : index
    %c0_226 = arith.constant 0 : index
    %308 = vector.load %arg4[%c24, %c0_225, %c0_226] : memref<27x32x32xbf16, #tpu.memory_space<vmem>>, vector<1x32x32xbf16>
    %309 = vector.shape_cast %308 : vector<1x32x32xbf16> to vector<32x32xbf16>
    %cst_227 = arith.constant dense<0.000000e+00> : vector<32x256xf32>
    %310 = tpu.matmul %309, %307, %cst_227 {dimension_numbers = #tpu.dot_dimension_numbers<[1], [0], [0], [1], [0, 0, 1, 1], [], []>} : vector<32x32xbf16>, vector<32x256xbf16>, vector<32x256xf32> -> vector<32x256xf32>
    %311 = vector.broadcast %4 : vector<1x256xf32> to vector<32x256xf32>
    %312 = arith.mulf %310, %311 : vector<32x256xf32>
    %313 = arith.addf %306, %312 : vector<32x256xf32>
    %c0_228 = arith.constant 0 : index
    %c144_229 = arith.constant 144 : index
    %314 = vector.load %arg11[%c0_228, %c144_229] : memref<40x512xbf16, #tpu.memory_space<vmem>>, vector<32x256xbf16>
    %c25 = arith.constant 25 : index
    %c0_230 = arith.constant 0 : index
    %c0_231 = arith.constant 0 : index
    %315 = vector.load %arg4[%c25, %c0_230, %c0_231] : memref<27x32x32xbf16, #tpu.memory_space<vmem>>, vector<1x32x32xbf16>
    %316 = vector.shape_cast %315 : vector<1x32x32xbf16> to vector<32x32xbf16>
    %cst_232 = arith.constant dense<0.000000e+00> : vector<32x256xf32>
    %317 = tpu.matmul %316, %314, %cst_232 {dimension_numbers = #tpu.dot_dimension_numbers<[1], [0], [0], [1], [0, 0, 1, 1], [], []>} : vector<32x32xbf16>, vector<32x256xbf16>, vector<32x256xf32> -> vector<32x256xf32>
    %318 = arith.addf %313, %317 : vector<32x256xf32>
    %c0_233 = arith.constant 0 : index
    %c145_234 = arith.constant 145 : index
    %319 = vector.load %arg11[%c0_233, %c145_234] : memref<40x512xbf16, #tpu.memory_space<vmem>>, vector<32x256xbf16>
    %c26 = arith.constant 26 : index
    %c0_235 = arith.constant 0 : index
    %c0_236 = arith.constant 0 : index
    %320 = vector.load %arg4[%c26, %c0_235, %c0_236] : memref<27x32x32xbf16, #tpu.memory_space<vmem>>, vector<1x32x32xbf16>
    %321 = vector.shape_cast %320 : vector<1x32x32xbf16> to vector<32x32xbf16>
    %cst_237 = arith.constant dense<0.000000e+00> : vector<32x256xf32>
    %322 = tpu.matmul %321, %319, %cst_237 {dimension_numbers = #tpu.dot_dimension_numbers<[1], [0], [0], [1], [0, 0, 1, 1], [], []>} : vector<32x32xbf16>, vector<32x256xbf16>, vector<32x256xf32> -> vector<32x256xf32>
    %323 = vector.broadcast %5 : vector<1x256xf32> to vector<32x256xf32>
    %324 = arith.mulf %322, %323 : vector<32x256xf32>
    %325 = arith.addf %318, %324 : vector<32x256xf32>
    %c3_238 = arith.constant 3 : index
    %c0_239 = arith.constant 0 : index
    %c0_240 = arith.constant 0 : index
    %326 = vector.load %arg5[%c3_238, %c0_239, %c0_240] : memref<4x32x1xf32, #tpu.memory_space<vmem>>, vector<1x32x1xf32>
    %327 = vector.shape_cast %326 : vector<1x32x1xf32> to vector<32x1xf32>
    %c3_241 = arith.constant 3 : index
    %c0_242 = arith.constant 0 : index
    %c0_243 = arith.constant 0 : index
    %328 = vector.load %arg6[%c3_241, %c0_242, %c0_243] : memref<4x32x1xf32, #tpu.memory_space<vmem>>, vector<1x32x1xf32>
    %329 = vector.shape_cast %328 : vector<1x32x1xf32> to vector<32x1xf32>
    %cst_244 = arith.constant dense<0.000000e+00> : vector<32xf32>
    %330 = vector.multi_reduction <add>, %325, %cst_244 [1] : vector<32x256xf32> to vector<32xf32>
    %331 = vector.shape_cast %330 : vector<32xf32> to vector<32x1xf32>
    %cst_245 = arith.constant 2.560000e+02 : f32
    %332 = vector.broadcast %cst_245 : f32 to vector<32x1xf32>
    %333 = arith.divf %331, %332 : vector<32x1xf32>
    %334 = arith.mulf %325, %325 : vector<32x256xf32>
    %cst_246 = arith.constant dense<0.000000e+00> : vector<32xf32>
    %335 = vector.multi_reduction <add>, %334, %cst_246 [1] : vector<32x256xf32> to vector<32xf32>
    %336 = vector.shape_cast %335 : vector<32xf32> to vector<32x1xf32>
    %cst_247 = arith.constant 2.560000e+02 : f32
    %337 = vector.broadcast %cst_247 : f32 to vector<32x1xf32>
    %338 = arith.divf %336, %337 : vector<32x1xf32>
    %339 = arith.mulf %333, %333 : vector<32x1xf32>
    %340 = arith.subf %338, %339 : vector<32x1xf32>
    %cst_248 = arith.constant 0.000000e+00 : f32
    %341 = vector.broadcast %cst_248 : f32 to vector<32x1xf32>
    %342 = arith.maximumf %340, %341 : vector<32x1xf32>
    %cst_249 = arith.constant 9.99999974E-6 : f32
    %343 = vector.broadcast %cst_249 : f32 to vector<32x1xf32>
    %344 = arith.addf %342, %343 : vector<32x1xf32>
    %345 = math.rsqrt %344 : vector<32x1xf32>
    %346 = arith.mulf %345, %327 : vector<32x1xf32>
    %347 = arith.mulf %333, %346 : vector<32x1xf32>
    %348 = arith.subf %329, %347 : vector<32x1xf32>
    %349 = vector.broadcast %346 : vector<32x1xf32> to vector<32x256xf32>
    %350 = arith.mulf %325, %349 : vector<32x256xf32>
    %351 = vector.broadcast %348 : vector<32x1xf32> to vector<32x256xf32>
    %352 = arith.addf %350, %351 : vector<32x256xf32>
    %cst_250 = arith.constant 0.000000e+00 : f32
    %353 = vector.broadcast %cst_250 : f32 to vector<32x256xf32>
    %354 = arith.maximumf %352, %353 : vector<32x256xf32>
    %355 = arith.truncf %354 : vector<32x256xf32> to vector<32x256xbf16>
    %c0_251 = arith.constant 0 : index
    %c0_252 = arith.constant 0 : index
    %356 = vector.load %arg7[%c0_251, %c0_252] : memref<32x32xbf16, #tpu.memory_space<vmem>>, vector<32x32xbf16>
    %cst_253 = arith.constant dense<0.000000e+00> : vector<32x256xf32>
    %357 = tpu.matmul %356, %355, %cst_253 {dimension_numbers = #tpu.dot_dimension_numbers<[1], [0], [0], [1], [0, 0, 1, 1], [], []>} : vector<32x32xbf16>, vector<32x256xbf16>, vector<32x256xf32> -> vector<32x256xf32>
    %c0_254 = arith.constant 0 : index
    %c0_255 = arith.constant 0 : index
    %358 = vector.load %arg8[%c0_254, %c0_255] : memref<32x1xf32, #tpu.memory_space<vmem>>, vector<32x1xf32>
    %c0_256 = arith.constant 0 : index
    %c0_257 = arith.constant 0 : index
    %359 = vector.load %arg9[%c0_256, %c0_257] : memref<32x1xf32, #tpu.memory_space<vmem>>, vector<32x1xf32>
    %cst_258 = arith.constant dense<0.000000e+00> : vector<32xf32>
    %360 = vector.multi_reduction <add>, %357, %cst_258 [1] : vector<32x256xf32> to vector<32xf32>
    %361 = vector.shape_cast %360 : vector<32xf32> to vector<32x1xf32>
    %cst_259 = arith.constant 2.560000e+02 : f32
    %362 = vector.broadcast %cst_259 : f32 to vector<32x1xf32>
    %363 = arith.divf %361, %362 : vector<32x1xf32>
    %364 = arith.mulf %357, %357 : vector<32x256xf32>
    %cst_260 = arith.constant dense<0.000000e+00> : vector<32xf32>
    %365 = vector.multi_reduction <add>, %364, %cst_260 [1] : vector<32x256xf32> to vector<32xf32>
    %366 = vector.shape_cast %365 : vector<32xf32> to vector<32x1xf32>
    %cst_261 = arith.constant 2.560000e+02 : f32
    %367 = vector.broadcast %cst_261 : f32 to vector<32x1xf32>
    %368 = arith.divf %366, %367 : vector<32x1xf32>
    %369 = arith.mulf %363, %363 : vector<32x1xf32>
    %370 = arith.subf %368, %369 : vector<32x1xf32>
    %cst_262 = arith.constant 0.000000e+00 : f32
    %371 = vector.broadcast %cst_262 : f32 to vector<32x1xf32>
    %372 = arith.maximumf %370, %371 : vector<32x1xf32>
    %cst_263 = arith.constant 9.99999974E-6 : f32
    %373 = vector.broadcast %cst_263 : f32 to vector<32x1xf32>
    %374 = arith.addf %372, %373 : vector<32x1xf32>
    %375 = math.rsqrt %374 : vector<32x1xf32>
    %376 = arith.mulf %375, %358 : vector<32x1xf32>
    %377 = arith.mulf %363, %376 : vector<32x1xf32>
    %378 = arith.subf %359, %377 : vector<32x1xf32>
    %379 = vector.broadcast %376 : vector<32x1xf32> to vector<32x256xf32>
    %380 = arith.mulf %357, %379 : vector<32x256xf32>
    %381 = vector.broadcast %378 : vector<32x1xf32> to vector<32x256xf32>
    %382 = arith.addf %380, %381 : vector<32x256xf32>
    %cst_264 = arith.constant 0.000000e+00 : f32
    %383 = vector.broadcast %cst_264 : f32 to vector<32x256xf32>
    %384 = arith.maximumf %382, %383 : vector<32x256xf32>
    %385 = arith.truncf %384 : vector<32x256xf32> to vector<32x256xbf16>
    %c0_265 = arith.constant 0 : index
    %c0_266 = arith.constant 0 : index
    %c0_267 = arith.constant 0 : index
    %386 = vector.load %arg10[%c0_265, %c0_266, %c0_267] : memref<1x32x256xbf16, #tpu.memory_space<vmem>>, vector<1x32x256xbf16>
    %387 = vector.shape_cast %386 : vector<1x32x256xbf16> to vector<32x256xbf16>
    %388 = vector.shape_cast %385 : vector<32x256xbf16> to vector<1x32x256xbf16>
    tpu.vector_store %arg10[%c0_265, %c0_266, %c0_267], %388 {strides = array<i32>} : memref<1x32x256xbf16, #tpu.memory_space<vmem>>, vector<1x32x256xbf16>,
    return
  }
  func.func @transform_0(%arg0: i32) -> (i32, i32, i32) {
    %c0_i32 = arith.constant 0 : i32
    %c0_i32_0 = arith.constant 0 : i32
    %c0_i32_1 = arith.constant 0 : i32
    return %arg0, %c0_i32, %c0_i32_0 : i32, i32, i32
  }
  func.func @transform_1(%arg0: i32) -> (i32, i32) {
    %c0_i32 = arith.constant 0 : i32
    %c0_i32_0 = arith.constant 0 : i32
    %c0_i32_1 = arith.constant 0 : i32
    return %c0_i32, %c0_i32_0 : i32, i32
  }
  func.func @transform_2(%arg0: i32) -> (i32, i32, i32) {
    %c0_i32 = arith.constant 0 : i32
    %c0_i32_0 = arith.constant 0 : i32
    %c0_i32_1 = arith.constant 0 : i32
    %c0_i32_2 = arith.constant 0 : i32
    return %c0_i32, %c0_i32_0, %c0_i32_1 : i32, i32, i32
  }
  func.func @transform_3(%arg0: i32) -> (i32, i32, i32) {
    %c0_i32 = arith.constant 0 : i32
    %c0_i32_0 = arith.constant 0 : i32
    %c0_i32_1 = arith.constant 0 : i32
    %c0_i32_2 = arith.constant 0 : i32
    return %c0_i32, %c0_i32_0, %c0_i32_1 : i32, i32, i32
  }
  func.func @transform_4(%arg0: i32) -> (i32, i32, i32) {
    %c0_i32 = arith.constant 0 : i32
    %c0_i32_0 = arith.constant 0 : i32
    %c0_i32_1 = arith.constant 0 : i32
    %c0_i32_2 = arith.constant 0 : i32
    return %c0_i32, %c0_i32_0, %c0_i32_1 : i32, i32, i32
  }
  func.func @transform_5(%arg0: i32) -> (i32, i32, i32) {
    %c0_i32 = arith.constant 0 : i32
    %c0_i32_0 = arith.constant 0 : i32
    %c0_i32_1 = arith.constant 0 : i32
    %c0_i32_2 = arith.constant 0 : i32
    return %c0_i32, %c0_i32_0, %c0_i32_1 : i32, i32, i32
  }
  func.func @transform_6(%arg0: i32) -> (i32, i32) {
    %c0_i32 = arith.constant 0 : i32
    %c0_i32_0 = arith.constant 0 : i32
    %c0_i32_1 = arith.constant 0 : i32
    return %c0_i32, %c0_i32_0 : i32, i32
  }
  func.func @transform_7(%arg0: i32) -> (i32, i32) {
    %c0_i32 = arith.constant 0 : i32
    %c0_i32_0 = arith.constant 0 : i32
    %c0_i32_1 = arith.constant 0 : i32
    return %c0_i32, %c0_i32_0 : i32, i32
  }
  func.func @transform_8(%arg0: i32) -> (i32, i32) {
    %c0_i32 = arith.constant 0 : i32
    %c0_i32_0 = arith.constant 0 : i32
    %c0_i32_1 = arith.constant 0 : i32
    return %c0_i32, %c0_i32_0 : i32, i32
  }
  func.func @transform_9(%arg0: i32) -> (i32, i32, i32) {
    %c0_i32 = arith.constant 0 : i32
    %c0_i32_0 = arith.constant 0 : i32
    %c0_i32_1 = arith.constant 0 : i32
    return %arg0, %c0_i32, %c0_i32_0 : i32, i32, i32
  }
}

</mosaic_0001>

<llo_original>
// kernel: tpu_custom_call.1
$region0: #{tpu_custom_call.1}
  #allocation0 [shape = 'u32[]', space=smem, size = 0x4, offset = 0x4, fixed_abs, tag = 'smem constant byte address 0x4 - core index']
  #allocation1 [shape = 'u32[144,128]{1,0:T(1,128)}', space=vmem, size = 0x12000, scoped, tag = 'internal scratch']
  #allocation2 [shape = 'bf16[40,512]{1,0:T(8,128)(2,1)}', space=vmem, size = 0xa000, scoped, tag = 'scratch operand']
  %s0 = inlined_call_operand.vmem [shape: bf16[2,40,256], index: 0, kind: input, shape index: {}]
  %s1 = inlined_call_operand.vmem [shape: f32[4,256], index: 1, kind: input, shape index: {}]
  %s2 = inlined_call_operand.vmem [shape: bf16[9,32,40], index: 2, kind: input, shape index: {}]
  %s3 = inlined_call_operand.hbm [shape: bf16[27,32,32], index: 3, kind: input, shape index: {}]
  %s4 = inlined_call_operand.vmem [shape: f32[4,32,1], index: 4, kind: input, shape index: {}]
  %s5 = inlined_call_operand.vmem [shape: f32[4,32,1], index: 5, kind: input, shape index: {}]
  %s6 = inlined_call_operand.vmem [shape: bf16[32,32], index: 6, kind: input, shape index: {}]
  %s7 = inlined_call_operand.vmem [shape: f32[32,1], index: 7, kind: input, shape index: {}]
  %s8 = inlined_call_operand.vmem [shape: f32[32,1], index: 8, kind: input, shape index: {}]
  %s9 = inlined_call_operand.hbm [shape: bf16[2,32,256], index: 9, kind: output, shape index: {}]
  %s10 = sld [smem:[#allocation0]]
  $region73: #{tpu_custom_call.1} parent=0
    _
  %s12 = ssub.s32 1, %s10
  %s13 = scalar_select 0, %s12, %s10
  $region1: #{tpu_custom_call.1} parent=0
    #allocation3 [shape = 'u8[221184]{0}', space=vmem, size = 0x36000, scoped, tag = 'input window, operand 3, single buffered']
    #allocation4 [shape = 's32[2]{0}', space=sflag, size = 0x8, scoped, tag = 'scoped memory for tpu_custom_call.1']
    #allocation5 [shape = 's32[2]{0}', space=sflag, size = 0x8, scoped, tag = 'scoped memory for tpu_custom_call.1']
    #allocation6 [shape = 'u8[32768]{0}', space=vmem, size = 0x8000, scoped, tag = 'output window, operand 0']
    %14 = vsyncpa [#allocation4], 0
    %15 = vsyncpa [#allocation5], 0
    %s16 = scalar_lea.sflag [#allocation5], 1
    %17 = vsyncpa %s16, 0
    loop: start=0, step=1, limit=4
    $region2: #{tpu_custom_call.1} parent=1 // loop_pre_header
      _
    $region3: #{tpu_custom_call.1} parent=1 // loop_header
      %s19 = sphi 0, %s23
      %p20 = scmp.ge.s32.totalorder %s19, 4
      %s29 = sphi 0, %s31
      %s32 = sphi 0, %s29
      %s33 = sphi 0, %s32
      %s49 = sphi 0, %s33
      %s53 = sphi 0, %s53
      %s55 = sphi 0, %s53
      %s56 = sphi 0, %s55
      %s70 = sphi 0, %s56
      %s74 = sphi 0, %s74
      %s76 = sphi 0, %s74
      %s77 = sphi 0, %s76
      %s91 = sphi 0, %s77
      %s95 = sphi 0, %s95
      %s97 = sphi 0, %s95
      %s98 = sphi 0, %s97
      %s112 = sphi 0, %s98
      %s116 = sphi 0, %s116
      %s118 = sphi 0, %s116
      %s119 = sphi 0, %s118
      %s133 = sphi 0, %s119
      %s137 = sphi 0, %s137
      %s139 = sphi 0, %s137
      %s140 = sphi 0, %s139
      %s154 = sphi 0, %s140
      %s158 = sphi 0, %s158
      %s160 = sphi 0, %s158
      %s161 = sphi 0, %s160
      %s175 = sphi 0, %s161
      %s179 = sphi 0, %s179
      %s181 = sphi 0, %s179
      %s182 = sphi 0, %s181
      %s196 = sphi 0, %s182
      %s200 = sphi 0, %s200
      %s202 = sphi 0, %s200
      %s203 = sphi 0, %s202
      %s217 = sphi 0, %s203
      %s223 = sphi 0, %s225
      %s226 = sphi 0, %s223
      %s227 = sphi 0, %s226
      %s243 = sphi 0, %s227
    $region4: #{tpu_custom_call.1} parent=1 // loop_header_branch
      %22 = sbr.rel (%p20) target = $region8
    $region5: #{tpu_custom_call.1} parent=1 // loop_body
      %s24 = ssub.s32 %s19, 1
      %s25 = ssub.s32 %s19, 2
      %s26 = sadd.s32 %s19, 1
      %s27 = ssub.s32 %s19, %s26
      %p28 = scmp.eq.s32.totalorder %s27, 0
      %s30 = sadd.s32 %s29, 1
      %s31 = scalar_select %p28, %s29, %s30
      %p34 = pneg %p28
      %p35 = scmp.eq.s32.totalorder %s19, 1
      %p36 = por %p34, %p35
      %p37 = scmp.ne.s32.totalorder %s29, %s32
      %p38 = scmp.eq.s32.totalorder %s19, 0
      %p39 = por %p37, %p38
      %p40 = scmp.ne.s32.totalorder %s29, %s32
      %p41 = scmp.eq.s32.totalorder %s24, 1
      %p42 = por %p40, %p41
      %p43 = scmp.ne.s32.totalorder %s32, %s33
      %p44 = scmp.eq.s32.totalorder %s24, 0
      %p45 = por %p43, %p44
      %p46 = scmp.ne.s32.totalorder %s32, %s33
      %p47 = scmp.eq.s32.totalorder %s25, 1
      %p48 = por %p46, %p47
      %p50 = scmp.ne.s32.totalorder %s33, %s49
      %p51 = scmp.eq.s32.totalorder %s25, 0
      %p52 = por %p50, %p51
      %s54 = sadd.s32 %s53, 1
      %p57 = scmp.eq.s32.totalorder %s19, 1
      %p58 = scmp.ne.s32.totalorder %s53, %s55
      %p59 = scmp.eq.s32.totalorder %s19, 0
      %p60 = por %p58, %p59
      %p61 = scmp.ne.s32.totalorder %s53, %s55
      %p62 = scmp.eq.s32.totalorder %s24, 1
      %p63 = por %p61, %p62
      %p64 = scmp.ne.s32.totalorder %s55, %s56
      %p65 = scmp.eq.s32.totalorder %s24, 0
      %p66 = por %p64, %p65
      %p67 = scmp.ne.s32.totalorder %s55, %s56
      %p68 = scmp.eq.s32.totalorder %s25, 1
      %p69 = por %p67, %p68
      %p71 = scmp.ne.s32.totalorder %s56, %s70
      %p72 = scmp.eq.s32.totalorder %s25, 0
      %p73 = por %p71, %p72
      %s75 = sadd.s32 %s74, 1
      %p78 = scmp.eq.s32.totalorder %s19, 1
      %p79 = scmp.ne.s32.totalorder %s74, %s76
      %p80 = scmp.eq.s32.totalorder %s19, 0
      %p81 = por %p79, %p80
      %p82 = scmp.ne.s32.totalorder %s74, %s76
      %p83 = scmp.eq.s32.totalorder %s24, 1
      %p84 = por %p82, %p83
      %p85 = scmp.ne.s32.totalorder %s76, %s77
      %p86 = scmp.eq.s32.totalorder %s24, 0
      %p87 = por %p85, %p86
      %p88 = scmp.ne.s32.totalorder %s76, %s77
      %p89 = scmp.eq.s32.totalorder %s25, 1
      %p90 = por %p88, %p89
      %p92 = scmp.ne.s32.totalorder %s77, %s91
      %p93 = scmp.eq.s32.totalorder %s25, 0
      %p94 = por %p92, %p93
      %s96 = sadd.s32 %s95, 1
      %p99 = scmp.eq.s32.totalorder %s19, 1
      %p100 = scmp.ne.s32.totalorder %s95, %s97
      %p101 = scmp.eq.s32.totalorder %s19, 0
      %p102 = por %p100, %p101
      %p103 = scmp.ne.s32.totalorder %s95, %s97
      %p104 = scmp.eq.s32.totalorder %s24, 1
      %p105 = por %p103, %p104
      %p106 = scmp.ne.s32.totalorder %s97, %s98
      %p107 = scmp.eq.s32.totalorder %s24, 0
      %p108 = por %p106, %p107
      %p109 = scmp.ne.s32.totalorder %s97, %s98
      %p110 = scmp.eq.s32.totalorder %s25, 1
      %p111 = por %p109, %p110
      %p113 = scmp.ne.s32.totalorder %s98, %s112
      %p114 = scmp.eq.s32.totalorder %s25, 0
      %p115 = por %p113, %p114
      %s117 = sadd.s32 %s116, 1
      %p120 = scmp.eq.s32.totalorder %s19, 1
      %p121 = scmp.ne.s32.totalorder %s116, %s118
      %p122 = scmp.eq.s32.totalorder %s19, 0
      %p123 = por %p121, %p122
      %p124 = scmp.ne.s32.totalorder %s116, %s118
      %p125 = scmp.eq.s32.totalorder %s24, 1
      %p126 = por %p124, %p125
      %p127 = scmp.ne.s32.totalorder %s118, %s119
      %p128 = scmp.eq.s32.totalorder %s24, 0
      %p129 = por %p127, %p128
      %p130 = scmp.ne.s32.totalorder %s118, %s119
      %p131 = scmp.eq.s32.totalorder %s25, 1
      %p132 = por %p130, %p131
      %p134 = scmp.ne.s32.totalorder %s119, %s133
      %p135 = scmp.eq.s32.totalorder %s25, 0
      %p136 = por %p134, %p135
      %s138 = sadd.s32 %s137, 1
      %p141 = scmp.eq.s32.totalorder %s19, 1
      %p142 = scmp.ne.s32.totalorder %s137, %s139
      %p143 = scmp.eq.s32.totalorder %s19, 0
      %p144 = por %p142, %p143
      %p145 = scmp.ne.s32.totalorder %s137, %s139
      %p146 = scmp.eq.s32.totalorder %s24, 1
      %p147 = por %p145, %p146
      %p148 = scmp.ne.s32.totalorder %s139, %s140
      %p149 = scmp.eq.s32.totalorder %s24, 0
      %p150 = por %p148, %p149
      %p151 = scmp.ne.s32.totalorder %s139, %s140
      %p152 = scmp.eq.s32.totalorder %s25, 1
      %p153 = por %p151, %p152
      %p155 = scmp.ne.s32.totalorder %s140, %s154
      %p156 = scmp.eq.s32.totalorder %s25, 0
      %p157 = por %p155, %p156
      %s159 = sadd.s32 %s158, 1
      %p162 = scmp.eq.s32.totalorder %s19, 1
      %p163 = scmp.ne.s32.totalorder %s158, %s160
      %p164 = scmp.eq.s32.totalorder %s19, 0
      %p165 = por %p163, %p164
      %p166 = scmp.ne.s32.totalorder %s158, %s160
      %p167 = scmp.eq.s32.totalorder %s24, 1
      %p168 = por %p166, %p167
      %p169 = scmp.ne.s32.totalorder %s160, %s161
      %p170 = scmp.eq.s32.totalorder %s24, 0
      %p171 = por %p169, %p170
      %p172 = scmp.ne.s32.totalorder %s160, %s161
      %p173 = scmp.eq.s32.totalorder %s25, 1
      %p174 = por %p172, %p173
      %p176 = scmp.ne.s32.totalorder %s161, %s175
      %p177 = scmp.eq.s32.totalorder %s25, 0
      %p178 = por %p176, %p177
      %s180 = sadd.s32 %s179, 1
      %p183 = scmp.eq.s32.totalorder %s19, 1
      %p184 = scmp.ne.s32.totalorder %s179, %s181
      %p185 = scmp.eq.s32.totalorder %s19, 0
      %p186 = por %p184, %p185
      %p187 = scmp.ne.s32.totalorder %s179, %s181
      %p188 = scmp.eq.s32.totalorder %s24, 1
      %p189 = por %p187, %p188
      %p190 = scmp.ne.s32.totalorder %s181, %s182
      %p191 = scmp.eq.s32.totalorder %s24, 0
      %p192 = por %p190, %p191
      %p193 = scmp.ne.s32.totalorder %s181, %s182
      %p194 = scmp.eq.s32.totalorder %s25, 1
      %p195 = por %p193, %p194
      %p197 = scmp.ne.s32.totalorder %s182, %s196
      %p198 = scmp.eq.s32.totalorder %s25, 0
      %p199 = por %p197, %p198
      %s201 = sadd.s32 %s200, 1
      %p204 = scmp.eq.s32.totalorder %s19, 1
      %p205 = scmp.ne.s32.totalorder %s200, %s202
      %p206 = scmp.eq.s32.totalorder %s19, 0
      %p207 = por %p205, %p206
      %p208 = scmp.ne.s32.totalorder %s200, %s202
      %p209 = scmp.eq.s32.totalorder %s24, 1
      %p210 = por %p208, %p209
      %p211 = scmp.ne.s32.totalorder %s202, %s203
      %p212 = scmp.eq.s32.totalorder %s24, 0
      %p213 = por %p211, %p212
      %p214 = scmp.ne.s32.totalorder %s202, %s203
      %p215 = scmp.eq.s32.totalorder %s25, 1
      %p216 = por %p214, %p215
      %p218 = scmp.ne.s32.totalorder %s203, %s217
      %p219 = scmp.eq.s32.totalorder %s25, 0
      %p220 = por %p218, %p219
      %s221 = ssub.s32 %s19, %s26
      %p222 = scmp.eq.s32.totalorder %s221, 0
      %s224 = sadd.s32 %s223, 1
      %s225 = scalar_select %p222, %s223, %s224
      %p228 = pneg %p222
      %p229 = scmp.eq.s32.totalorder %s19, 1
      %p230 = por %p228, %p229
      %p231 = scmp.ne.s32.totalorder %s223, %s226
      %p232 = scmp.eq.s32.totalorder %s19, 0
      %p233 = por %p231, %p232
      %p234 = scmp.ne.s32.totalorder %s223, %s226
      %p235 = scmp.eq.s32.totalorder %s24, 1
      %p236 = por %p234, %p235
      %p237 = scmp.ne.s32.totalorder %s226, %s227
      %p238 = scmp.eq.s32.totalorder %s24, 0
      %p239 = por %p237, %p238
      %p240 = scmp.ne.s32.totalorder %s226, %s227
      %p241 = scmp.eq.s32.totalorder %s25, 1
      %p242 = por %p240, %p241
      %p244 = scmp.ne.s32.totalorder %s227, %s243
      %p245 = scmp.eq.s32.totalorder %s25, 0
      %p246 = por %p244, %p245
      %p247 = scmp.le.s32.totalorder 1, %s19
      %p248 = scmp.lt.s32.totalorder %s19, 3
      %p249 = pnand %p247, %p248
      %p250 = pneg %p249
      // Predicated region
      $region9: #{tpu_custom_call.1} parent=5 // pred_check
        _
      $region10: #{tpu_custom_call.1} parent=5 // pred_check_branch
        %252 = sbr.rel (%p249) target = $region12
      $region11: #{tpu_custom_call.1} parent=5 // pred_region
        %s253 = ssub.s32 %s19, 1
        // Predicated region
        $region13: #{tpu_custom_call.1} parent=11 // pred_check
          %p254 = pneg %p66
        $region14: #{tpu_custom_call.1} parent=11 // pred_check_branch
          %256 = sbr.rel (%p254) target = $region16
        $region15: #{tpu_custom_call.1} parent=11 // pred_region
          _
        $region16: #{tpu_custom_call.1} parent=11 // pred_fallthru
          _
        // Predicated region
        $region17: #{tpu_custom_call.1} parent=11 // pred_check
          %p257 = pneg %p87
        $region18: #{tpu_custom_call.1} parent=11 // pred_check_branch
          %259 = sbr.rel (%p257) target = $region20
        $region19: #{tpu_custom_call.1} parent=11 // pred_region
          _
        $region20: #{tpu_custom_call.1} parent=11 // pred_fallthru
          _
        // Predicated region
        $region21: #{tpu_custom_call.1} parent=11 // pred_check
          %p260 = pneg %p108
        $region22: #{tpu_custom_call.1} parent=11 // pred_check_branch
          %262 = sbr.rel (%p260) target = $region24
        $region23: #{tpu_custom_call.1} parent=11 // pred_region
          %s264 = ssub.s32 6912, 6912
          %265 = vsyncadd [#allocation4], %s264
          %s266 = sshll.u32 [#allocation3], 4
          %s267 = int_to_ptr.vmem [resolvable:$true] %s266
          %272 = dma.hbm_to_vmem [thread:$0]  %s3, 6912, %s267, [#allocation4], 64, 64, 4
        $region24: #{tpu_custom_call.1} parent=11 // pred_fallthru
          _
        // Predicated region
        $region25: #{tpu_custom_call.1} parent=11 // pred_check
          %p273 = pneg %p129
        $region26: #{tpu_custom_call.1} parent=11 // pred_check_branch
          %275 = sbr.rel (%p273) target = $region28
        $region27: #{tpu_custom_call.1} parent=11 // pred_region
          _
        $region28: #{tpu_custom_call.1} parent=11 // pred_fallthru
          _
        // Predicated region
        $region29: #{tpu_custom_call.1} parent=11 // pred_check
          %p276 = pneg %p150
        $region30: #{tpu_custom_call.1} parent=11 // pred_check_branch
          %278 = sbr.rel (%p276) target = $region32
        $region31: #{tpu_custom_call.1} parent=11 // pred_region
          _
        $region32: #{tpu_custom_call.1} parent=11 // pred_fallthru
          _
        // Predicated region
        $region33: #{tpu_custom_call.1} parent=11 // pred_check
          %p279 = pneg %p171
        $region34: #{tpu_custom_call.1} parent=11 // pred_check_branch
          %281 = sbr.rel (%p279) target = $region36
        $region35: #{tpu_custom_call.1} parent=11 // pred_region
          _
        $region36: #{tpu_custom_call.1} parent=11 // pred_fallthru
          _
        // Predicated region
        $region37: #{tpu_custom_call.1} parent=11 // pred_check
          %p282 = pneg %p192
        $region38: #{tpu_custom_call.1} parent=11 // pred_check_branch
          %284 = sbr.rel (%p282) target = $region40
        $region39: #{tpu_custom_call.1} parent=11 // pred_region
          _
        $region40: #{tpu_custom_call.1} parent=11 // pred_fallthru
          _
        // Predicated region
        $region41: #{tpu_custom_call.1} parent=11 // pred_check
          %p285 = pneg %p213
        $region42: #{tpu_custom_call.1} parent=11 // pred_check_branch
          %287 = sbr.rel (%p285) target = $region44
        $region43: #{tpu_custom_call.1} parent=11 // pred_region
          _
        $region44: #{tpu_custom_call.1} parent=11 // pred_fallthru
          _
      $region12: #{tpu_custom_call.1} parent=5 // pred_fallthru
        _
      %p288 = scmp.lt.s32.totalorder %s19, 2
      // Predicated region
      $region45: #{tpu_custom_call.1} parent=5 // pred_check
        %p289 = pneg %p288
      $region46: #{tpu_custom_call.1} parent=5 // pred_check_branch
        %291 = sbr.rel (%p289) target = $region48
      $region47: #{tpu_custom_call.1} parent=5 // pred_region
        // Predicated region
        $region49: #{tpu_custom_call.1} parent=47 // pred_check
          %p292 = pneg %p39
        $region50: #{tpu_custom_call.1} parent=47 // pred_check_branch
          %294 = sbr.rel (%p292) target = $region52
        $region51: #{tpu_custom_call.1} parent=47 // pred_region
          %p295 = scmp.lt.s32.totalorder %s19, 1
          %s296 = scalar_select %p295, %s19, 1
          %s297 = smul.addr %s296, 10
          %s298 = smul.addr %s297, 4
          %s299 = scalar_lea.vmem %s0, %s298
        $region52: #{tpu_custom_call.1} parent=47 // pred_fallthru
          _
      $region48: #{tpu_custom_call.1} parent=5 // pred_fallthru
        _
      %p300 = scmp.le.s32.totalorder 1, %s19
      %p301 = scmp.lt.s32.totalorder %s19, 3
      %p302 = pnand %p300, %p301
      %p303 = pneg %p302
      // Predicated region
      $region53: #{tpu_custom_call.1} parent=5 // pred_check
        _
      $region54: #{tpu_custom_call.1} parent=5 // pred_check_branch
        %305 = sbr.rel (%p302) target = $region56
      $region55: #{tpu_custom_call.1} parent=5 // pred_region
        %s306 = ssub.s32 %s19, 1
        // Predicated region
        $region57: #{tpu_custom_call.1} parent=55 // pred_check
          %p307 = pneg %p108
        $region58: #{tpu_custom_call.1} parent=55 // pred_check_branch
          %309 = sbr.rel (%p307) target = $region60
        $region59: #{tpu_custom_call.1} parent=55 // pred_region
          %310 = dma.done [#allocation4], 6912
        $region60: #{tpu_custom_call.1} parent=55 // pred_fallthru
          _
        %p311 = scmp.lt.s32.totalorder %s24, 1
        %s312 = scalar_select %p311, %s24, 1
        %s313 = smul.addr %s312, 10
        %s314 = smul.addr %s313, 4
        %s315 = scalar_lea.vmem %s0, %s314
        %p316 = pneg %p45
        %p317 = pneg %p42
        %p318 = pneg %p66
        %p319 = pneg %p63
        %p320 = pneg %p87
        %p321 = pneg %p84
        %p322 = pneg %p108
        %p323 = pneg %p105
        %p324 = pneg %p129
        %p325 = pneg %p126
        %p326 = pneg %p150
        %p327 = pneg %p147
        %p328 = pneg %p171
        %p329 = pneg %p168
        %p330 = pneg %p192
        %p331 = pneg %p189
        %p332 = pneg %p213
        %p333 = pneg %p210
        %p334 = pneg %p239
        %p335 = pneg %p236
        %s336 = sand.u32 %s226, 1
        %s337 = scalar_lea.sflag [#allocation5], %s336
        %s338 = sand.u32 %s226, 1
        %s339 = smul.addr %s338, 32
        %s340 = scalar_lea.vmem [#allocation6], %s339
        %p341 = scmp.lt.s32.totalorder %s24, 1
        %s342 = scalar_select %p341, %s24, 1
        %s343 = smul.addr %s342, 10
        %s344 = smul.addr %s343, 4
        %s345 = scalar_lea.vmem %s0, %s344
        %347 = vst [vmem:[#allocation2] sm:$0xf] 0
        %348 = vst [vmem:[#allocation2 + $0x10] sm:$0xf] 0
        %349 = vst [vmem:[#allocation2 + $0x20] sm:$0xf] 0
        %350 = vst [vmem:[#allocation2 + $0x30] sm:$0xf] 0
        %351 = vst [vmem:[#allocation2 + $0x40] sm:$0xf] 0
        %352 = vst [vmem:[#allocation2 + $0xc] sm:$0xf] 0
        %353 = vst [vmem:[#allocation2 + $0x1c] sm:$0xf] 0
        %354 = vst [vmem:[#allocation2 + $0x2c] sm:$0xf] 0
        %355 = vst [vmem:[#allocation2 + $0x3c] sm:$0xf] 0
        %356 = vst [vmem:[#allocation2 + $0x4c] sm:$0xf] 0
        %v357 = vld [vmem:[%s1] ss:$4 sm:$0x3]
        %s358 = scalar_lea.vmem %s1, 1
        %v359 = vld [vmem:[%s358] ss:$4 sm:$0x3]
        %v360 = vld [vmem:[%s345] sm:$0xff]
        %v361 = vld [vmem:[%s345 + $0x8] sm:$0xff]
        %v362 = vld [vmem:[%s345 + $0x10] sm:$0xff]
        %v363 = vld [vmem:[%s345 + $0x18] sm:$0xff]
        %v364 = vld [vmem:[%s345 + $0x20] sm:$0xff]
        %365 = vst [vmem:[#allocation2 + $0x4] sm:$0xff] %v360
        %366 = vst [vmem:[#allocation2 + $0x14] sm:$0xff] %v361
        %367 = vst [vmem:[#allocation2 + $0x24] sm:$0xff] %v362
        %368 = vst [vmem:[#allocation2 + $0x34] sm:$0xff] %v363
        %369 = vst [vmem:[#allocation2 + $0x44] sm:$0xff] %v364
        %v370 = vld [vmem:[#allocation2] sm:$0xff]
        %v371 = vld [vmem:[#allocation2 + $0x8] sm:$0xf]
        %v372 = vld [vmem:[#allocation2 + $0x10] sm:$0xff]
        %v373 = vld [vmem:[#allocation2 + $0x18] sm:$0xf]
        %v374 = vld [vmem:[#allocation2 + $0x20] sm:$0xff]
        %v375 = vld [vmem:[#allocation2 + $0x28] sm:$0xf]
        %v376 = vld [vmem:[#allocation2 + $0x30] sm:$0xff]
        %v377 = vld [vmem:[#allocation2 + $0x38] sm:$0xf]
        %v378 = vld [vmem:[#allocation2 + $0x40] sm:$0xff]
        %v379 = vld [vmem:[#allocation2 + $0x48] sm:$0xf]
        %v380 = vld [vmem:[%s2] sm:$0xf]
        %v381 = vld [vmem:[%s2 + $0x4] sm:$0xf]
        %v382 = vld [vmem:[%s2 + $0x8] sm:$0xf]
        %v383 = vld [vmem:[%s2 + $0xc] sm:$0xf]
        %v388 = vunpack.c.l.b16 %v380
        %v389 = vunpack.c.l.b16 %v381
        %v390 = vunpack.c.l.b16 %v382
        %v391 = vunpack.c.l.b16 %v383
        %v392 = vpack.c.b16 %v389, %v388
        %v393 = vpack.c.b16 %v391, %v390
        %v404 = vunpack.c.l.b16 %v370
        %v405 = vunpack.c.h.b16 %v370
        %v406 = vunpack.c.l.b16 %v371
        %v407 = vunpack.c.l.b16 %v372
        %v408 = vunpack.c.h.b16 %v372
        %v409 = vunpack.c.l.b16 %v373
        %v410 = vunpack.c.l.b16 %v374
        %v411 = vunpack.c.h.b16 %v374
        %v412 = vunpack.c.l.b16 %v375
        %v413 = vunpack.c.l.b16 %v376
        %v414 = vunpack.c.h.b16 %v376
        %v415 = vunpack.c.l.b16 %v377
        %v416 = vunpack.c.l.b16 %v378
        %v417 = vunpack.c.h.b16 %v378
        %v418 = vunpack.c.l.b16 %v379
        %v419 = vpack.c.b16 %v407, %v404
        %v420 = vpack.c.b16 %v408, %v405
        %v421 = vpack.c.b16 %v409, %v406
        %v422 = vpack.c.b16 %v413, %v410
        %v423 = vpack.c.b16 %v414, %v411
        %v424 = vpack.c.b16 %v415, %v412
        %v425 = vpack.c.b16 %v416, %v416
        %v426 = vpack.c.b16 %v417, %v417
        %v427 = vpack.c.b16 %v418, %v418
        %428 = vrot.lane.b32.xlu0 %v419, 17
        %v429 = vpop.permute.xlu0 %428
        %430 = vrot.lane.b32.xlu0 %v420, 17
        %v431 = vpop.permute.xlu0 %430
        %432 = vrot.lane.b32.xlu0 %v421, 17
        %v433 = vpop.permute.xlu0 %432
        %434 = vrot.lane.b32.xlu0 %v422, 17
        %v435 = vpop.permute.xlu0 %434
        %436 = vrot.lane.b32.xlu0 %v423, 17
        %v437 = vpop.permute.xlu0 %436
        %438 = vrot.lane.b32.xlu0 %v424, 17
        %v439 = vpop.permute.xlu0 %438
        %440 = vrot.lane.b32.xlu0 %v425, 17
        %v441 = vpop.permute.xlu0 %440
        %442 = vrot.lane.b32.xlu0 %v426, 17
        %v443 = vpop.permute.xlu0 %442
        %444 = vrot.lane.b32.xlu0 %v427, 17
        %v445 = vpop.permute.xlu0 %444
        %vm446 = vcmask 138240
        %v447 = vsel %vm446, %v429, %v431
        %v448 = vsel %vm446, %v431, %v433
        %v449 = vsel %vm446, %v435, %v437
        %v450 = vsel %vm446, %v437, %v439
        %v451 = vsel %vm446, %v441, %v443
        %v452 = vsel %vm446, %v443, %v445
        %vm457 = vcmask 326656
        %v459 = vsel %vm457, %v392, 0
        %v462 = vsel %vm457, %v393, 0
        %vm464 = vcmask 1043456
        %v466 = vsel %vm464, %v451, 0
        %v469 = vsel %vm464, %v452, 0
        %471 = vmatprep.subr.bf16.mxu0 0
        %472 = vmatpush1.bf16.msra.mxu0 0
        %473 = vmatprep.subr.bf16.mxu0 0
        %474 = vmatpush1.bf16.msra.mxu0 0
        %475 = vmatprep.subr.bf16.mxu0 0
        %476 = vmatpush1.bf16.msra.mxu0 0
        %477 = vmatprep.subr.bf16.mxu0 0
        %478 = vmatpush1.bf16.msra.mxu0 0
        %479 = vmatprep.subr.bf16.mxu0 0
        %480 = vmatpush1.bf16.msra.mxu0 0
        %481 = vmatprep.subr.bf16.mxu0 %v469
        %482 = vmatpush1.bf16.msra.mxu0 %v466
        %483 = vmatprep.subr.bf16.mxu0 %v450
        %484 = vmatpush1.bf16.msra.mxu0 %v449
        %485 = vmatprep.subr.bf16.mxu0 %v448
        %486 = vmatpush1.bf16.msra.mxu0 %v447
        %487 = vmatprep.subr.bf16.mxu0 0
        %488 = vmatpush2.bf16.msra.mxu0 0
        %489 = vmatprep.subr.bf16.mxu0 0
        %490 = vmatpush2.bf16.msra.mxu0 0
        %491 = vmatprep.subr.bf16.mxu0 0
        %492 = vmatpush2.bf16.msra.mxu0 0
        %493 = vmatprep.subr.bf16.mxu0 0
        %494 = vmatpush2.bf16.msra.mxu0 0
        %495 = vmatprep.subr.bf16.mxu0 0
        %496 = vmatpush2.bf16.msra.mxu0 0
        %497 = vmatprep.subr.bf16.mxu0 0
        %498 = vmatpush2.bf16.msra.mxu0 0
        %499 = vmatprep.subr.bf16.mxu0 0
        %500 = vmatpush2.bf16.msra.mxu0 0
        %501 = vmatprep.subr.bf16.mxu0 0
        %502 = vmatpush2.bf16.msra.mxu0 0
        %503 = vmatprep.mubr.bf16.mxu0 0
        %504 = vmatmul.mubr.bf16.gmra.mxu0 %v459
        %v505 = vpop.f32.mrf.mxu0
        %v506 = vadd.f32 0.0, %v505
        %v507 = vpop.f32.mrf.mxu0
        %v508 = vadd.f32 0.0, %v507
        %v509 = vpop.f32.mrf.mxu0
        %v510 = vadd.f32 0.0, %v509
        %v511 = vpop.f32.mrf.mxu0
        %v512 = vadd.f32 0.0, %v511
        %513 = vmatprep.mubr.bf16.mxu0 0
        %514 = vmatmul.mubr.bf16.gmra.mxu0 %v462
        %v515 = vpop.f32.mrf.mxu0
        %v516 = vadd.f32 0.0, %v515
        %v517 = vpop.f32.mrf.mxu0
        %v518 = vadd.f32 0.0, %v517
        %v519 = vpop.f32.mrf.mxu0
        %v520 = vadd.f32 0.0, %v519
        %v521 = vpop.f32.mrf.mxu0
        %v522 = vadd.f32 0.0, %v521
        %523 = vdwg.mxu0
        %v525 = vlaneseq
        %v526 = vshrl.u32 %v525, 7
        %v527 = vsub.s32 0, %v526
        %v528 = vrot.slane %v357, %v527
        %v529 = vlaneseq
        %v530 = vshrl.u32 %v529, 7
        %v531 = vsub.s32 1, %v530
        %v532 = vrot.slane %v357, %v531
        %v535 = vmul.f32 %v506, %v528
        %v536 = vmul.f32 %v508, %v532
        %v537 = vmul.f32 %v510, %v528
        %v538 = vmul.f32 %v512, %v532
        %v539 = vmul.f32 %v516, %v528
        %v540 = vmul.f32 %v518, %v532
        %v541 = vmul.f32 %v520, %v528
        %v542 = vmul.f32 %v522, %v532
        %s543 = scalar_lea.vmem %s2, 16
        %v544 = vld [vmem:[%s543] sm:$0xf]
        %v545 = vld [vmem:[%s543 + $0x4] sm:$0xf]
        %v546 = vld [vmem:[%s543 + $0x8] sm:$0xf]
        %v547 = vld [vmem:[%s543 + $0xc] sm:$0xf]
        %v552 = vunpack.c.l.b16 %v544
        %v553 = vunpack.c.l.b16 %v545
        %v554 = vunpack.c.l.b16 %v546
        %v555 = vunpack.c.l.b16 %v547
        %v556 = vpack.c.b16 %v553, %v552
        %v557 = vpack.c.b16 %v555, %v554
        %558 = vrot.lane.b32.xlu0 %v419, 16
        %v559 = vpop.permute.xlu0 %558
        %560 = vrot.lane.b32.xlu0 %v420, 16
        %v561 = vpop.permute.xlu0 %560
        %562 = vrot.lane.b32.xlu0 %v421, 16
        %v563 = vpop.permute.xlu0 %562
        %564 = vrot.lane.b32.xlu0 %v422, 16
        %v565 = vpop.permute.xlu0 %564
        %566 = vrot.lane.b32.xlu0 %v423, 16
        %v567 = vpop.permute.xlu0 %566
        %568 = vrot.lane.b32.xlu0 %v424, 16
        %v569 = vpop.permute.xlu0 %568
        %570 = vrot.lane.b32.xlu0 %v425, 16
        %v571 = vpop.permute.xlu0 %570
        %572 = vrot.lane.b32.xlu0 %v426, 16
        %v573 = vpop.permute.xlu0 %572
        %574 = vrot.lane.b32.xlu0 %v427, 16
        %v575 = vpop.permute.xlu0 %574
        %vm576 = vcmask 130048
        %v577 = vsel %vm576, %v559, %v561
        %v578 = vsel %vm576, %v561, %v563
        %v579 = vsel %vm576, %v565, %v567
        %v580 = vsel %vm576, %v567, %v569
        %v581 = vsel %vm576, %v571, %v573
        %v582 = vsel %vm576, %v573, %v575
        %v588 = vsel %vm457, %v556, 0
        %v591 = vsel %vm457, %v557, 0
        %v594 = vsel %vm464, %v581, 0
        %v597 = vsel %vm464, %v582, 0
        %599 = vmatprep.subr.bf16.mxu0 0
        %600 = vmatpush1.bf16.msra.mxu0 0
        %601 = vmatprep.subr.bf16.mxu0 0
        %602 = vmatpush1.bf16.msra.mxu0 0
        %603 = vmatprep.subr.bf16.mxu0 0
        %604 = vmatpush1.bf16.msra.mxu0 0
        %605 = vmatprep.subr.bf16.mxu0 0
        %606 = vmatpush1.bf16.msra.mxu0 0
        %607 = vmatprep.subr.bf16.mxu0 0
        %608 = vmatpush1.bf16.msra.mxu0 0
        %609 = vmatprep.subr.bf16.mxu0 %v597
        %610 = vmatpush1.bf16.msra.mxu0 %v594
        %611 = vmatprep.subr.bf16.mxu0 %v580
        %612 = vmatpush1.bf16.msra.mxu0 %v579
        %613 = vmatprep.subr.bf16.mxu0 %v578
        %614 = vmatpush1.bf16.msra.mxu0 %v577
        %615 = vmatprep.subr.bf16.mxu0 0
        %616 = vmatpush2.bf16.msra.mxu0 0
        %617 = vmatprep.subr.bf16.mxu0 0
        %618 = vmatpush2.bf16.msra.mxu0 0
        %619 = vmatprep.subr.bf16.mxu0 0
        %620 = vmatpush2.bf16.msra.mxu0 0
        %621 = vmatprep.subr.bf16.mxu0 0
        %622 = vmatpush2.bf16.msra.mxu0 0
        %623 = vmatprep.subr.bf16.mxu0 0
        %624 = vmatpush2.bf16.msra.mxu0 0
        %625 = vmatprep.subr.bf16.mxu0 0
        %626 = vmatpush2.bf16.msra.mxu0 0
        %627 = vmatprep.subr.bf16.mxu0 0
        %628 = vmatpush2.bf16.msra.mxu0 0
        %629 = vmatprep.subr.bf16.mxu0 0
        %630 = vmatpush2.bf16.msra.mxu0 0
        %631 = vmatprep.mubr.bf16.mxu0 0
        %632 = vmatmul.mubr.bf16.gmra.mxu0 %v588
        %v633 = vpop.f32.mrf.mxu0
        %v634 = vadd.f32 0.0, %v633
        %v635 = vpop.f32.mrf.mxu0
        %v636 = vadd.f32 0.0, %v635
        %v637 = vpop.f32.mrf.mxu0
        %v638 = vadd.f32 0.0, %v637
        %v639 = vpop.f32.mrf.mxu0
        %v640 = vadd.f32 0.0, %v639
        %641 = vmatprep.mubr.bf16.mxu0 0
        %642 = vmatmul.mubr.bf16.gmra.mxu0 %v591
        %v643 = vpop.f32.mrf.mxu0
        %v644 = vadd.f32 0.0, %v643
        %v645 = vpop.f32.mrf.mxu0
        %v646 = vadd.f32 0.0, %v645
        %v647 = vpop.f32.mrf.mxu0
        %v648 = vadd.f32 0.0, %v647
        %v649 = vpop.f32.mrf.mxu0
        %v650 = vadd.f32 0.0, %v649
        %651 = vdwg.mxu0
        %v652 = vadd.f32 %v535, %v634
        %v653 = vadd.f32 %v536, %v636
        %v654 = vadd.f32 %v537, %v638
        %v655 = vadd.f32 %v538, %v640
        %v656 = vadd.f32 %v539, %v644
        %v657 = vadd.f32 %v540, %v646
        %v658 = vadd.f32 %v541, %v648
        %v659 = vadd.f32 %v542, %v650
        %s660 = scalar_lea.vmem %s2, 32
        %v661 = vld [vmem:[%s660] sm:$0xf]
        %v662 = vld [vmem:[%s660 + $0x4] sm:$0xf]
        %v663 = vld [vmem:[%s660 + $0x8] sm:$0xf]
        %v664 = vld [vmem:[%s660 + $0xc] sm:$0xf]
        %v669 = vunpack.c.l.b16 %v661
        %v670 = vunpack.c.l.b16 %v662
        %v671 = vunpack.c.l.b16 %v663
        %v672 = vunpack.c.l.b16 %v664
        %v673 = vpack.c.b16 %v670, %v669
        %v674 = vpack.c.b16 %v672, %v671
        %675 = vrot.lane.b32.xlu0 %v419, 15
        %v676 = vpop.permute.xlu0 %675
        %677 = vrot.lane.b32.xlu0 %v420, 15
        %v678 = vpop.permute.xlu0 %677
        %679 = vrot.lane.b32.xlu0 %v421, 15
        %v680 = vpop.permute.xlu0 %679
        %681 = vrot.lane.b32.xlu0 %v422, 15
        %v682 = vpop.permute.xlu0 %681
        %683 = vrot.lane.b32.xlu0 %v423, 15
        %v684 = vpop.permute.xlu0 %683
        %685 = vrot.lane.b32.xlu0 %v424, 15
        %v686 = vpop.permute.xlu0 %685
        %687 = vrot.lane.b32.xlu0 %v425, 15
        %v688 = vpop.permute.xlu0 %687
        %689 = vrot.lane.b32.xlu0 %v426, 15
        %v690 = vpop.permute.xlu0 %689
        %691 = vrot.lane.b32.xlu0 %v427, 15
        %v692 = vpop.permute.xlu0 %691
        %vm693 = vcmask 121856
        %v694 = vsel %vm693, %v676, %v678
        %v695 = vsel %vm693, %v678, %v680
        %v696 = vsel %vm693, %v682, %v684
        %v697 = vsel %vm693, %v684, %v686
        %v698 = vsel %vm693, %v688, %v690
        %v699 = vsel %vm693, %v690, %v692
        %v705 = vsel %vm457, %v673, 0
        %v708 = vsel %vm457, %v674, 0
        %v711 = vsel %vm464, %v698, 0
        %v714 = vsel %vm464, %v699, 0
        %716 = vmatprep.subr.bf16.mxu0 0
        %717 = vmatpush1.bf16.msra.mxu0 0
        %718 = vmatprep.subr.bf16.mxu0 0
        %719 = vmatpush1.bf16.msra.mxu0 0
        %720 = vmatprep.subr.bf16.mxu0 0
        %721 = vmatpush1.bf16.msra.mxu0 0
        %722 = vmatprep.subr.bf16.mxu0 0
        %723 = vmatpush1.bf16.msra.mxu0 0
        %724 = vmatprep.subr.bf16.mxu0 0
        %725 = vmatpush1.bf16.msra.mxu0 0
        %726 = vmatprep.subr.bf16.mxu0 %v714
        %727 = vmatpush1.bf16.msra.mxu0 %v711
        %728 = vmatprep.subr.bf16.mxu0 %v697
        %729 = vmatpush1.bf16.msra.mxu0 %v696
        %730 = vmatprep.subr.bf16.mxu0 %v695
        %731 = vmatpush1.bf16.msra.mxu0 %v694
        %732 = vmatprep.subr.bf16.mxu0 0
        %733 = vmatpush2.bf16.msra.mxu0 0
        %734 = vmatprep.subr.bf16.mxu0 0
        %735 = vmatpush2.bf16.msra.mxu0 0
        %736 = vmatprep.subr.bf16.mxu0 0
        %737 = vmatpush2.bf16.msra.mxu0 0
        %738 = vmatprep.subr.bf16.mxu0 0
        %739 = vmatpush2.bf16.msra.mxu0 0
        %740 = vmatprep.subr.bf16.mxu0 0
        %741 = vmatpush2.bf16.msra.mxu0 0
        %742 = vmatprep.subr.bf16.mxu0 0
        %743 = vmatpush2.bf16.msra.mxu0 0
        %744 = vmatprep.subr.bf16.mxu0 0
        %745 = vmatpush2.bf16.msra.mxu0 0
        %746 = vmatprep.subr.bf16.mxu0 0
        %747 = vmatpush2.bf16.msra.mxu0 0
        %748 = vmatprep.mubr.bf16.mxu0 0
        %749 = vmatmul.mubr.bf16.gmra.mxu0 %v705
        %v750 = vpop.f32.mrf.mxu0
        %v751 = vadd.f32 0.0, %v750
        %v752 = vpop.f32.mrf.mxu0
        %v753 = vadd.f32 0.0, %v752
        %v754 = vpop.f32.mrf.mxu0
        %v755 = vadd.f32 0.0, %v754
        %v756 = vpop.f32.mrf.mxu0
        %v757 = vadd.f32 0.0, %v756
        %758 = vmatprep.mubr.bf16.mxu0 0
        %759 = vmatmul.mubr.bf16.gmra.mxu0 %v708
        %v760 = vpop.f32.mrf.mxu0
        %v761 = vadd.f32 0.0, %v760
        %v762 = vpop.f32.mrf.mxu0
        %v763 = vadd.f32 0.0, %v762
        %v764 = vpop.f32.mrf.mxu0
        %v765 = vadd.f32 0.0, %v764
        %v766 = vpop.f32.mrf.mxu0
        %v767 = vadd.f32 0.0, %v766
        %768 = vdwg.mxu0
        %v770 = vlaneseq
        %v771 = vshrl.u32 %v770, 7
        %v772 = vsub.s32 0, %v771
        %v773 = vrot.slane %v359, %v772
        %v774 = vlaneseq
        %v775 = vshrl.u32 %v774, 7
        %v776 = vsub.s32 1, %v775
        %v777 = vrot.slane %v359, %v776
        %v780 = vmul.f32 %v751, %v773
        %v781 = vmul.f32 %v753, %v777
        %v782 = vmul.f32 %v755, %v773
        %v783 = vmul.f32 %v757, %v777
        %v784 = vmul.f32 %v761, %v773
        %v785 = vmul.f32 %v763, %v777
        %v786 = vmul.f32 %v765, %v773
        %v787 = vmul.f32 %v767, %v777
        %v788 = vadd.f32 %v652, %v780
        %v789 = vadd.f32 %v653, %v781
        %v790 = vadd.f32 %v654, %v782
        %v791 = vadd.f32 %v655, %v783
        %v792 = vadd.f32 %v656, %v784
        %v793 = vadd.f32 %v657, %v785
        %v794 = vadd.f32 %v658, %v786
        %v795 = vadd.f32 %v659, %v787
        %s796 = scalar_lea.vmem %s2, 48
        %v797 = vld [vmem:[%s796] sm:$0xf]
        %v798 = vld [vmem:[%s796 + $0x4] sm:$0xf]
        %v799 = vld [vmem:[%s796 + $0x8] sm:$0xf]
        %v800 = vld [vmem:[%s796 + $0xc] sm:$0xf]
        %v805 = vunpack.c.l.b16 %v797
        %v806 = vunpack.c.l.b16 %v798
        %v807 = vunpack.c.l.b16 %v799
        %v808 = vunpack.c.l.b16 %v800
        %v809 = vpack.c.b16 %v806, %v805
        %v810 = vpack.c.b16 %v808, %v807
        %811 = vrot.lane.b32.xlu0 %v419, 1
        %v812 = vpop.permute.xlu0 %811
        %813 = vrot.lane.b32.xlu0 %v420, 1
        %v814 = vpop.permute.xlu0 %813
        %815 = vrot.lane.b32.xlu0 %v421, 1
        %v816 = vpop.permute.xlu0 %815
        %817 = vrot.lane.b32.xlu0 %v422, 1
        %v818 = vpop.permute.xlu0 %817
        %819 = vrot.lane.b32.xlu0 %v423, 1
        %v820 = vpop.permute.xlu0 %819
        %821 = vrot.lane.b32.xlu0 %v424, 1
        %v822 = vpop.permute.xlu0 %821
        %823 = vrot.lane.b32.xlu0 %v425, 1
        %v824 = vpop.permute.xlu0 %823
        %825 = vrot.lane.b32.xlu0 %v426, 1
        %v826 = vpop.permute.xlu0 %825
        %827 = vrot.lane.b32.xlu0 %v427, 1
        %v828 = vpop.permute.xlu0 %827
        %vm829 = vcmask 7168
        %v830 = vsel %vm829, %v812, %v814
        %v831 = vsel %vm829, %v814, %v816
        %v832 = vsel %vm829, %v818, %v820
        %v833 = vsel %vm829, %v820, %v822
        %v834 = vsel %vm829, %v824, %v826
        %v835 = vsel %vm829, %v826, %v828
        %v841 = vsel %vm457, %v809, 0
        %v844 = vsel %vm457, %v810, 0
        %v847 = vsel %vm464, %v834, 0
        %v850 = vsel %vm464, %v835, 0
        %852 = vmatprep.subr.bf16.mxu0 0
        %853 = vmatpush1.bf16.msra.mxu0 0
        %854 = vmatprep.subr.bf16.mxu0 0
        %855 = vmatpush1.bf16.msra.mxu0 0
        %856 = vmatprep.subr.bf16.mxu0 0
        %857 = vmatpush1.bf16.msra.mxu0 0
        %858 = vmatprep.subr.bf16.mxu0 0
        %859 = vmatpush1.bf16.msra.mxu0 0
        %860 = vmatprep.subr.bf16.mxu0 0
        %861 = vmatpush1.bf16.msra.mxu0 0
        %862 = vmatprep.subr.bf16.mxu0 %v850
        %863 = vmatpush1.bf16.msra.mxu0 %v847
        %864 = vmatprep.subr.bf16.mxu0 %v833
        %865 = vmatpush1.bf16.msra.mxu0 %v832
        %866 = vmatprep.subr.bf16.mxu0 %v831
        %867 = vmatpush1.bf16.msra.mxu0 %v830
        %868 = vmatprep.subr.bf16.mxu0 0
        %869 = vmatpush2.bf16.msra.mxu0 0
        %870 = vmatprep.subr.bf16.mxu0 0
        %871 = vmatpush2.bf16.msra.mxu0 0
        %872 = vmatprep.subr.bf16.mxu0 0
        %873 = vmatpush2.bf16.msra.mxu0 0
        %874 = vmatprep.subr.bf16.mxu0 0
        %875 = vmatpush2.bf16.msra.mxu0 0
        %876 = vmatprep.subr.bf16.mxu0 0
        %877 = vmatpush2.bf16.msra.mxu0 0
        %878 = vmatprep.subr.bf16.mxu0 0
        %879 = vmatpush2.bf16.msra.mxu0 0
        %880 = vmatprep.subr.bf16.mxu0 0
        %881 = vmatpush2.bf16.msra.mxu0 0
        %882 = vmatprep.subr.bf16.mxu0 0
        %883 = vmatpush2.bf16.msra.mxu0 0
        %884 = vmatprep.mubr.bf16.mxu0 0
        %885 = vmatmul.mubr.bf16.gmra.mxu0 %v841
        %v886 = vpop.f32.mrf.mxu0
        %v887 = vadd.f32 0.0, %v886
        %v888 = vpop.f32.mrf.mxu0
        %v889 = vadd.f32 0.0, %v888
        %v890 = vpop.f32.mrf.mxu0
        %v891 = vadd.f32 0.0, %v890
        %v892 = vpop.f32.mrf.mxu0
        %v893 = vadd.f32 0.0, %v892
        %894 = vmatprep.mubr.bf16.mxu0 0
        %895 = vmatmul.mubr.bf16.gmra.mxu0 %v844
        %v896 = vpop.f32.mrf.mxu0
        %v897 = vadd.f32 0.0, %v896
        %v898 = vpop.f32.mrf.mxu0
        %v899 = vadd.f32 0.0, %v898
        %v900 = vpop.f32.mrf.mxu0
        %v901 = vadd.f32 0.0, %v900
        %v902 = vpop.f32.mrf.mxu0
        %v903 = vadd.f32 0.0, %v902
        %904 = vdwg.mxu0
        %v905 = vmul.f32 %v887, %v528
        %v906 = vmul.f32 %v889, %v532
        %v907 = vmul.f32 %v891, %v528
        %v908 = vmul.f32 %v893, %v532
        %v909 = vmul.f32 %v897, %v528
        %v910 = vmul.f32 %v899, %v532
        %v911 = vmul.f32 %v901, %v528
        %v912 = vmul.f32 %v903, %v532
        %v913 = vadd.f32 %v788, %v905
        %v914 = vadd.f32 %v789, %v906
        %v915 = vadd.f32 %v790, %v907
        %v916 = vadd.f32 %v791, %v908
        %v917 = vadd.f32 %v792, %v909
        %v918 = vadd.f32 %v793, %v910
        %v919 = vadd.f32 %v794, %v911
        %v920 = vadd.f32 %v795, %v912
        %v921 = vld [vmem:[#allocation2 + $0x4] sm:$0xff]
        %v922 = vld [vmem:[#allocation2 + $0x14] sm:$0xff]
        %v923 = vld [vmem:[#allocation2 + $0x24] sm:$0xff]
        %v924 = vld [vmem:[#allocation2 + $0x34] sm:$0xff]
        %v925 = vld [vmem:[#allocation2 + $0x44] sm:$0xff]
        %s926 = scalar_lea.vmem %s2, 64
        %v927 = vld [vmem:[%s926] sm:$0xf]
        %v928 = vld [vmem:[%s926 + $0x4] sm:$0xf]
        %v929 = vld [vmem:[%s926 + $0x8] sm:$0xf]
        %v930 = vld [vmem:[%s926 + $0xc] sm:$0xf]
        %v935 = vunpack.c.l.b16 %v927
        %v936 = vunpack.c.l.b16 %v928
        %v937 = vunpack.c.l.b16 %v929
        %v938 = vunpack.c.l.b16 %v930
        %v939 = vpack.c.b16 %v936, %v935
        %v940 = vpack.c.b16 %v938, %v937
        %v946 = vunpack.c.l.b16 %v921
        %v947 = vunpack.c.h.b16 %v921
        %v948 = vunpack.c.l.b16 %v922
        %v949 = vunpack.c.h.b16 %v922
        %v950 = vunpack.c.l.b16 %v923
        %v951 = vunpack.c.h.b16 %v923
        %v952 = vunpack.c.l.b16 %v924
        %v953 = vunpack.c.h.b16 %v924
        %v954 = vunpack.c.l.b16 %v925
        %v955 = vunpack.c.h.b16 %v925
        %v956 = vpack.c.b16 %v948, %v946
        %v957 = vpack.c.b16 %v949, %v947
        %v958 = vpack.c.b16 %v952, %v950
        %v959 = vpack.c.b16 %v953, %v951
        %v960 = vpack.c.b16 %v954, %v954
        %v961 = vpack.c.b16 %v955, %v955
        %v967 = vsel %vm457, %v939, 0
        %v970 = vsel %vm457, %v940, 0
        %v973 = vsel %vm464, %v960, 0
        %v976 = vsel %vm464, %v961, 0
        %978 = vmatprep.subr.bf16.mxu0 0
        %979 = vmatpush1.bf16.msra.mxu0 0
        %980 = vmatprep.subr.bf16.mxu0 0
        %981 = vmatpush1.bf16.msra.mxu0 0
        %982 = vmatprep.subr.bf16.mxu0 0
        %983 = vmatpush1.bf16.msra.mxu0 0
        %984 = vmatprep.subr.bf16.mxu0 0
        %985 = vmatpush1.bf16.msra.mxu0 0
        %986 = vmatprep.subr.bf16.mxu0 0
        %987 = vmatpush1.bf16.msra.mxu0 0
        %988 = vmatprep.subr.bf16.mxu0 %v976
        %989 = vmatpush1.bf16.msra.mxu0 %v973
        %990 = vmatprep.subr.bf16.mxu0 %v959
        %991 = vmatpush1.bf16.msra.mxu0 %v958
        %992 = vmatprep.subr.bf16.mxu0 %v957
        %993 = vmatpush1.bf16.msra.mxu0 %v956
        %994 = vmatprep.subr.bf16.mxu0 0
        %995 = vmatpush2.bf16.msra.mxu0 0
        %996 = vmatprep.subr.bf16.mxu0 0
        %997 = vmatpush2.bf16.msra.mxu0 0
        %998 = vmatprep.subr.bf16.mxu0 0
        %999 = vmatpush2.bf16.msra.mxu0 0
        %1000 = vmatprep.subr.bf16.mxu0 0
        %1001 = vmatpush2.bf16.msra.mxu0 0
        %1002 = vmatprep.subr.bf16.mxu0 0
        %1003 = vmatpush2.bf16.msra.mxu0 0
        %1004 = vmatprep.subr.bf16.mxu0 0
        %1005 = vmatpush2.bf16.msra.mxu0 0
        %1006 = vmatprep.subr.bf16.mxu0 0
        %1007 = vmatpush2.bf16.msra.mxu0 0
        %1008 = vmatprep.subr.bf16.mxu0 0
        %1009 = vmatpush2.bf16.msra.mxu0 0
        %1010 = vmatprep.mubr.bf16.mxu0 0
        %1011 = vmatmul.mubr.bf16.gmra.mxu0 %v967
        %v1012 = vpop.f32.mrf.mxu0
        %v1013 = vadd.f32 0.0, %v1012
        %v1014 = vpop.f32.mrf.mxu0
        %v1015 = vadd.f32 0.0, %v1014
        %v1016 = vpop.f32.mrf.mxu0
        %v1017 = vadd.f32 0.0, %v1016
        %v1018 = vpop.f32.mrf.mxu0
        %v1019 = vadd.f32 0.0, %v1018
        %1020 = vmatprep.mubr.bf16.mxu0 0
        %1021 = vmatmul.mubr.bf16.gmra.mxu0 %v970
        %v1022 = vpop.f32.mrf.mxu0
        %v1023 = vadd.f32 0.0, %v1022
        %v1024 = vpop.f32.mrf.mxu0
        %v1025 = vadd.f32 0.0, %v1024
        %v1026 = vpop.f32.mrf.mxu0
        %v1027 = vadd.f32 0.0, %v1026
        %v1028 = vpop.f32.mrf.mxu0
        %v1029 = vadd.f32 0.0, %v1028
        %1030 = vdwg.mxu0
        %v1031 = vadd.f32 %v913, %v1013
        %v1032 = vadd.f32 %v914, %v1015
        %v1033 = vadd.f32 %v915, %v1017
        %v1034 = vadd.f32 %v916, %v1019
        %v1035 = vadd.f32 %v917, %v1023
        %v1036 = vadd.f32 %v918, %v1025
        %v1037 = vadd.f32 %v919, %v1027
        %v1038 = vadd.f32 %v920, %v1029
        %v1039 = vld [vmem:[#allocation2 + $0x4] sm:$0xff]
        %v1040 = vld [vmem:[#allocation2 + $0xc] sm:$0xf]
        %v1041 = vld [vmem:[#allocation2 + $0x14] sm:$0xff]
        %v1042 = vld [vmem:[#allocation2 + $0x1c] sm:$0xf]
        %v1043 = vld [vmem:[#allocation2 + $0x24] sm:$0xff]
        %v1044 = vld [vmem:[#allocation2 + $0x2c] sm:$0xf]
        %v1045 = vld [vmem:[#allocation2 + $0x34] sm:$0xff]
        %v1046 = vld [vmem:[#allocation2 + $0x3c] sm:$0xf]
        %v1047 = vld [vmem:[#allocation2 + $0x44] sm:$0xff]
        %v1048 = vld [vmem:[#allocation2 + $0x4c] sm:$0xf]
        %s1049 = scalar_lea.vmem %s2, 80
        %v1050 = vld [vmem:[%s1049] sm:$0xf]
        %v1051 = vld [vmem:[%s1049 + $0x4] sm:$0xf]
        %v1052 = vld [vmem:[%s1049 + $0x8] sm:$0xf]
        %v1053 = vld [vmem:[%s1049 + $0xc] sm:$0xf]
        %v1058 = vunpack.c.l.b16 %v1050
        %v1059 = vunpack.c.l.b16 %v1051
        %v1060 = vunpack.c.l.b16 %v1052
        %v1061 = vunpack.c.l.b16 %v1053
        %v1062 = vpack.c.b16 %v1059, %v1058
        %v1063 = vpack.c.b16 %v1061, %v1060
        %v1074 = vunpack.c.l.b16 %v1039
        %v1075 = vunpack.c.h.b16 %v1039
        %v1076 = vunpack.c.l.b16 %v1040
        %v1077 = vunpack.c.l.b16 %v1041
        %v1078 = vunpack.c.h.b16 %v1041
        %v1079 = vunpack.c.l.b16 %v1042
        %v1080 = vunpack.c.l.b16 %v1043
        %v1081 = vunpack.c.h.b16 %v1043
        %v1082 = vunpack.c.l.b16 %v1044
        %v1083 = vunpack.c.l.b16 %v1045
        %v1084 = vunpack.c.h.b16 %v1045
        %v1085 = vunpack.c.l.b16 %v1046
        %v1086 = vunpack.c.l.b16 %v1047
        %v1087 = vunpack.c.h.b16 %v1047
        %v1088 = vunpack.c.l.b16 %v1048
        %v1089 = vpack.c.b16 %v1077, %v1074
        %v1090 = vpack.c.b16 %v1078, %v1075
        %v1091 = vpack.c.b16 %v1079, %v1076
        %v1092 = vpack.c.b16 %v1083, %v1080
        %v1093 = vpack.c.b16 %v1084, %v1081
        %v1094 = vpack.c.b16 %v1085, %v1082
        %v1095 = vpack.c.b16 %v1086, %v1086
        %v1096 = vpack.c.b16 %v1087, %v1087
        %v1097 = vpack.c.b16 %v1088, %v1088
        %1098 = vrot.lane.b32.xlu0 %v1089, 127
        %v1099 = vpop.permute.xlu0 %1098
        %1100 = vrot.lane.b32.xlu0 %v1090, 127
        %v1101 = vpop.permute.xlu0 %1100
        %1102 = vrot.lane.b32.xlu0 %v1091, 127
        %v1103 = vpop.permute.xlu0 %1102
        %1104 = vrot.lane.b32.xlu0 %v1092, 127
        %v1105 = vpop.permute.xlu0 %1104
        %1106 = vrot.lane.b32.xlu0 %v1093, 127
        %v1107 = vpop.permute.xlu0 %1106
        %1108 = vrot.lane.b32.xlu0 %v1094, 127
        %v1109 = vpop.permute.xlu0 %1108
        %1110 = vrot.lane.b32.xlu0 %v1095, 127
        %v1111 = vpop.permute.xlu0 %1110
        %1112 = vrot.lane.b32.xlu0 %v1096, 127
        %v1113 = vpop.permute.xlu0 %1112
        %1114 = vrot.lane.b32.xlu0 %v1097, 127
        %v1115 = vpop.permute.xlu0 %1114
        %vm1116 = vcmask 1039360
        %v1117 = vsel %vm1116, %v1099, %v1101
        %v1118 = vsel %vm1116, %v1101, %v1103
        %v1119 = vsel %vm1116, %v1105, %v1107
        %v1120 = vsel %vm1116, %v1107, %v1109
        %v1121 = vsel %vm1116, %v1111, %v1113
        %v1122 = vsel %vm1116, %v1113, %v1115
        %v1128 = vsel %vm457, %v1062, 0
        %v1131 = vsel %vm457, %v1063, 0
        %v1134 = vsel %vm464, %v1121, 0
        %v1137 = vsel %vm464, %v1122, 0
        %1139 = vmatprep.subr.bf16.mxu0 0
        %1140 = vmatpush1.bf16.msra.mxu0 0
        %1141 = vmatprep.subr.bf16.mxu0 0
        %1142 = vmatpush1.bf16.msra.mxu0 0
        %1143 = vmatprep.subr.bf16.mxu0 0
        %1144 = vmatpush1.bf16.msra.mxu0 0
        %1145 = vmatprep.subr.bf16.mxu0 0
        %1146 = vmatpush1.bf16.msra.mxu0 0
        %1147 = vmatprep.subr.bf16.mxu0 0
        %1148 = vmatpush1.bf16.msra.mxu0 0
        %1149 = vmatprep.subr.bf16.mxu0 %v1137
        %1150 = vmatpush1.bf16.msra.mxu0 %v1134
        %1151 = vmatprep.subr.bf16.mxu0 %v1120
        %1152 = vmatpush1.bf16.msra.mxu0 %v1119
        %1153 = vmatprep.subr.bf16.mxu0 %v1118
        %1154 = vmatpush1.bf16.msra.mxu0 %v1117
        %1155 = vmatprep.subr.bf16.mxu0 0
        %1156 = vmatpush2.bf16.msra.mxu0 0
        %1157 = vmatprep.subr.bf16.mxu0 0
        %1158 = vmatpush2.bf16.msra.mxu0 0
        %1159 = vmatprep.subr.bf16.mxu0 0
        %1160 = vmatpush2.bf16.msra.mxu0 0
        %1161 = vmatprep.subr.bf16.mxu0 0
        %1162 = vmatpush2.bf16.msra.mxu0 0
        %1163 = vmatprep.subr.bf16.mxu0 0
        %1164 = vmatpush2.bf16.msra.mxu0 0
        %1165 = vmatprep.subr.bf16.mxu0 0
        %1166 = vmatpush2.bf16.msra.mxu0 0
        %1167 = vmatprep.subr.bf16.mxu0 0
        %1168 = vmatpush2.bf16.msra.mxu0 0
        %1169 = vmatprep.subr.bf16.mxu0 0
        %1170 = vmatpush2.bf16.msra.mxu0 0
        %1171 = vmatprep.mubr.bf16.mxu0 0
        %1172 = vmatmul.mubr.bf16.gmra.mxu0 %v1128
        %v1173 = vpop.f32.mrf.mxu0
        %v1174 = vadd.f32 0.0, %v1173
        %v1175 = vpop.f32.mrf.mxu0
        %v1176 = vadd.f32 0.0, %v1175
        %v1177 = vpop.f32.mrf.mxu0
        %v1178 = vadd.f32 0.0, %v1177
        %v1179 = vpop.f32.mrf.mxu0
        %v1180 = vadd.f32 0.0, %v1179
        %1181 = vmatprep.mubr.bf16.mxu0 0
        %1182 = vmatmul.mubr.bf16.gmra.mxu0 %v1131
        %v1183 = vpop.f32.mrf.mxu0
        %v1184 = vadd.f32 0.0, %v1183
        %v1185 = vpop.f32.mrf.mxu0
        %v1186 = vadd.f32 0.0, %v1185
        %v1187 = vpop.f32.mrf.mxu0
        %v1188 = vadd.f32 0.0, %v1187
        %v1189 = vpop.f32.mrf.mxu0
        %v1190 = vadd.f32 0.0, %v1189
        %1191 = vdwg.mxu0
        %v1192 = vmul.f32 %v1174, %v773
        %v1193 = vmul.f32 %v1176, %v777
        %v1194 = vmul.f32 %v1178, %v773
        %v1195 = vmul.f32 %v1180, %v777
        %v1196 = vmul.f32 %v1184, %v773
        %v1197 = vmul.f32 %v1186, %v777
        %v1198 = vmul.f32 %v1188, %v773
        %v1199 = vmul.f32 %v1190, %v777
        %v1200 = vadd.f32 %v1031, %v1192
        %v1201 = vadd.f32 %v1032, %v1193
        %v1202 = vadd.f32 %v1033, %v1194
        %v1203 = vadd.f32 %v1034, %v1195
        %v1204 = vadd.f32 %v1035, %v1196
        %v1205 = vadd.f32 %v1036, %v1197
        %v1206 = vadd.f32 %v1037, %v1198
        %v1207 = vadd.f32 %v1038, %v1199
        %s1208 = scalar_lea.vmem %s2, 96
        %v1209 = vld [vmem:[%s1208] sm:$0xf]
        %v1210 = vld [vmem:[%s1208 + $0x4] sm:$0xf]
        %v1211 = vld [vmem:[%s1208 + $0x8] sm:$0xf]
        %v1212 = vld [vmem:[%s1208 + $0xc] sm:$0xf]
        %v1217 = vunpack.c.l.b16 %v1209
        %v1218 = vunpack.c.l.b16 %v1210
        %v1219 = vunpack.c.l.b16 %v1211
        %v1220 = vunpack.c.l.b16 %v1212
        %v1221 = vpack.c.b16 %v1218, %v1217
        %v1222 = vpack.c.b16 %v1220, %v1219
        %1223 = vrot.lane.b32.xlu0 %v1089, 113
        %v1224 = vpop.permute.xlu0 %1223
        %1225 = vrot.lane.b32.xlu0 %v1090, 113
        %v1226 = vpop.permute.xlu0 %1225
        %1227 = vrot.lane.b32.xlu0 %v1091, 113
        %v1228 = vpop.permute.xlu0 %1227
        %1229 = vrot.lane.b32.xlu0 %v1092, 113
        %v1230 = vpop.permute.xlu0 %1229
        %1231 = vrot.lane.b32.xlu0 %v1093, 113
        %v1232 = vpop.permute.xlu0 %1231
        %1233 = vrot.lane.b32.xlu0 %v1094, 113
        %v1234 = vpop.permute.xlu0 %1233
        %1235 = vrot.lane.b32.xlu0 %v1095, 113
        %v1236 = vpop.permute.xlu0 %1235
        %1237 = vrot.lane.b32.xlu0 %v1096, 113
        %v1238 = vpop.permute.xlu0 %1237
        %1239 = vrot.lane.b32.xlu0 %v1097, 113
        %v1240 = vpop.permute.xlu0 %1239
        %vm1241 = vcmask 924672
        %v1242 = vsel %vm1241, %v1224, %v1226
        %v1243 = vsel %vm1241, %v1226, %v1228
        %v1244 = vsel %vm1241, %v1230, %v1232
        %v1245 = vsel %vm1241, %v1232, %v1234
        %v1246 = vsel %vm1241, %v1236, %v1238
        %v1247 = vsel %vm1241, %v1238, %v1240
        %v1253 = vsel %vm457, %v1221, 0
        %v1256 = vsel %vm457, %v1222, 0
        %v1259 = vsel %vm464, %v1246, 0
        %v1262 = vsel %vm464, %v1247, 0
        %1264 = vmatprep.subr.bf16.mxu0 0
        %1265 = vmatpush1.bf16.msra.mxu0 0
        %1266 = vmatprep.subr.bf16.mxu0 0
        %1267 = vmatpush1.bf16.msra.mxu0 0
        %1268 = vmatprep.subr.bf16.mxu0 0
        %1269 = vmatpush1.bf16.msra.mxu0 0
        %1270 = vmatprep.subr.bf16.mxu0 0
        %1271 = vmatpush1.bf16.msra.mxu0 0
        %1272 = vmatprep.subr.bf16.mxu0 0
        %1273 = vmatpush1.bf16.msra.mxu0 0
        %1274 = vmatprep.subr.bf16.mxu0 %v1262
        %1275 = vmatpush1.bf16.msra.mxu0 %v1259
        %1276 = vmatprep.subr.bf16.mxu0 %v1245
        %1277 = vmatpush1.bf16.msra.mxu0 %v1244
        %1278 = vmatprep.subr.bf16.mxu0 %v1243
        %1279 = vmatpush1.bf16.msra.mxu0 %v1242
        %1280 = vmatprep.subr.bf16.mxu0 0
        %1281 = vmatpush2.bf16.msra.mxu0 0
        %1282 = vmatprep.subr.bf16.mxu0 0
        %1283 = vmatpush2.bf16.msra.mxu0 0
        %1284 = vmatprep.subr.bf16.mxu0 0
        %1285 = vmatpush2.bf16.msra.mxu0 0
        %1286 = vmatprep.subr.bf16.mxu0 0
        %1287 = vmatpush2.bf16.msra.mxu0 0
        %1288 = vmatprep.subr.bf16.mxu0 0
        %1289 = vmatpush2.bf16.msra.mxu0 0
        %1290 = vmatprep.subr.bf16.mxu0 0
        %1291 = vmatpush2.bf16.msra.mxu0 0
        %1292 = vmatprep.subr.bf16.mxu0 0
        %1293 = vmatpush2.bf16.msra.mxu0 0
        %1294 = vmatprep.subr.bf16.mxu0 0
        %1295 = vmatpush2.bf16.msra.mxu0 0
        %1296 = vmatprep.mubr.bf16.mxu0 0
        %1297 = vmatmul.mubr.bf16.gmra.mxu0 %v1253
        %v1298 = vpop.f32.mrf.mxu0
        %v1299 = vadd.f32 0.0, %v1298
        %v1300 = vpop.f32.mrf.mxu0
        %v1301 = vadd.f32 0.0, %v1300
        %v1302 = vpop.f32.mrf.mxu0
        %v1303 = vadd.f32 0.0, %v1302
        %v1304 = vpop.f32.mrf.mxu0
        %v1305 = vadd.f32 0.0, %v1304
        %1306 = vmatprep.mubr.bf16.mxu0 0
        %1307 = vmatmul.mubr.bf16.gmra.mxu0 %v1256
        %v1308 = vpop.f32.mrf.mxu0
        %v1309 = vadd.f32 0.0, %v1308
        %v1310 = vpop.f32.mrf.mxu0
        %v1311 = vadd.f32 0.0, %v1310
        %v1312 = vpop.f32.mrf.mxu0
        %v1313 = vadd.f32 0.0, %v1312
        %v1314 = vpop.f32.mrf.mxu0
        %v1315 = vadd.f32 0.0, %v1314
        %1316 = vdwg.mxu0
        %v1317 = vmul.f32 %v1299, %v528
        %v1318 = vmul.f32 %v1301, %v532
        %v1319 = vmul.f32 %v1303, %v528
        %v1320 = vmul.f32 %v1305, %v532
        %v1321 = vmul.f32 %v1309, %v528
        %v1322 = vmul.f32 %v1311, %v532
        %v1323 = vmul.f32 %v1313, %v528
        %v1324 = vmul.f32 %v1315, %v532
        %v1325 = vadd.f32 %v1200, %v1317
        %v1326 = vadd.f32 %v1201, %v1318
        %v1327 = vadd.f32 %v1202, %v1319
        %v1328 = vadd.f32 %v1203, %v1320
        %v1329 = vadd.f32 %v1204, %v1321
        %v1330 = vadd.f32 %v1205, %v1322
        %v1331 = vadd.f32 %v1206, %v1323
        %v1332 = vadd.f32 %v1207, %v1324
        %s1333 = scalar_lea.vmem %s2, 112
        %v1334 = vld [vmem:[%s1333] sm:$0xf]
        %v1335 = vld [vmem:[%s1333 + $0x4] sm:$0xf]
        %v1336 = vld [vmem:[%s1333 + $0x8] sm:$0xf]
        %v1337 = vld [vmem:[%s1333 + $0xc] sm:$0xf]
        %v1342 = vunpack.c.l.b16 %v1334
        %v1343 = vunpack.c.l.b16 %v1335
        %v1344 = vunpack.c.l.b16 %v1336
        %v1345 = vunpack.c.l.b16 %v1337
        %v1346 = vpack.c.b16 %v1343, %v1342
        %v1347 = vpack.c.b16 %v1345, %v1344
        %1348 = vrot.lane.b32.xlu0 %v1089, 112
        %v1349 = vpop.permute.xlu0 %1348
        %1350 = vrot.lane.b32.xlu0 %v1090, 112
        %v1351 = vpop.permute.xlu0 %1350
        %1352 = vrot.lane.b32.xlu0 %v1091, 112
        %v1353 = vpop.permute.xlu0 %1352
        %1354 = vrot.lane.b32.xlu0 %v1092, 112
        %v1355 = vpop.permute.xlu0 %1354
        %1356 = vrot.lane.b32.xlu0 %v1093, 112
        %v1357 = vpop.permute.xlu0 %1356
        %1358 = vrot.lane.b32.xlu0 %v1094, 112
        %v1359 = vpop.permute.xlu0 %1358
        %1360 = vrot.lane.b32.xlu0 %v1095, 112
        %v1361 = vpop.permute.xlu0 %1360
        %1362 = vrot.lane.b32.xlu0 %v1096, 112
        %v1363 = vpop.permute.xlu0 %1362
        %1364 = vrot.lane.b32.xlu0 %v1097, 112
        %v1365 = vpop.permute.xlu0 %1364
        %vm1366 = vcmask 916480
        %v1367 = vsel %vm1366, %v1349, %v1351
        %v1368 = vsel %vm1366, %v1351, %v1353
        %v1369 = vsel %vm1366, %v1355, %v1357
        %v1370 = vsel %vm1366, %v1357, %v1359
        %v1371 = vsel %vm1366, %v1361, %v1363
        %v1372 = vsel %vm1366, %v1363, %v1365
        %v1378 = vsel %vm457, %v1346, 0
        %v1381 = vsel %vm457, %v1347, 0
        %v1384 = vsel %vm464, %v1371, 0
        %v1387 = vsel %vm464, %v1372, 0
        %1389 = vmatprep.subr.bf16.mxu0 0
        %1390 = vmatpush1.bf16.msra.mxu0 0
        %1391 = vmatprep.subr.bf16.mxu0 0
        %1392 = vmatpush1.bf16.msra.mxu0 0
        %1393 = vmatprep.subr.bf16.mxu0 0
        %1394 = vmatpush1.bf16.msra.mxu0 0
        %1395 = vmatprep.subr.bf16.mxu0 0
        %1396 = vmatpush1.bf16.msra.mxu0 0
        %1397 = vmatprep.subr.bf16.mxu0 0
        %1398 = vmatpush1.bf16.msra.mxu0 0
        %1399 = vmatprep.subr.bf16.mxu0 %v1387
        %1400 = vmatpush1.bf16.msra.mxu0 %v1384
        %1401 = vmatprep.subr.bf16.mxu0 %v1370
        %1402 = vmatpush1.bf16.msra.mxu0 %v1369
        %1403 = vmatprep.subr.bf16.mxu0 %v1368
        %1404 = vmatpush1.bf16.msra.mxu0 %v1367
        %1405 = vmatprep.subr.bf16.mxu0 0
        %1406 = vmatpush2.bf16.msra.mxu0 0
        %1407 = vmatprep.subr.bf16.mxu0 0
        %1408 = vmatpush2.bf16.msra.mxu0 0
        %1409 = vmatprep.subr.bf16.mxu0 0
        %1410 = vmatpush2.bf16.msra.mxu0 0
        %1411 = vmatprep.subr.bf16.mxu0 0
        %1412 = vmatpush2.bf16.msra.mxu0 0
        %1413 = vmatprep.subr.bf16.mxu0 0
        %1414 = vmatpush2.bf16.msra.mxu0 0
        %1415 = vmatprep.subr.bf16.mxu0 0
        %1416 = vmatpush2.bf16.msra.mxu0 0
        %1417 = vmatprep.subr.bf16.mxu0 0
        %1418 = vmatpush2.bf16.msra.mxu0 0
        %1419 = vmatprep.subr.bf16.mxu0 0
        %1420 = vmatpush2.bf16.msra.mxu0 0
        %1421 = vmatprep.mubr.bf16.mxu0 0
        %1422 = vmatmul.mubr.bf16.gmra.mxu0 %v1378
        %v1423 = vpop.f32.mrf.mxu0
        %v1424 = vadd.f32 0.0, %v1423
        %v1425 = vpop.f32.mrf.mxu0
        %v1426 = vadd.f32 0.0, %v1425
        %v1427 = vpop.f32.mrf.mxu0
        %v1428 = vadd.f32 0.0, %v1427
        %v1429 = vpop.f32.mrf.mxu0
        %v1430 = vadd.f32 0.0, %v1429
        %1431 = vmatprep.mubr.bf16.mxu0 0
        %1432 = vmatmul.mubr.bf16.gmra.mxu0 %v1381
        %v1433 = vpop.f32.mrf.mxu0
        %v1434 = vadd.f32 0.0, %v1433
        %v1435 = vpop.f32.mrf.mxu0
        %v1436 = vadd.f32 0.0, %v1435
        %v1437 = vpop.f32.mrf.mxu0
        %v1438 = vadd.f32 0.0, %v1437
        %v1439 = vpop.f32.mrf.mxu0
        %v1440 = vadd.f32 0.0, %v1439
        %1441 = vdwg.mxu0
        %v1442 = vadd.f32 %v1325, %v1424
        %v1443 = vadd.f32 %v1326, %v1426
        %v1444 = vadd.f32 %v1327, %v1428
        %v1445 = vadd.f32 %v1328, %v1430
        %v1446 = vadd.f32 %v1329, %v1434
        %v1447 = vadd.f32 %v1330, %v1436
        %v1448 = vadd.f32 %v1331, %v1438
        %v1449 = vadd.f32 %v1332, %v1440
        %s1450 = scalar_lea.vmem %s2, 128
        %v1451 = vld [vmem:[%s1450] sm:$0xf]
        %v1452 = vld [vmem:[%s1450 + $0x4] sm:$0xf]
        %v1453 = vld [vmem:[%s1450 + $0x8] sm:$0xf]
        %v1454 = vld [vmem:[%s1450 + $0xc] sm:$0xf]
        %v1459 = vunpack.c.l.b16 %v1451
        %v1460 = vunpack.c.l.b16 %v1452
        %v1461 = vunpack.c.l.b16 %v1453
        %v1462 = vunpack.c.l.b16 %v1454
        %v1463 = vpack.c.b16 %v1460, %v1459
        %v1464 = vpack.c.b16 %v1462, %v1461
        %1465 = vrot.lane.b32.xlu0 %v1089, 111
        %v1466 = vpop.permute.xlu0 %1465
        %1467 = vrot.lane.b32.xlu0 %v1090, 111
        %v1468 = vpop.permute.xlu0 %1467
        %1469 = vrot.lane.b32.xlu0 %v1091, 111
        %v1470 = vpop.permute.xlu0 %1469
        %1471 = vrot.lane.b32.xlu0 %v1092, 111
        %v1472 = vpop.permute.xlu0 %1471
        %1473 = vrot.lane.b32.xlu0 %v1093, 111
        %v1474 = vpop.permute.xlu0 %1473
        %1475 = vrot.lane.b32.xlu0 %v1094, 111
        %v1476 = vpop.permute.xlu0 %1475
        %1477 = vrot.lane.b32.xlu0 %v1095, 111
        %v1478 = vpop.permute.xlu0 %1477
        %1479 = vrot.lane.b32.xlu0 %v1096, 111
        %v1480 = vpop.permute.xlu0 %1479
        %1481 = vrot.lane.b32.xlu0 %v1097, 111
        %v1482 = vpop.permute.xlu0 %1481
        %vm1483 = vcmask 908288
        %v1484 = vsel %vm1483, %v1466, %v1468
        %v1485 = vsel %vm1483, %v1468, %v1470
        %v1486 = vsel %vm1483, %v1472, %v1474
        %v1487 = vsel %vm1483, %v1474, %v1476
        %v1488 = vsel %vm1483, %v1478, %v1480
        %v1489 = vsel %vm1483, %v1480, %v1482
        %v1495 = vsel %vm457, %v1463, 0
        %v1498 = vsel %vm457, %v1464, 0
        %v1501 = vsel %vm464, %v1488, 0
        %v1504 = vsel %vm464, %v1489, 0
        %1506 = vmatprep.subr.bf16.mxu0 0
        %1507 = vmatpush1.bf16.msra.mxu0 0
        %1508 = vmatprep.subr.bf16.mxu0 0
        %1509 = vmatpush1.bf16.msra.mxu0 0
        %1510 = vmatprep.subr.bf16.mxu0 0
        %1511 = vmatpush1.bf16.msra.mxu0 0
        %1512 = vmatprep.subr.bf16.mxu0 0
        %1513 = vmatpush1.bf16.msra.mxu0 0
        %1514 = vmatprep.subr.bf16.mxu0 0
        %1515 = vmatpush1.bf16.msra.mxu0 0
        %1516 = vmatprep.subr.bf16.mxu0 %v1504
        %1517 = vmatpush1.bf16.msra.mxu0 %v1501
        %1518 = vmatprep.subr.bf16.mxu0 %v1487
        %1519 = vmatpush1.bf16.msra.mxu0 %v1486
        %1520 = vmatprep.subr.bf16.mxu0 %v1485
        %1521 = vmatpush1.bf16.msra.mxu0 %v1484
        %1522 = vmatprep.subr.bf16.mxu0 0
        %1523 = vmatpush2.bf16.msra.mxu0 0
        %1524 = vmatprep.subr.bf16.mxu0 0
        %1525 = vmatpush2.bf16.msra.mxu0 0
        %1526 = vmatprep.subr.bf16.mxu0 0
        %1527 = vmatpush2.bf16.msra.mxu0 0
        %1528 = vmatprep.subr.bf16.mxu0 0
        %1529 = vmatpush2.bf16.msra.mxu0 0
        %1530 = vmatprep.subr.bf16.mxu0 0
        %1531 = vmatpush2.bf16.msra.mxu0 0
        %1532 = vmatprep.subr.bf16.mxu0 0
        %1533 = vmatpush2.bf16.msra.mxu0 0
        %1534 = vmatprep.subr.bf16.mxu0 0
        %1535 = vmatpush2.bf16.msra.mxu0 0
        %1536 = vmatprep.subr.bf16.mxu0 0
        %1537 = vmatpush2.bf16.msra.mxu0 0
        %1538 = vmatprep.mubr.bf16.mxu0 0
        %1539 = vmatmul.mubr.bf16.gmra.mxu0 %v1495
        %v1540 = vpop.f32.mrf.mxu0
        %v1541 = vadd.f32 0.0, %v1540
        %v1542 = vpop.f32.mrf.mxu0
        %v1543 = vadd.f32 0.0, %v1542
        %v1544 = vpop.f32.mrf.mxu0
        %v1545 = vadd.f32 0.0, %v1544
        %v1546 = vpop.f32.mrf.mxu0
        %v1547 = vadd.f32 0.0, %v1546
        %1548 = vmatprep.mubr.bf16.mxu0 0
        %1549 = vmatmul.mubr.bf16.gmra.mxu0 %v1498
        %v1550 = vpop.f32.mrf.mxu0
        %v1551 = vadd.f32 0.0, %v1550
        %v1552 = vpop.f32.mrf.mxu0
        %v1553 = vadd.f32 0.0, %v1552
        %v1554 = vpop.f32.mrf.mxu0
        %v1555 = vadd.f32 0.0, %v1554
        %v1556 = vpop.f32.mrf.mxu0
        %v1557 = vadd.f32 0.0, %v1556
        %1558 = vdwg.mxu0
        %v1559 = vmul.f32 %v1541, %v773
        %v1560 = vmul.f32 %v1543, %v777
        %v1561 = vmul.f32 %v1545, %v773
        %v1562 = vmul.f32 %v1547, %v777
        %v1563 = vmul.f32 %v1551, %v773
        %v1564 = vmul.f32 %v1553, %v777
        %v1565 = vmul.f32 %v1555, %v773
        %v1566 = vmul.f32 %v1557, %v777
        %v1567 = vadd.f32 %v1442, %v1559
        %v1568 = vadd.f32 %v1443, %v1560
        %v1569 = vadd.f32 %v1444, %v1561
        %v1570 = vadd.f32 %v1445, %v1562
        %v1571 = vadd.f32 %v1446, %v1563
        %v1572 = vadd.f32 %v1447, %v1564
        %v1573 = vadd.f32 %v1448, %v1565
        %v1574 = vadd.f32 %v1449, %v1566
        %v1575 = vld [vmem:[%s4] sm:$0xff]
        %v1576 = vld [vmem:[%s4 + $0x8] sm:$0xff]
        %v1577 = vld [vmem:[%s4 + $0x10] sm:$0xff]
        %v1578 = vld [vmem:[%s4 + $0x18] sm:$0xff]
        %v1579 = vld [vmem:[%s5] sm:$0xff]
        %v1580 = vld [vmem:[%s5 + $0x8] sm:$0xff]
        %v1581 = vld [vmem:[%s5 + $0x10] sm:$0xff]
        %v1582 = vld [vmem:[%s5 + $0x18] sm:$0xff]
        %v1583 = vadd.f32 %v1567, %v1568
        %1584 = vadd.xlane.f32.xlu0 %v1583
        %v1585 = vpop.xlane.xlu0 %1584
        %v1586 = vadd.f32 %v1569, %v1570
        %1587 = vadd.xlane.f32.xlu0 %v1586
        %v1588 = vpop.xlane.xlu0 %1587
        %v1589 = vadd.f32 %v1571, %v1572
        %1590 = vadd.xlane.f32.xlu0 %v1589
        %v1591 = vpop.xlane.xlu0 %1590
        %v1592 = vadd.f32 %v1573, %v1574
        %1593 = vadd.xlane.f32.xlu0 %v1592
        %v1594 = vpop.xlane.xlu0 %1593
        %v1595 = vrcp.pop 256.0
        %v1596 = vmul.f32 %v1585, %v1595
        %v1597 = vmul.f32 %v1588, %v1595
        %v1598 = vmul.f32 %v1591, %v1595
        %v1599 = vmul.f32 %v1594, %v1595
        %v1600 = vmul.f32 %v1567, %v1567
        %v1601 = vmul.f32 %v1568, %v1568
        %v1602 = vmul.f32 %v1569, %v1569
        %v1603 = vmul.f32 %v1570, %v1570
        %v1604 = vmul.f32 %v1571, %v1571
        %v1605 = vmul.f32 %v1572, %v1572
        %v1606 = vmul.f32 %v1573, %v1573
        %v1607 = vmul.f32 %v1574, %v1574
        %v1608 = vadd.f32 %v1600, %v1601
        %1609 = vadd.xlane.f32.xlu0 %v1608
        %v1610 = vpop.xlane.xlu0 %1609
        %v1611 = vadd.f32 %v1602, %v1603
        %1612 = vadd.xlane.f32.xlu0 %v1611
        %v1613 = vpop.xlane.xlu0 %1612
        %v1614 = vadd.f32 %v1604, %v1605
        %1615 = vadd.xlane.f32.xlu0 %v1614
        %v1616 = vpop.xlane.xlu0 %1615
        %v1617 = vadd.f32 %v1606, %v1607
        %1618 = vadd.xlane.f32.xlu0 %v1617
        %v1619 = vpop.xlane.xlu0 %1618
        %v1620 = vmul.f32 %v1610, %v1595
        %v1621 = vmul.f32 %v1613, %v1595
        %v1622 = vmul.f32 %v1616, %v1595
        %v1623 = vmul.f32 %v1619, %v1595
        %v1624 = vmul.f32 %v1596, %v1596
        %v1625 = vmul.f32 %v1597, %v1597
        %v1626 = vmul.f32 %v1598, %v1598
        %v1627 = vmul.f32 %v1599, %v1599
        %v1628 = vsub.f32 %v1620, %v1624
        %v1629 = vsub.f32 %v1621, %v1625
        %v1630 = vsub.f32 %v1622, %v1626
        %v1631 = vsub.f32 %v1623, %v1627
        %v1632 = vmax.f32 %v1628, 0.0
        %v1633 = vmax.f32 %v1629, 0.0
        %v1634 = vmax.f32 %v1630, 0.0
        %v1635 = vmax.f32 %v1631, 0.0
        %v1636 = vadd.f32 %v1632, 1e-05
        %v1637 = vadd.f32 %v1633, 1e-05
        %v1638 = vadd.f32 %v1634, 1e-05
        %v1639 = vadd.f32 %v1635, 1e-05
        %v1640 = vrsqrt.pop %v1636
        %v1641 = vrsqrt.pop %v1637
        %v1642 = vrsqrt.pop %v1638
        %v1643 = vrsqrt.pop %v1639
        %v1644 = vmul.f32 %v1640, %v1575
        %v1645 = vmul.f32 %v1641, %v1576
        %v1646 = vmul.f32 %v1642, %v1577
        %v1647 = vmul.f32 %v1643, %v1578
        %v1648 = vmul.f32 %v1596, %v1644
        %v1649 = vmul.f32 %v1597, %v1645
        %v1650 = vmul.f32 %v1598, %v1646
        %v1651 = vmul.f32 %v1599, %v1647
        %v1652 = vsub.f32 %v1579, %v1648
        %v1653 = vsub.f32 %v1580, %v1649
        %v1654 = vsub.f32 %v1581, %v1650
        %v1655 = vsub.f32 %v1582, %v1651
        %1657 = vset.pattern.permute.xlu0 0
        %1658 = vperm.xlu0 %1657, %v1644
        %v1659 = vpop.permute.xlu0 %1658
        %1662 = vset.pattern.permute.xlu0 0
        %1663 = vperm.xlu0 %1662, %v1645
        %v1664 = vpop.permute.xlu0 %1663
        %1667 = vset.pattern.permute.xlu0 0
        %1668 = vperm.xlu0 %1667, %v1646
        %v1669 = vpop.permute.xlu0 %1668
        %1672 = vset.pattern.permute.xlu0 0
        %1673 = vperm.xlu0 %1672, %v1647
        %v1674 = vpop.permute.xlu0 %1673
        %v1676 = vmul.f32 %v1567, %v1659
        %v1677 = vmul.f32 %v1568, %v1659
        %v1678 = vmul.f32 %v1569, %v1664
        %v1679 = vmul.f32 %v1570, %v1664
        %v1680 = vmul.f32 %v1571, %v1669
        %v1681 = vmul.f32 %v1572, %v1669
        %v1682 = vmul.f32 %v1573, %v1674
        %v1683 = vmul.f32 %v1574, %v1674
        %1685 = vset.pattern.permute.xlu0 0
        %1686 = vperm.xlu0 %1685, %v1652
        %v1687 = vpop.permute.xlu0 %1686
        %1690 = vset.pattern.permute.xlu0 0
        %1691 = vperm.xlu0 %1690, %v1653
        %v1692 = vpop.permute.xlu0 %1691
        %1695 = vset.pattern.permute.xlu0 0
        %1696 = vperm.xlu0 %1695, %v1654
        %v1697 = vpop.permute.xlu0 %1696
        %1700 = vset.pattern.permute.xlu0 0
        %1701 = vperm.xlu0 %1700, %v1655
        %v1702 = vpop.permute.xlu0 %1701
        %v1704 = vadd.f32 %v1676, %v1687
        %v1705 = vadd.f32 %v1677, %v1687
        %v1706 = vadd.f32 %v1678, %v1692
        %v1707 = vadd.f32 %v1679, %v1692
        %v1708 = vadd.f32 %v1680, %v1697
        %v1709 = vadd.f32 %v1681, %v1697
        %v1710 = vadd.f32 %v1682, %v1702
        %v1711 = vadd.f32 %v1683, %v1702
        %v1712 = vmax.f32 %v1704, 0.0
        %v1713 = vmax.f32 %v1705, 0.0
        %v1714 = vmax.f32 %v1706, 0.0
        %v1715 = vmax.f32 %v1707, 0.0
        %v1716 = vmax.f32 %v1708, 0.0
        %v1717 = vmax.f32 %v1709, 0.0
        %v1718 = vmax.f32 %v1710, 0.0
        %v1719 = vmax.f32 %v1711, 0.0
        %v1720 = vpack.c.bf16 %v1714, %v1712
        %v1721 = vpack.c.bf16 %v1715, %v1713
        %v1722 = vpack.c.bf16 %v1718, %v1716
        %v1723 = vpack.c.bf16 %v1719, %v1717
        %v1728 = vunpack.c.l.b16 %v1720
        %v1729 = vunpack.c.l.b16 %v1721
        %v1730 = vunpack.c.h.b16 %v1720
        %v1731 = vunpack.c.h.b16 %v1721
        %v1732 = vunpack.c.l.b16 %v1722
        %v1733 = vunpack.c.l.b16 %v1723
        %v1734 = vunpack.c.h.b16 %v1722
        %v1735 = vunpack.c.h.b16 %v1723
        %v1736 = vpack.c.b16 %v1729, %v1728
        %v1737 = vpack.c.b16 %v1731, %v1730
        %v1738 = vpack.c.b16 %v1733, %v1732
        %v1739 = vpack.c.b16 %v1735, %v1734
        %1744 = vst [vmem:[#allocation2 + $0x4] sm:$0xff] %v1736
        %1745 = vst [vmem:[#allocation2 + $0x14] sm:$0xff] %v1737
        %1746 = vst [vmem:[#allocation2 + $0x24] sm:$0xff] %v1738
        %1747 = vst [vmem:[#allocation2 + $0x34] sm:$0xff] %v1739
        %v1748 = vld [vmem:[#allocation2] sm:$0xff]
        %v1749 = vld [vmem:[#allocation2 + $0x8] sm:$0xf]
        %v1750 = vld [vmem:[#allocation2 + $0x10] sm:$0xff]
        %v1751 = vld [vmem:[#allocation2 + $0x18] sm:$0xf]
        %v1752 = vld [vmem:[#allocation2 + $0x20] sm:$0xff]
        %v1753 = vld [vmem:[#allocation2 + $0x28] sm:$0xf]
        %v1754 = vld [vmem:[#allocation2 + $0x30] sm:$0xff]
        %v1755 = vld [vmem:[#allocation2 + $0x38] sm:$0xf]
        %v1756 = vld [vmem:[#allocation3] sm:$0xf]
        %v1757 = vld [vmem:[#allocation3 + $0x4] sm:$0xf]
        %v1758 = vld [vmem:[#allocation3 + $0x8] sm:$0xf]
        %v1759 = vld [vmem:[#allocation3 + $0xc] sm:$0xf]
        %v1764 = vunpack.c.l.b16 %v1756
        %v1765 = vunpack.c.l.b16 %v1757
        %v1766 = vunpack.c.l.b16 %v1758
        %v1767 = vunpack.c.l.b16 %v1759
        %v1768 = vpack.c.b16 %v1765, %v1764
        %v1769 = vpack.c.b16 %v1767, %v1766
        %v1778 = vunpack.c.l.b16 %v1748
        %v1779 = vunpack.c.h.b16 %v1748
        %v1780 = vunpack.c.l.b16 %v1749
        %v1781 = vunpack.c.l.b16 %v1750
        %v1782 = vunpack.c.h.b16 %v1750
        %v1783 = vunpack.c.l.b16 %v1751
        %v1784 = vunpack.c.l.b16 %v1752
        %v1785 = vunpack.c.h.b16 %v1752
        %v1786 = vunpack.c.l.b16 %v1753
        %v1787 = vunpack.c.l.b16 %v1754
        %v1788 = vunpack.c.h.b16 %v1754
        %v1789 = vunpack.c.l.b16 %v1755
        %v1790 = vpack.c.b16 %v1781, %v1778
        %v1791 = vpack.c.b16 %v1782, %v1779
        %v1792 = vpack.c.b16 %v1783, %v1780
        %v1793 = vpack.c.b16 %v1787, %v1784
        %v1794 = vpack.c.b16 %v1788, %v1785
        %v1795 = vpack.c.b16 %v1789, %v1786
        %1796 = vrot.lane.b32.xlu0 %v1790, 17
        %v1797 = vpop.permute.xlu0 %1796
        %1798 = vrot.lane.b32.xlu0 %v1791, 17
        %v1799 = vpop.permute.xlu0 %1798
        %1800 = vrot.lane.b32.xlu0 %v1792, 17
        %v1801 = vpop.permute.xlu0 %1800
        %1802 = vrot.lane.b32.xlu0 %v1793, 17
        %v1803 = vpop.permute.xlu0 %1802
        %1804 = vrot.lane.b32.xlu0 %v1794, 17
        %v1805 = vpop.permute.xlu0 %1804
        %1806 = vrot.lane.b32.xlu0 %v1795, 17
        %v1807 = vpop.permute.xlu0 %1806
        %v1808 = vsel %vm446, %v1797, %v1799
        %v1809 = vsel %vm446, %v1799, %v1801
        %v1810 = vsel %vm446, %v1803, %v1805
        %v1811 = vsel %vm446, %v1805, %v1807
        %vm1816 = vcmask 261120
        %v1818 = vsel %vm1816, %v1768, 0
        %v1821 = vsel %vm1816, %v1769, 0
        %1823 = vmatprep.subr.bf16.mxu0 0
        %1824 = vmatpush1.bf16.msra.mxu0 0
        %1825 = vmatprep.subr.bf16.mxu0 0
        %1826 = vmatpush1.bf16.msra.mxu0 0
        %1827 = vmatprep.subr.bf16.mxu0 0
        %1828 = vmatpush1.bf16.msra.mxu0 0
        %1829 = vmatprep.subr.bf16.mxu0 0
        %1830 = vmatpush1.bf16.msra.mxu0 0
        %1831 = vmatprep.subr.bf16.mxu0 0
        %1832 = vmatpush1.bf16.msra.mxu0 0
        %1833 = vmatprep.subr.bf16.mxu0 0
        %1834 = vmatpush1.bf16.msra.mxu0 0
        %1835 = vmatprep.subr.bf16.mxu0 %v1811
        %1836 = vmatpush1.bf16.msra.mxu0 %v1810
        %1837 = vmatprep.subr.bf16.mxu0 %v1809
        %1838 = vmatpush1.bf16.msra.mxu0 %v1808
        %1839 = vmatprep.subr.bf16.mxu0 0
        %1840 = vmatpush2.bf16.msra.mxu0 0
        %1841 = vmatprep.subr.bf16.mxu0 0
        %1842 = vmatpush2.bf16.msra.mxu0 0
        %1843 = vmatprep.subr.bf16.mxu0 0
        %1844 = vmatpush2.bf16.msra.mxu0 0
        %1845 = vmatprep.subr.bf16.mxu0 0
        %1846 = vmatpush2.bf16.msra.mxu0 0
        %1847 = vmatprep.subr.bf16.mxu0 0
        %1848 = vmatpush2.bf16.msra.mxu0 0
        %1849 = vmatprep.subr.bf16.mxu0 0
        %1850 = vmatpush2.bf16.msra.mxu0 0
        %1851 = vmatprep.subr.bf16.mxu0 0
        %1852 = vmatpush2.bf16.msra.mxu0 0
        %1853 = vmatprep.subr.bf16.mxu0 0
        %1854 = vmatpush2.bf16.msra.mxu0 0
        %1855 = vmatprep.mubr.bf16.mxu0 0
        %1856 = vmatmul.mubr.bf16.gmra.mxu0 %v1818
        %v1857 = vpop.f32.mrf.mxu0
        %v1858 = vadd.f32 0.0, %v1857
        %v1859 = vpop.f32.mrf.mxu0
        %v1860 = vadd.f32 0.0, %v1859
        %v1861 = vpop.f32.mrf.mxu0
        %v1862 = vadd.f32 0.0, %v1861
        %v1863 = vpop.f32.mrf.mxu0
        %v1864 = vadd.f32 0.0, %v1863
        %1865 = vmatprep.mubr.bf16.mxu0 0
        %1866 = vmatmul.mubr.bf16.gmra.mxu0 %v1821
        %v1867 = vpop.f32.mrf.mxu0
        %v1868 = vadd.f32 0.0, %v1867
        %v1869 = vpop.f32.mrf.mxu0
        %v1870 = vadd.f32 0.0, %v1869
        %v1871 = vpop.f32.mrf.mxu0
        %v1872 = vadd.f32 0.0, %v1871
        %v1873 = vpop.f32.mrf.mxu0
        %v1874 = vadd.f32 0.0, %v1873
        %1875 = vdwg.mxu0
        %v1876 = vmul.f32 %v1858, %v528
        %v1877 = vmul.f32 %v1860, %v532
        %v1878 = vmul.f32 %v1862, %v528
        %v1879 = vmul.f32 %v1864, %v532
        %v1880 = vmul.f32 %v1868, %v528
        %v1881 = vmul.f32 %v1870, %v532
        %v1882 = vmul.f32 %v1872, %v528
        %v1883 = vmul.f32 %v1874, %v532
        %s1884 = scalar_lea.vmem [#allocation3], 16
        %v1885 = vld [vmem:[%s1884] sm:$0xf]
        %v1886 = vld [vmem:[%s1884 + $0x4] sm:$0xf]
        %v1887 = vld [vmem:[%s1884 + $0x8] sm:$0xf]
        %v1888 = vld [vmem:[%s1884 + $0xc] sm:$0xf]
        %v1893 = vunpack.c.l.b16 %v1885
        %v1894 = vunpack.c.l.b16 %v1886
        %v1895 = vunpack.c.l.b16 %v1887
        %v1896 = vunpack.c.l.b16 %v1888
        %v1897 = vpack.c.b16 %v1894, %v1893
        %v1898 = vpack.c.b16 %v1896, %v1895
        %1899 = vrot.lane.b32.xlu0 %v1790, 16
        %v1900 = vpop.permute.xlu0 %1899
        %1901 = vrot.lane.b32.xlu0 %v1791, 16
        %v1902 = vpop.permute.xlu0 %1901
        %1903 = vrot.lane.b32.xlu0 %v1792, 16
        %v1904 = vpop.permute.xlu0 %1903
        %1905 = vrot.lane.b32.xlu0 %v1793, 16
        %v1906 = vpop.permute.xlu0 %1905
        %1907 = vrot.lane.b32.xlu0 %v1794, 16
        %v1908 = vpop.permute.xlu0 %1907
        %1909 = vrot.lane.b32.xlu0 %v1795, 16
        %v1910 = vpop.permute.xlu0 %1909
        %v1911 = vsel %vm576, %v1900, %v1902
        %v1912 = vsel %vm576, %v1902, %v1904
        %v1913 = vsel %vm576, %v1906, %v1908
        %v1914 = vsel %vm576, %v1908, %v1910
        %v1920 = vsel %vm1816, %v1897, 0
        %v1923 = vsel %vm1816, %v1898, 0
        %1925 = vmatprep.subr.bf16.mxu0 0
        %1926 = vmatpush1.bf16.msra.mxu0 0
        %1927 = vmatprep.subr.bf16.mxu0 0
        %1928 = vmatpush1.bf16.msra.mxu0 0
        %1929 = vmatprep.subr.bf16.mxu0 0
        %1930 = vmatpush1.bf16.msra.mxu0 0
        %1931 = vmatprep.subr.bf16.mxu0 0
        %1932 = vmatpush1.bf16.msra.mxu0 0
        %1933 = vmatprep.subr.bf16.mxu0 0
        %1934 = vmatpush1.bf16.msra.mxu0 0
        %1935 = vmatprep.subr.bf16.mxu0 0
        %1936 = vmatpush1.bf16.msra.mxu0 0
        %1937 = vmatprep.subr.bf16.mxu0 %v1914
        %1938 = vmatpush1.bf16.msra.mxu0 %v1913
        %1939 = vmatprep.subr.bf16.mxu0 %v1912
        %1940 = vmatpush1.bf16.msra.mxu0 %v1911
        %1941 = vmatprep.subr.bf16.mxu0 0
        %1942 = vmatpush2.bf16.msra.mxu0 0
        %1943 = vmatprep.subr.bf16.mxu0 0
        %1944 = vmatpush2.bf16.msra.mxu0 0
        %1945 = vmatprep.subr.bf16.mxu0 0
        %1946 = vmatpush2.bf16.msra.mxu0 0
        %1947 = vmatprep.subr.bf16.mxu0 0
        %1948 = vmatpush2.bf16.msra.mxu0 0
        %1949 = vmatprep.subr.bf16.mxu0 0
        %1950 = vmatpush2.bf16.msra.mxu0 0
        %1951 = vmatprep.subr.bf16.mxu0 0
        %1952 = vmatpush2.bf16.msra.mxu0 0
        %1953 = vmatprep.subr.bf16.mxu0 0
        %1954 = vmatpush2.bf16.msra.mxu0 0
        %1955 = vmatprep.subr.bf16.mxu0 0
        %1956 = vmatpush2.bf16.msra.mxu0 0
        %1957 = vmatprep.mubr.bf16.mxu0 0
        %1958 = vmatmul.mubr.bf16.gmra.mxu0 %v1920
        %v1959 = vpop.f32.mrf.mxu0
        %v1960 = vadd.f32 0.0, %v1959
        %v1961 = vpop.f32.mrf.mxu0
        %v1962 = vadd.f32 0.0, %v1961
        %v1963 = vpop.f32.mrf.mxu0
        %v1964 = vadd.f32 0.0, %v1963
        %v1965 = vpop.f32.mrf.mxu0
        %v1966 = vadd.f32 0.0, %v1965
        %1967 = vmatprep.mubr.bf16.mxu0 0
        %1968 = vmatmul.mubr.bf16.gmra.mxu0 %v1923
        %v1969 = vpop.f32.mrf.mxu0
        %v1970 = vadd.f32 0.0, %v1969
        %v1971 = vpop.f32.mrf.mxu0
        %v1972 = vadd.f32 0.0, %v1971
        %v1973 = vpop.f32.mrf.mxu0
        %v1974 = vadd.f32 0.0, %v1973
        %v1975 = vpop.f32.mrf.mxu0
        %v1976 = vadd.f32 0.0, %v1975
        %1977 = vdwg.mxu0
        %v1978 = vadd.f32 %v1876, %v1960
        %v1979 = vadd.f32 %v1877, %v1962
        %v1980 = vadd.f32 %v1878, %v1964
        %v1981 = vadd.f32 %v1879, %v1966
        %v1982 = vadd.f32 %v1880, %v1970
        %v1983 = vadd.f32 %v1881, %v1972
        %v1984 = vadd.f32 %v1882, %v1974
        %v1985 = vadd.f32 %v1883, %v1976
        %s1986 = scalar_lea.vmem [#allocation3], 32
        %v1987 = vld [vmem:[%s1986] sm:$0xf]
        %v1988 = vld [vmem:[%s1986 + $0x4] sm:$0xf]
        %v1989 = vld [vmem:[%s1986 + $0x8] sm:$0xf]
        %v1990 = vld [vmem:[%s1986 + $0xc] sm:$0xf]
        %v1995 = vunpack.c.l.b16 %v1987
        %v1996 = vunpack.c.l.b16 %v1988
        %v1997 = vunpack.c.l.b16 %v1989
        %v1998 = vunpack.c.l.b16 %v1990
        %v1999 = vpack.c.b16 %v1996, %v1995
        %v2000 = vpack.c.b16 %v1998, %v1997
        %2001 = vrot.lane.b32.xlu0 %v1790, 15
        %v2002 = vpop.permute.xlu0 %2001
        %2003 = vrot.lane.b32.xlu0 %v1791, 15
        %v2004 = vpop.permute.xlu0 %2003
        %2005 = vrot.lane.b32.xlu0 %v1792, 15
        %v2006 = vpop.permute.xlu0 %2005
        %2007 = vrot.lane.b32.xlu0 %v1793, 15
        %v2008 = vpop.permute.xlu0 %2007
        %2009 = vrot.lane.b32.xlu0 %v1794, 15
        %v2010 = vpop.permute.xlu0 %2009
        %2011 = vrot.lane.b32.xlu0 %v1795, 15
        %v2012 = vpop.permute.xlu0 %2011
        %v2013 = vsel %vm693, %v2002, %v2004
        %v2014 = vsel %vm693, %v2004, %v2006
        %v2015 = vsel %vm693, %v2008, %v2010
        %v2016 = vsel %vm693, %v2010, %v2012
        %v2022 = vsel %vm1816, %v1999, 0
        %v2025 = vsel %vm1816, %v2000, 0
        %2027 = vmatprep.subr.bf16.mxu0 0
        %2028 = vmatpush1.bf16.msra.mxu0 0
        %2029 = vmatprep.subr.bf16.mxu0 0
        %2030 = vmatpush1.bf16.msra.mxu0 0
        %2031 = vmatprep.subr.bf16.mxu0 0
        %2032 = vmatpush1.bf16.msra.mxu0 0
        %2033 = vmatprep.subr.bf16.mxu0 0
        %2034 = vmatpush1.bf16.msra.mxu0 0
        %2035 = vmatprep.subr.bf16.mxu0 0
        %2036 = vmatpush1.bf16.msra.mxu0 0
        %2037 = vmatprep.subr.bf16.mxu0 0
        %2038 = vmatpush1.bf16.msra.mxu0 0
        %2039 = vmatprep.subr.bf16.mxu0 %v2016
        %2040 = vmatpush1.bf16.msra.mxu0 %v2015
        %2041 = vmatprep.subr.bf16.mxu0 %v2014
        %2042 = vmatpush1.bf16.msra.mxu0 %v2013
        %2043 = vmatprep.subr.bf16.mxu0 0
        %2044 = vmatpush2.bf16.msra.mxu0 0
        %2045 = vmatprep.subr.bf16.mxu0 0
        %2046 = vmatpush2.bf16.msra.mxu0 0
        %2047 = vmatprep.subr.bf16.mxu0 0
        %2048 = vmatpush2.bf16.msra.mxu0 0
        %2049 = vmatprep.subr.bf16.mxu0 0
        %2050 = vmatpush2.bf16.msra.mxu0 0
        %2051 = vmatprep.subr.bf16.mxu0 0
        %2052 = vmatpush2.bf16.msra.mxu0 0
        %2053 = vmatprep.subr.bf16.mxu0 0
        %2054 = vmatpush2.bf16.msra.mxu0 0
        %2055 = vmatprep.subr.bf16.mxu0 0
        %2056 = vmatpush2.bf16.msra.mxu0 0
        %2057 = vmatprep.subr.bf16.mxu0 0
        %2058 = vmatpush2.bf16.msra.mxu0 0
        %2059 = vmatprep.mubr.bf16.mxu0 0
        %2060 = vmatmul.mubr.bf16.gmra.mxu0 %v2022
        %v2061 = vpop.f32.mrf.mxu0
        %v2062 = vadd.f32 0.0, %v2061
        %v2063 = vpop.f32.mrf.mxu0
        %v2064 = vadd.f32 0.0, %v2063
        %v2065 = vpop.f32.mrf.mxu0
        %v2066 = vadd.f32 0.0, %v2065
        %v2067 = vpop.f32.mrf.mxu0
        %v2068 = vadd.f32 0.0, %v2067
        %2069 = vmatprep.mubr.bf16.mxu0 0
        %2070 = vmatmul.mubr.bf16.gmra.mxu0 %v2025
        %v2071 = vpop.f32.mrf.mxu0
        %v2072 = vadd.f32 0.0, %v2071
        %v2073 = vpop.f32.mrf.mxu0
        %v2074 = vadd.f32 0.0, %v2073
        %v2075 = vpop.f32.mrf.mxu0
        %v2076 = vadd.f32 0.0, %v2075
        %v2077 = vpop.f32.mrf.mxu0
        %v2078 = vadd.f32 0.0, %v2077
        %2079 = vdwg.mxu0
        %v2080 = vmul.f32 %v2062, %v773
        %v2081 = vmul.f32 %v2064, %v777
        %v2082 = vmul.f32 %v2066, %v773
        %v2083 = vmul.f32 %v2068, %v777
        %v2084 = vmul.f32 %v2072, %v773
        %v2085 = vmul.f32 %v2074, %v777
        %v2086 = vmul.f32 %v2076, %v773
        %v2087 = vmul.f32 %v2078, %v777
        %v2088 = vadd.f32 %v1978, %v2080
        %v2089 = vadd.f32 %v1979, %v2081
        %v2090 = vadd.f32 %v1980, %v2082
        %v2091 = vadd.f32 %v1981, %v2083
        %v2092 = vadd.f32 %v1982, %v2084
        %v2093 = vadd.f32 %v1983, %v2085
        %v2094 = vadd.f32 %v1984, %v2086
        %v2095 = vadd.f32 %v1985, %v2087
        %s2096 = scalar_lea.vmem [#allocation3], 48
        %v2097 = vld [vmem:[%s2096] sm:$0xf]
        %v2098 = vld [vmem:[%s2096 + $0x4] sm:$0xf]
        %v2099 = vld [vmem:[%s2096 + $0x8] sm:$0xf]
        %v2100 = vld [vmem:[%s2096 + $0xc] sm:$0xf]
        %v2105 = vunpack.c.l.b16 %v2097
        %v2106 = vunpack.c.l.b16 %v2098
        %v2107 = vunpack.c.l.b16 %v2099
        %v2108 = vunpack.c.l.b16 %v2100
        %v2109 = vpack.c.b16 %v2106, %v2105
        %v2110 = vpack.c.b16 %v2108, %v2107
        %2111 = vrot.lane.b32.xlu0 %v1790, 1
        %v2112 = vpop.permute.xlu0 %2111
        %2113 = vrot.lane.b32.xlu0 %v1791, 1
        %v2114 = vpop.permute.xlu0 %2113
        %2115 = vrot.lane.b32.xlu0 %v1792, 1
        %v2116 = vpop.permute.xlu0 %2115
        %2117 = vrot.lane.b32.xlu0 %v1793, 1
        %v2118 = vpop.permute.xlu0 %2117
        %2119 = vrot.lane.b32.xlu0 %v1794, 1
        %v2120 = vpop.permute.xlu0 %2119
        %2121 = vrot.lane.b32.xlu0 %v1795, 1
        %v2122 = vpop.permute.xlu0 %2121
        %v2123 = vsel %vm829, %v2112, %v2114
        %v2124 = vsel %vm829, %v2114, %v2116
        %v2125 = vsel %vm829, %v2118, %v2120
        %v2126 = vsel %vm829, %v2120, %v2122
        %v2132 = vsel %vm1816, %v2109, 0
        %v2135 = vsel %vm1816, %v2110, 0
        %2137 = vmatprep.subr.bf16.mxu0 0
        %2138 = vmatpush1.bf16.msra.mxu0 0
        %2139 = vmatprep.subr.bf16.mxu0 0
        %2140 = vmatpush1.bf16.msra.mxu0 0
        %2141 = vmatprep.subr.bf16.mxu0 0
        %2142 = vmatpush1.bf16.msra.mxu0 0
        %2143 = vmatprep.subr.bf16.mxu0 0
        %2144 = vmatpush1.bf16.msra.mxu0 0
        %2145 = vmatprep.subr.bf16.mxu0 0
        %2146 = vmatpush1.bf16.msra.mxu0 0
        %2147 = vmatprep.subr.bf16.mxu0 0
        %2148 = vmatpush1.bf16.msra.mxu0 0
        %2149 = vmatprep.subr.bf16.mxu0 %v2126
        %2150 = vmatpush1.bf16.msra.mxu0 %v2125
        %2151 = vmatprep.subr.bf16.mxu0 %v2124
        %2152 = vmatpush1.bf16.msra.mxu0 %v2123
        %2153 = vmatprep.subr.bf16.mxu0 0
        %2154 = vmatpush2.bf16.msra.mxu0 0
        %2155 = vmatprep.subr.bf16.mxu0 0
        %2156 = vmatpush2.bf16.msra.mxu0 0
        %2157 = vmatprep.subr.bf16.mxu0 0
        %2158 = vmatpush2.bf16.msra.mxu0 0
        %2159 = vmatprep.subr.bf16.mxu0 0
        %2160 = vmatpush2.bf16.msra.mxu0 0
        %2161 = vmatprep.subr.bf16.mxu0 0
        %2162 = vmatpush2.bf16.msra.mxu0 0
        %2163 = vmatprep.subr.bf16.mxu0 0
        %2164 = vmatpush2.bf16.msra.mxu0 0
        %2165 = vmatprep.subr.bf16.mxu0 0
        %2166 = vmatpush2.bf16.msra.mxu0 0
        %2167 = vmatprep.subr.bf16.mxu0 0
        %2168 = vmatpush2.bf16.msra.mxu0 0
        %2169 = vmatprep.mubr.bf16.mxu0 0
        %2170 = vmatmul.mubr.bf16.gmra.mxu0 %v2132
        %v2171 = vpop.f32.mrf.mxu0
        %v2172 = vadd.f32 0.0, %v2171
        %v2173 = vpop.f32.mrf.mxu0
        %v2174 = vadd.f32 0.0, %v2173
        %v2175 = vpop.f32.mrf.mxu0
        %v2176 = vadd.f32 0.0, %v2175
        %v2177 = vpop.f32.mrf.mxu0
        %v2178 = vadd.f32 0.0, %v2177
        %2179 = vmatprep.mubr.bf16.mxu0 0
        %2180 = vmatmul.mubr.bf16.gmra.mxu0 %v2135
        %v2181 = vpop.f32.mrf.mxu0
        %v2182 = vadd.f32 0.0, %v2181
        %v2183 = vpop.f32.mrf.mxu0
        %v2184 = vadd.f32 0.0, %v2183
        %v2185 = vpop.f32.mrf.mxu0
        %v2186 = vadd.f32 0.0, %v2185
        %v2187 = vpop.f32.mrf.mxu0
        %v2188 = vadd.f32 0.0, %v2187
        %2189 = vdwg.mxu0
        %v2190 = vmul.f32 %v2172, %v528
        %v2191 = vmul.f32 %v2174, %v532
        %v2192 = vmul.f32 %v2176, %v528
        %v2193 = vmul.f32 %v2178, %v532
        %v2194 = vmul.f32 %v2182, %v528
        %v2195 = vmul.f32 %v2184, %v532
        %v2196 = vmul.f32 %v2186, %v528
        %v2197 = vmul.f32 %v2188, %v532
        %v2198 = vadd.f32 %v2088, %v2190
        %v2199 = vadd.f32 %v2089, %v2191
        %v2200 = vadd.f32 %v2090, %v2192
        %v2201 = vadd.f32 %v2091, %v2193
        %v2202 = vadd.f32 %v2092, %v2194
        %v2203 = vadd.f32 %v2093, %v2195
        %v2204 = vadd.f32 %v2094, %v2196
        %v2205 = vadd.f32 %v2095, %v2197
        %v2206 = vld [vmem:[#allocation2 + $0x4] sm:$0xff]
        %v2207 = vld [vmem:[#allocation2 + $0x14] sm:$0xff]
        %v2208 = vld [vmem:[#allocation2 + $0x24] sm:$0xff]
        %v2209 = vld [vmem:[#allocation2 + $0x34] sm:$0xff]
        %s2210 = scalar_lea.vmem [#allocation3], 64
        %v2211 = vld [vmem:[%s2210] sm:$0xf]
        %v2212 = vld [vmem:[%s2210 + $0x4] sm:$0xf]
        %v2213 = vld [vmem:[%s2210 + $0x8] sm:$0xf]
        %v2214 = vld [vmem:[%s2210 + $0xc] sm:$0xf]
        %v2219 = vunpack.c.l.b16 %v2211
        %v2220 = vunpack.c.l.b16 %v2212
        %v2221 = vunpack.c.l.b16 %v2213
        %v2222 = vunpack.c.l.b16 %v2214
        %v2223 = vpack.c.b16 %v2220, %v2219
        %v2224 = vpack.c.b16 %v2222, %v2221
        %v2229 = vunpack.c.l.b16 %v2206
        %v2230 = vunpack.c.h.b16 %v2206
        %v2231 = vunpack.c.l.b16 %v2207
        %v2232 = vunpack.c.h.b16 %v2207
        %v2233 = vunpack.c.l.b16 %v2208
        %v2234 = vunpack.c.h.b16 %v2208
        %v2235 = vunpack.c.l.b16 %v2209
        %v2236 = vunpack.c.h.b16 %v2209
        %v2237 = vpack.c.b16 %v2231, %v2229
        %v2238 = vpack.c.b16 %v2232, %v2230
        %v2239 = vpack.c.b16 %v2235, %v2233
        %v2240 = vpack.c.b16 %v2236, %v2234
        %v2246 = vsel %vm1816, %v2223, 0
        %v2249 = vsel %vm1816, %v2224, 0
        %2251 = vmatprep.subr.bf16.mxu0 0
        %2252 = vmatpush1.bf16.msra.mxu0 0
        %2253 = vmatprep.subr.bf16.mxu0 0
        %2254 = vmatpush1.bf16.msra.mxu0 0
        %2255 = vmatprep.subr.bf16.mxu0 0
        %2256 = vmatpush1.bf16.msra.mxu0 0
        %2257 = vmatprep.subr.bf16.mxu0 0
        %2258 = vmatpush1.bf16.msra.mxu0 0
        %2259 = vmatprep.subr.bf16.mxu0 0
        %2260 = vmatpush1.bf16.msra.mxu0 0
        %2261 = vmatprep.subr.bf16.mxu0 0
        %2262 = vmatpush1.bf16.msra.mxu0 0
        %2263 = vmatprep.subr.bf16.mxu0 %v2240
        %2264 = vmatpush1.bf16.msra.mxu0 %v2239
        %2265 = vmatprep.subr.bf16.mxu0 %v2238
        %2266 = vmatpush1.bf16.msra.mxu0 %v2237
        %2267 = vmatprep.subr.bf16.mxu0 0
        %2268 = vmatpush2.bf16.msra.mxu0 0
        %2269 = vmatprep.subr.bf16.mxu0 0
        %2270 = vmatpush2.bf16.msra.mxu0 0
        %2271 = vmatprep.subr.bf16.mxu0 0
        %2272 = vmatpush2.bf16.msra.mxu0 0
        %2273 = vmatprep.subr.bf16.mxu0 0
        %2274 = vmatpush2.bf16.msra.mxu0 0
        %2275 = vmatprep.subr.bf16.mxu0 0
        %2276 = vmatpush2.bf16.msra.mxu0 0
        %2277 = vmatprep.subr.bf16.mxu0 0
        %2278 = vmatpush2.bf16.msra.mxu0 0
        %2279 = vmatprep.subr.bf16.mxu0 0
        %2280 = vmatpush2.bf16.msra.mxu0 0
        %2281 = vmatprep.subr.bf16.mxu0 0
        %2282 = vmatpush2.bf16.msra.mxu0 0
        %2283 = vmatprep.mubr.bf16.mxu0 0
        %2284 = vmatmul.mubr.bf16.gmra.mxu0 %v2246
        %v2285 = vpop.f32.mrf.mxu0
        %v2286 = vadd.f32 0.0, %v2285
        %v2287 = vpop.f32.mrf.mxu0
        %v2288 = vadd.f32 0.0, %v2287
        %v2289 = vpop.f32.mrf.mxu0
        %v2290 = vadd.f32 0.0, %v2289
        %v2291 = vpop.f32.mrf.mxu0
        %v2292 = vadd.f32 0.0, %v2291
        %2293 = vmatprep.mubr.bf16.mxu0 0
        %2294 = vmatmul.mubr.bf16.gmra.mxu0 %v2249
        %v2295 = vpop.f32.mrf.mxu0
        %v2296 = vadd.f32 0.0, %v2295
        %v2297 = vpop.f32.mrf.mxu0
        %v2298 = vadd.f32 0.0, %v2297
        %v2299 = vpop.f32.mrf.mxu0
        %v2300 = vadd.f32 0.0, %v2299
        %v2301 = vpop.f32.mrf.mxu0
        %v2302 = vadd.f32 0.0, %v2301
        %2303 = vdwg.mxu0
        %v2304 = vadd.f32 %v2198, %v2286
        %v2305 = vadd.f32 %v2199, %v2288
        %v2306 = vadd.f32 %v2200, %v2290
        %v2307 = vadd.f32 %v2201, %v2292
        %v2308 = vadd.f32 %v2202, %v2296
        %v2309 = vadd.f32 %v2203, %v2298
        %v2310 = vadd.f32 %v2204, %v2300
        %v2311 = vadd.f32 %v2205, %v2302
        %v2312 = vld [vmem:[#allocation2 + $0x4] sm:$0xff]
        %v2313 = vld [vmem:[#allocation2 + $0xc] sm:$0xf]
        %v2314 = vld [vmem:[#allocation2 + $0x14] sm:$0xff]
        %v2315 = vld [vmem:[#allocation2 + $0x1c] sm:$0xf]
        %v2316 = vld [vmem:[#allocation2 + $0x24] sm:$0xff]
        %v2317 = vld [vmem:[#allocation2 + $0x2c] sm:$0xf]
        %v2318 = vld [vmem:[#allocation2 + $0x34] sm:$0xff]
        %v2319 = vld [vmem:[#allocation2 + $0x3c] sm:$0xf]
        %s2320 = scalar_lea.vmem [#allocation3], 80
        %v2321 = vld [vmem:[%s2320] sm:$0xf]
        %v2322 = vld [vmem:[%s2320 + $0x4] sm:$0xf]
        %v2323 = vld [vmem:[%s2320 + $0x8] sm:$0xf]
        %v2324 = vld [vmem:[%s2320 + $0xc] sm:$0xf]
        %v2329 = vunpack.c.l.b16 %v2321
        %v2330 = vunpack.c.l.b16 %v2322
        %v2331 = vunpack.c.l.b16 %v2323
        %v2332 = vunpack.c.l.b16 %v2324
        %v2333 = vpack.c.b16 %v2330, %v2329
        %v2334 = vpack.c.b16 %v2332, %v2331
        %v2343 = vunpack.c.l.b16 %v2312
        %v2344 = vunpack.c.h.b16 %v2312
        %v2345 = vunpack.c.l.b16 %v2313
        %v2346 = vunpack.c.l.b16 %v2314
        %v2347 = vunpack.c.h.b16 %v2314
        %v2348 = vunpack.c.l.b16 %v2315
        %v2349 = vunpack.c.l.b16 %v2316
        %v2350 = vunpack.c.h.b16 %v2316
        %v2351 = vunpack.c.l.b16 %v2317
        %v2352 = vunpack.c.l.b16 %v2318
        %v2353 = vunpack.c.h.b16 %v2318
        %v2354 = vunpack.c.l.b16 %v2319
        %v2355 = vpack.c.b16 %v2346, %v2343
        %v2356 = vpack.c.b16 %v2347, %v2344
        %v2357 = vpack.c.b16 %v2348, %v2345
        %v2358 = vpack.c.b16 %v2352, %v2349
        %v2359 = vpack.c.b16 %v2353, %v2350
        %v2360 = vpack.c.b16 %v2354, %v2351
        %2361 = vrot.lane.b32.xlu0 %v2355, 127
        %v2362 = vpop.permute.xlu0 %2361
        %2363 = vrot.lane.b32.xlu0 %v2356, 127
        %v2364 = vpop.permute.xlu0 %2363
        %2365 = vrot.lane.b32.xlu0 %v2357, 127
        %v2366 = vpop.permute.xlu0 %2365
        %2367 = vrot.lane.b32.xlu0 %v2358, 127
        %v2368 = vpop.permute.xlu0 %2367
        %2369 = vrot.lane.b32.xlu0 %v2359, 127
        %v2370 = vpop.permute.xlu0 %2369
        %2371 = vrot.lane.b32.xlu0 %v2360, 127
        %v2372 = vpop.permute.xlu0 %2371
        %v2373 = vsel %vm1116, %v2362, %v2364
        %v2374 = vsel %vm1116, %v2364, %v2366
        %v2375 = vsel %vm1116, %v2368, %v2370
        %v2376 = vsel %vm1116, %v2370, %v2372
        %v2382 = vsel %vm1816, %v2333, 0
        %v2385 = vsel %vm1816, %v2334, 0
        %2387 = vmatprep.subr.bf16.mxu0 0
        %2388 = vmatpush1.bf16.msra.mxu0 0
        %2389 = vmatprep.subr.bf16.mxu0 0
        %2390 = vmatpush1.bf16.msra.mxu0 0
        %2391 = vmatprep.subr.bf16.mxu0 0
        %2392 = vmatpush1.bf16.msra.mxu0 0
        %2393 = vmatprep.subr.bf16.mxu0 0
        %2394 = vmatpush1.bf16.msra.mxu0 0
        %2395 = vmatprep.subr.bf16.mxu0 0
        %2396 = vmatpush1.bf16.msra.mxu0 0
        %2397 = vmatprep.subr.bf16.mxu0 0
        %2398 = vmatpush1.bf16.msra.mxu0 0
        %2399 = vmatprep.subr.bf16.mxu0 %v2376
        %2400 = vmatpush1.bf16.msra.mxu0 %v2375
        %2401 = vmatprep.subr.bf16.mxu0 %v2374
        %2402 = vmatpush1.bf16.msra.mxu0 %v2373
        %2403 = vmatprep.subr.bf16.mxu0 0
        %2404 = vmatpush2.bf16.msra.mxu0 0
        %2405 = vmatprep.subr.bf16.mxu0 0
        %2406 = vmatpush2.bf16.msra.mxu0 0
        %2407 = vmatprep.subr.bf16.mxu0 0
        %2408 = vmatpush2.bf16.msra.mxu0 0
        %2409 = vmatprep.subr.bf16.mxu0 0
        %2410 = vmatpush2.bf16.msra.mxu0 0
        %2411 = vmatprep.subr.bf16.mxu0 0
        %2412 = vmatpush2.bf16.msra.mxu0 0
        %2413 = vmatprep.subr.bf16.mxu0 0
        %2414 = vmatpush2.bf16.msra.mxu0 0
        %2415 = vmatprep.subr.bf16.mxu0 0
        %2416 = vmatpush2.bf16.msra.mxu0 0
        %2417 = vmatprep.subr.bf16.mxu0 0
        %2418 = vmatpush2.bf16.msra.mxu0 0
        %2419 = vmatprep.mubr.bf16.mxu0 0
        %2420 = vmatmul.mubr.bf16.gmra.mxu0 %v2382
        %v2421 = vpop.f32.mrf.mxu0
        %v2422 = vadd.f32 0.0, %v2421
        %v2423 = vpop.f32.mrf.mxu0
        %v2424 = vadd.f32 0.0, %v2423
        %v2425 = vpop.f32.mrf.mxu0
        %v2426 = vadd.f32 0.0, %v2425
        %v2427 = vpop.f32.mrf.mxu0
        %v2428 = vadd.f32 0.0, %v2427
        %2429 = vmatprep.mubr.bf16.mxu0 0
        %2430 = vmatmul.mubr.bf16.gmra.mxu0 %v2385
        %v2431 = vpop.f32.mrf.mxu0
        %v2432 = vadd.f32 0.0, %v2431
        %v2433 = vpop.f32.mrf.mxu0
        %v2434 = vadd.f32 0.0, %v2433
        %v2435 = vpop.f32.mrf.mxu0
        %v2436 = vadd.f32 0.0, %v2435
        %v2437 = vpop.f32.mrf.mxu0
        %v2438 = vadd.f32 0.0, %v2437
        %2439 = vdwg.mxu0
        %v2440 = vmul.f32 %v2422, %v773
        %v2441 = vmul.f32 %v2424, %v777
        %v2442 = vmul.f32 %v2426, %v773
        %v2443 = vmul.f32 %v2428, %v777
        %v2444 = vmul.f32 %v2432, %v773
        %v2445 = vmul.f32 %v2434, %v777
        %v2446 = vmul.f32 %v2436, %v773
        %v2447 = vmul.f32 %v2438, %v777
        %v2448 = vadd.f32 %v2304, %v2440
        %v2449 = vadd.f32 %v2305, %v2441
        %v2450 = vadd.f32 %v2306, %v2442
        %v2451 = vadd.f32 %v2307, %v2443
        %v2452 = vadd.f32 %v2308, %v2444
        %v2453 = vadd.f32 %v2309, %v2445
        %v2454 = vadd.f32 %v2310, %v2446
        %v2455 = vadd.f32 %v2311, %v2447
        %s2456 = scalar_lea.vmem [#allocation3], 96
        %v2457 = vld [vmem:[%s2456] sm:$0xf]
        %v2458 = vld [vmem:[%s2456 + $0x4] sm:$0xf]
        %v2459 = vld [vmem:[%s2456 + $0x8] sm:$0xf]
        %v2460 = vld [vmem:[%s2456 + $0xc] sm:$0xf]
        %v2465 = vunpack.c.l.b16 %v2457
        %v2466 = vunpack.c.l.b16 %v2458
        %v2467 = vunpack.c.l.b16 %v2459
        %v2468 = vunpack.c.l.b16 %v2460
        %v2469 = vpack.c.b16 %v2466, %v2465
        %v2470 = vpack.c.b16 %v2468, %v2467
        %2471 = vrot.lane.b32.xlu0 %v2355, 113
        %v2472 = vpop.permute.xlu0 %2471
        %2473 = vrot.lane.b32.xlu0 %v2356, 113
        %v2474 = vpop.permute.xlu0 %2473
        %2475 = vrot.lane.b32.xlu0 %v2357, 113
        %v2476 = vpop.permute.xlu0 %2475
        %2477 = vrot.lane.b32.xlu0 %v2358, 113
        %v2478 = vpop.permute.xlu0 %2477
        %2479 = vrot.lane.b32.xlu0 %v2359, 113
        %v2480 = vpop.permute.xlu0 %2479
        %2481 = vrot.lane.b32.xlu0 %v2360, 113
        %v2482 = vpop.permute.xlu0 %2481
        %v2483 = vsel %vm1241, %v2472, %v2474
        %v2484 = vsel %vm1241, %v2474, %v2476
        %v2485 = vsel %vm1241, %v2478, %v2480
        %v2486 = vsel %vm1241, %v2480, %v2482
        %v2492 = vsel %vm1816, %v2469, 0
        %v2495 = vsel %vm1816, %v2470, 0
        %2497 = vmatprep.subr.bf16.mxu0 0
        %2498 = vmatpush1.bf16.msra.mxu0 0
        %2499 = vmatprep.subr.bf16.mxu0 0
        %2500 = vmatpush1.bf16.msra.mxu0 0
        %2501 = vmatprep.subr.bf16.mxu0 0
        %2502 = vmatpush1.bf16.msra.mxu0 0
        %2503 = vmatprep.subr.bf16.mxu0 0
        %2504 = vmatpush1.bf16.msra.mxu0 0
        %2505 = vmatprep.subr.bf16.mxu0 0
        %2506 = vmatpush1.bf16.msra.mxu0 0
        %2507 = vmatprep.subr.bf16.mxu0 0
        %2508 = vmatpush1.bf16.msra.mxu0 0
        %2509 = vmatprep.subr.bf16.mxu0 %v2486
        %2510 = vmatpush1.bf16.msra.mxu0 %v2485
        %2511 = vmatprep.subr.bf16.mxu0 %v2484
        %2512 = vmatpush1.bf16.msra.mxu0 %v2483
        %2513 = vmatprep.subr.bf16.mxu0 0
        %2514 = vmatpush2.bf16.msra.mxu0 0
        %2515 = vmatprep.subr.bf16.mxu0 0
        %2516 = vmatpush2.bf16.msra.mxu0 0
        %2517 = vmatprep.subr.bf16.mxu0 0
        %2518 = vmatpush2.bf16.msra.mxu0 0
        %2519 = vmatprep.subr.bf16.mxu0 0
        %2520 = vmatpush2.bf16.msra.mxu0 0
        %2521 = vmatprep.subr.bf16.mxu0 0
        %2522 = vmatpush2.bf16.msra.mxu0 0
        %2523 = vmatprep.subr.bf16.mxu0 0
        %2524 = vmatpush2.bf16.msra.mxu0 0
        %2525 = vmatprep.subr.bf16.mxu0 0
        %2526 = vmatpush2.bf16.msra.mxu0 0
        %2527 = vmatprep.subr.bf16.mxu0 0
        %2528 = vmatpush2.bf16.msra.mxu0 0
        %2529 = vmatprep.mubr.bf16.mxu0 0
        %2530 = vmatmul.mubr.bf16.gmra.mxu0 %v2492
        %v2531 = vpop.f32.mrf.mxu0
        %v2532 = vadd.f32 0.0, %v2531
        %v2533 = vpop.f32.mrf.mxu0
        %v2534 = vadd.f32 0.0, %v2533
        %v2535 = vpop.f32.mrf.mxu0
        %v2536 = vadd.f32 0.0, %v2535
        %v2537 = vpop.f32.mrf.mxu0
        %v2538 = vadd.f32 0.0, %v2537
        %2539 = vmatprep.mubr.bf16.mxu0 0
        %2540 = vmatmul.mubr.bf16.gmra.mxu0 %v2495
        %v2541 = vpop.f32.mrf.mxu0
        %v2542 = vadd.f32 0.0, %v2541
        %v2543 = vpop.f32.mrf.mxu0
        %v2544 = vadd.f32 0.0, %v2543
        %v2545 = vpop.f32.mrf.mxu0
        %v2546 = vadd.f32 0.0, %v2545
        %v2547 = vpop.f32.mrf.mxu0
        %v2548 = vadd.f32 0.0, %v2547
        %2549 = vdwg.mxu0
        %v2550 = vmul.f32 %v2532, %v528
        %v2551 = vmul.f32 %v2534, %v532
        %v2552 = vmul.f32 %v2536, %v528
        %v2553 = vmul.f32 %v2538, %v532
        %v2554 = vmul.f32 %v2542, %v528
        %v2555 = vmul.f32 %v2544, %v532
        %v2556 = vmul.f32 %v2546, %v528
        %v2557 = vmul.f32 %v2548, %v532
        %v2558 = vadd.f32 %v2448, %v2550
        %v2559 = vadd.f32 %v2449, %v2551
        %v2560 = vadd.f32 %v2450, %v2552
        %v2561 = vadd.f32 %v2451, %v2553
        %v2562 = vadd.f32 %v2452, %v2554
        %v2563 = vadd.f32 %v2453, %v2555
        %v2564 = vadd.f32 %v2454, %v2556
        %v2565 = vadd.f32 %v2455, %v2557
        %s2566 = scalar_lea.vmem [#allocation3], 112
        %v2567 = vld [vmem:[%s2566] sm:$0xf]
        %v2568 = vld [vmem:[%s2566 + $0x4] sm:$0xf]
        %v2569 = vld [vmem:[%s2566 + $0x8] sm:$0xf]
        %v2570 = vld [vmem:[%s2566 + $0xc] sm:$0xf]
        %v2575 = vunpack.c.l.b16 %v2567
        %v2576 = vunpack.c.l.b16 %v2568
        %v2577 = vunpack.c.l.b16 %v2569
        %v2578 = vunpack.c.l.b16 %v2570
        %v2579 = vpack.c.b16 %v2576, %v2575
        %v2580 = vpack.c.b16 %v2578, %v2577
        %2581 = vrot.lane.b32.xlu0 %v2355, 112
        %v2582 = vpop.permute.xlu0 %2581
        %2583 = vrot.lane.b32.xlu0 %v2356, 112
        %v2584 = vpop.permute.xlu0 %2583
        %2585 = vrot.lane.b32.xlu0 %v2357, 112
        %v2586 = vpop.permute.xlu0 %2585
        %2587 = vrot.lane.b32.xlu0 %v2358, 112
        %v2588 = vpop.permute.xlu0 %2587
        %2589 = vrot.lane.b32.xlu0 %v2359, 112
        %v2590 = vpop.permute.xlu0 %2589
        %2591 = vrot.lane.b32.xlu0 %v2360, 112
        %v2592 = vpop.permute.xlu0 %2591
        %v2593 = vsel %vm1366, %v2582, %v2584
        %v2594 = vsel %vm1366, %v2584, %v2586
        %v2595 = vsel %vm1366, %v2588, %v2590
        %v2596 = vsel %vm1366, %v2590, %v2592
        %v2602 = vsel %vm1816, %v2579, 0
        %v2605 = vsel %vm1816, %v2580, 0
        %2607 = vmatprep.subr.bf16.mxu0 0
        %2608 = vmatpush1.bf16.msra.mxu0 0
        %2609 = vmatprep.subr.bf16.mxu0 0
        %2610 = vmatpush1.bf16.msra.mxu0 0
        %2611 = vmatprep.subr.bf16.mxu0 0
        %2612 = vmatpush1.bf16.msra.mxu0 0
        %2613 = vmatprep.subr.bf16.mxu0 0
        %2614 = vmatpush1.bf16.msra.mxu0 0
        %2615 = vmatprep.subr.bf16.mxu0 0
        %2616 = vmatpush1.bf16.msra.mxu0 0
        %2617 = vmatprep.subr.bf16.mxu0 0
        %2618 = vmatpush1.bf16.msra.mxu0 0
        %2619 = vmatprep.subr.bf16.mxu0 %v2596
        %2620 = vmatpush1.bf16.msra.mxu0 %v2595
        %2621 = vmatprep.subr.bf16.mxu0 %v2594
        %2622 = vmatpush1.bf16.msra.mxu0 %v2593
        %2623 = vmatprep.subr.bf16.mxu0 0
        %2624 = vmatpush2.bf16.msra.mxu0 0
        %2625 = vmatprep.subr.bf16.mxu0 0
        %2626 = vmatpush2.bf16.msra.mxu0 0
        %2627 = vmatprep.subr.bf16.mxu0 0
        %2628 = vmatpush2.bf16.msra.mxu0 0
        %2629 = vmatprep.subr.bf16.mxu0 0
        %2630 = vmatpush2.bf16.msra.mxu0 0
        %2631 = vmatprep.subr.bf16.mxu0 0
        %2632 = vmatpush2.bf16.msra.mxu0 0
        %2633 = vmatprep.subr.bf16.mxu0 0
        %2634 = vmatpush2.bf16.msra.mxu0 0
        %2635 = vmatprep.subr.bf16.mxu0 0
        %2636 = vmatpush2.bf16.msra.mxu0 0
        %2637 = vmatprep.subr.bf16.mxu0 0
        %2638 = vmatpush2.bf16.msra.mxu0 0
        %2639 = vmatprep.mubr.bf16.mxu0 0
        %2640 = vmatmul.mubr.bf16.gmra.mxu0 %v2602
        %v2641 = vpop.f32.mrf.mxu0
        %v2642 = vadd.f32 0.0, %v2641
        %v2643 = vpop.f32.mrf.mxu0
        %v2644 = vadd.f32 0.0, %v2643
        %v2645 = vpop.f32.mrf.mxu0
        %v2646 = vadd.f32 0.0, %v2645
        %v2647 = vpop.f32.mrf.mxu0
        %v2648 = vadd.f32 0.0, %v2647
        %2649 = vmatprep.mubr.bf16.mxu0 0
        %2650 = vmatmul.mubr.bf16.gmra.mxu0 %v2605
        %v2651 = vpop.f32.mrf.mxu0
        %v2652 = vadd.f32 0.0, %v2651
        %v2653 = vpop.f32.mrf.mxu0
        %v2654 = vadd.f32 0.0, %v2653
        %v2655 = vpop.f32.mrf.mxu0
        %v2656 = vadd.f32 0.0, %v2655
        %v2657 = vpop.f32.mrf.mxu0
        %v2658 = vadd.f32 0.0, %v2657
        %2659 = vdwg.mxu0
        %v2660 = vadd.f32 %v2558, %v2642
        %v2661 = vadd.f32 %v2559, %v2644
        %v2662 = vadd.f32 %v2560, %v2646
        %v2663 = vadd.f32 %v2561, %v2648
        %v2664 = vadd.f32 %v2562, %v2652
        %v2665 = vadd.f32 %v2563, %v2654
        %v2666 = vadd.f32 %v2564, %v2656
        %v2667 = vadd.f32 %v2565, %v2658
        %s2668 = scalar_lea.vmem [#allocation3], 128
        %v2669 = vld [vmem:[%s2668] sm:$0xf]
        %v2670 = vld [vmem:[%s2668 + $0x4] sm:$0xf]
        %v2671 = vld [vmem:[%s2668 + $0x8] sm:$0xf]
        %v2672 = vld [vmem:[%s2668 + $0xc] sm:$0xf]
        %v2677 = vunpack.c.l.b16 %v2669
        %v2678 = vunpack.c.l.b16 %v2670
        %v2679 = vunpack.c.l.b16 %v2671
        %v2680 = vunpack.c.l.b16 %v2672
        %v2681 = vpack.c.b16 %v2678, %v2677
        %v2682 = vpack.c.b16 %v2680, %v2679
        %2683 = vrot.lane.b32.xlu0 %v2355, 111
        %v2684 = vpop.permute.xlu0 %2683
        %2685 = vrot.lane.b32.xlu0 %v2356, 111
        %v2686 = vpop.permute.xlu0 %2685
        %2687 = vrot.lane.b32.xlu0 %v2357, 111
        %v2688 = vpop.permute.xlu0 %2687
        %2689 = vrot.lane.b32.xlu0 %v2358, 111
        %v2690 = vpop.permute.xlu0 %2689
        %2691 = vrot.lane.b32.xlu0 %v2359, 111
        %v2692 = vpop.permute.xlu0 %2691
        %2693 = vrot.lane.b32.xlu0 %v2360, 111
        %v2694 = vpop.permute.xlu0 %2693
        %v2695 = vsel %vm1483, %v2684, %v2686
        %v2696 = vsel %vm1483, %v2686, %v2688
        %v2697 = vsel %vm1483, %v2690, %v2692
        %v2698 = vsel %vm1483, %v2692, %v2694
        %v2704 = vsel %vm1816, %v2681, 0
        %v2707 = vsel %vm1816, %v2682, 0
        %2709 = vmatprep.subr.bf16.mxu0 0
        %2710 = vmatpush1.bf16.msra.mxu0 0
        %2711 = vmatprep.subr.bf16.mxu0 0
        %2712 = vmatpush1.bf16.msra.mxu0 0
        %2713 = vmatprep.subr.bf16.mxu0 0
        %2714 = vmatpush1.bf16.msra.mxu0 0
        %2715 = vmatprep.subr.bf16.mxu0 0
        %2716 = vmatpush1.bf16.msra.mxu0 0
        %2717 = vmatprep.subr.bf16.mxu0 0
        %2718 = vmatpush1.bf16.msra.mxu0 0
        %2719 = vmatprep.subr.bf16.mxu0 0
        %2720 = vmatpush1.bf16.msra.mxu0 0
        %2721 = vmatprep.subr.bf16.mxu0 %v2698
        %2722 = vmatpush1.bf16.msra.mxu0 %v2697
        %2723 = vmatprep.subr.bf16.mxu0 %v2696
        %2724 = vmatpush1.bf16.msra.mxu0 %v2695
        %2725 = vmatprep.subr.bf16.mxu0 0
        %2726 = vmatpush2.bf16.msra.mxu0 0
        %2727 = vmatprep.subr.bf16.mxu0 0
        %2728 = vmatpush2.bf16.msra.mxu0 0
        %2729 = vmatprep.subr.bf16.mxu0 0
        %2730 = vmatpush2.bf16.msra.mxu0 0
        %2731 = vmatprep.subr.bf16.mxu0 0
        %2732 = vmatpush2.bf16.msra.mxu0 0
        %2733 = vmatprep.subr.bf16.mxu0 0
        %2734 = vmatpush2.bf16.msra.mxu0 0
        %2735 = vmatprep.subr.bf16.mxu0 0
        %2736 = vmatpush2.bf16.msra.mxu0 0
        %2737 = vmatprep.subr.bf16.mxu0 0
        %2738 = vmatpush2.bf16.msra.mxu0 0
        %2739 = vmatprep.subr.bf16.mxu0 0
        %2740 = vmatpush2.bf16.msra.mxu0 0
        %2741 = vmatprep.mubr.bf16.mxu0 0
        %2742 = vmatmul.mubr.bf16.gmra.mxu0 %v2704
        %v2743 = vpop.f32.mrf.mxu0
        %v2744 = vadd.f32 0.0, %v2743
        %v2745 = vpop.f32.mrf.mxu0
        %v2746 = vadd.f32 0.0, %v2745
        %v2747 = vpop.f32.mrf.mxu0
        %v2748 = vadd.f32 0.0, %v2747
        %v2749 = vpop.f32.mrf.mxu0
        %v2750 = vadd.f32 0.0, %v2749
        %2751 = vmatprep.mubr.bf16.mxu0 0
        %2752 = vmatmul.mubr.bf16.gmra.mxu0 %v2707
        %v2753 = vpop.f32.mrf.mxu0
        %v2754 = vadd.f32 0.0, %v2753
        %v2755 = vpop.f32.mrf.mxu0
        %v2756 = vadd.f32 0.0, %v2755
        %v2757 = vpop.f32.mrf.mxu0
        %v2758 = vadd.f32 0.0, %v2757
        %v2759 = vpop.f32.mrf.mxu0
        %v2760 = vadd.f32 0.0, %v2759
        %2761 = vdwg.mxu0
        %v2762 = vmul.f32 %v2744, %v773
        %v2763 = vmul.f32 %v2746, %v777
        %v2764 = vmul.f32 %v2748, %v773
        %v2765 = vmul.f32 %v2750, %v777
        %v2766 = vmul.f32 %v2754, %v773
        %v2767 = vmul.f32 %v2756, %v777
        %v2768 = vmul.f32 %v2758, %v773
        %v2769 = vmul.f32 %v2760, %v777
        %v2770 = vadd.f32 %v2660, %v2762
        %v2771 = vadd.f32 %v2661, %v2763
        %v2772 = vadd.f32 %v2662, %v2764
        %v2773 = vadd.f32 %v2663, %v2765
        %v2774 = vadd.f32 %v2664, %v2766
        %v2775 = vadd.f32 %v2665, %v2767
        %v2776 = vadd.f32 %v2666, %v2768
        %v2777 = vadd.f32 %v2667, %v2769
        %s2778 = scalar_lea.vmem %s4, 32
        %v2779 = vld [vmem:[%s2778] sm:$0xff]
        %v2780 = vld [vmem:[%s2778 + $0x8] sm:$0xff]
        %v2781 = vld [vmem:[%s2778 + $0x10] sm:$0xff]
        %v2782 = vld [vmem:[%s2778 + $0x18] sm:$0xff]
        %s2783 = scalar_lea.vmem %s5, 32
        %v2784 = vld [vmem:[%s2783] sm:$0xff]
        %v2785 = vld [vmem:[%s2783 + $0x8] sm:$0xff]
        %v2786 = vld [vmem:[%s2783 + $0x10] sm:$0xff]
        %v2787 = vld [vmem:[%s2783 + $0x18] sm:$0xff]
        %v2788 = vadd.f32 %v2770, %v2771
        %2789 = vadd.xlane.f32.xlu0 %v2788
        %v2790 = vpop.xlane.xlu0 %2789
        %v2791 = vadd.f32 %v2772, %v2773
        %2792 = vadd.xlane.f32.xlu0 %v2791
        %v2793 = vpop.xlane.xlu0 %2792
        %v2794 = vadd.f32 %v2774, %v2775
        %2795 = vadd.xlane.f32.xlu0 %v2794
        %v2796 = vpop.xlane.xlu0 %2795
        %v2797 = vadd.f32 %v2776, %v2777
        %2798 = vadd.xlane.f32.xlu0 %v2797
        %v2799 = vpop.xlane.xlu0 %2798
        %v2800 = vmul.f32 %v2790, %v1595
        %v2801 = vmul.f32 %v2793, %v1595
        %v2802 = vmul.f32 %v2796, %v1595
        %v2803 = vmul.f32 %v2799, %v1595
        %v2804 = vmul.f32 %v2770, %v2770
        %v2805 = vmul.f32 %v2771, %v2771
        %v2806 = vmul.f32 %v2772, %v2772
        %v2807 = vmul.f32 %v2773, %v2773
        %v2808 = vmul.f32 %v2774, %v2774
        %v2809 = vmul.f32 %v2775, %v2775
        %v2810 = vmul.f32 %v2776, %v2776
        %v2811 = vmul.f32 %v2777, %v2777
        %v2812 = vadd.f32 %v2804, %v2805
        %2813 = vadd.xlane.f32.xlu0 %v2812
        %v2814 = vpop.xlane.xlu0 %2813
        %v2815 = vadd.f32 %v2806, %v2807
        %2816 = vadd.xlane.f32.xlu0 %v2815
        %v2817 = vpop.xlane.xlu0 %2816
        %v2818 = vadd.f32 %v2808, %v2809
        %2819 = vadd.xlane.f32.xlu0 %v2818
        %v2820 = vpop.xlane.xlu0 %2819
        %v2821 = vadd.f32 %v2810, %v2811
        %2822 = vadd.xlane.f32.xlu0 %v2821
        %v2823 = vpop.xlane.xlu0 %2822
        %v2824 = vmul.f32 %v2814, %v1595
        %v2825 = vmul.f32 %v2817, %v1595
        %v2826 = vmul.f32 %v2820, %v1595
        %v2827 = vmul.f32 %v2823, %v1595
        %v2828 = vmul.f32 %v2800, %v2800
        %v2829 = vmul.f32 %v2801, %v2801
        %v2830 = vmul.f32 %v2802, %v2802
        %v2831 = vmul.f32 %v2803, %v2803
        %v2832 = vsub.f32 %v2824, %v2828
        %v2833 = vsub.f32 %v2825, %v2829
        %v2834 = vsub.f32 %v2826, %v2830
        %v2835 = vsub.f32 %v2827, %v2831
        %v2836 = vmax.f32 %v2832, 0.0
        %v2837 = vmax.f32 %v2833, 0.0
        %v2838 = vmax.f32 %v2834, 0.0
        %v2839 = vmax.f32 %v2835, 0.0
        %v2840 = vadd.f32 %v2836, 1e-05
        %v2841 = vadd.f32 %v2837, 1e-05
        %v2842 = vadd.f32 %v2838, 1e-05
        %v2843 = vadd.f32 %v2839, 1e-05
        %v2844 = vrsqrt.pop %v2840
        %v2845 = vrsqrt.pop %v2841
        %v2846 = vrsqrt.pop %v2842
        %v2847 = vrsqrt.pop %v2843
        %v2848 = vmul.f32 %v2844, %v2779
        %v2849 = vmul.f32 %v2845, %v2780
        %v2850 = vmul.f32 %v2846, %v2781
        %v2851 = vmul.f32 %v2847, %v2782
        %v2852 = vmul.f32 %v2800, %v2848
        %v2853 = vmul.f32 %v2801, %v2849
        %v2854 = vmul.f32 %v2802, %v2850
        %v2855 = vmul.f32 %v2803, %v2851
        %v2856 = vsub.f32 %v2784, %v2852
        %v2857 = vsub.f32 %v2785, %v2853
        %v2858 = vsub.f32 %v2786, %v2854
        %v2859 = vsub.f32 %v2787, %v2855
        %2861 = vset.pattern.permute.xlu0 0
        %2862 = vperm.xlu0 %2861, %v2848
        %v2863 = vpop.permute.xlu0 %2862
        %2866 = vset.pattern.permute.xlu0 0
        %2867 = vperm.xlu0 %2866, %v2849
        %v2868 = vpop.permute.xlu0 %2867
        %2871 = vset.pattern.permute.xlu0 0
        %2872 = vperm.xlu0 %2871, %v2850
        %v2873 = vpop.permute.xlu0 %2872
        %2876 = vset.pattern.permute.xlu0 0
        %2877 = vperm.xlu0 %2876, %v2851
        %v2878 = vpop.permute.xlu0 %2877
        %v2880 = vmul.f32 %v2770, %v2863
        %v2881 = vmul.f32 %v2771, %v2863
        %v2882 = vmul.f32 %v2772, %v2868
        %v2883 = vmul.f32 %v2773, %v2868
        %v2884 = vmul.f32 %v2774, %v2873
        %v2885 = vmul.f32 %v2775, %v2873
        %v2886 = vmul.f32 %v2776, %v2878
        %v2887 = vmul.f32 %v2777, %v2878
        %2889 = vset.pattern.permute.xlu0 0
        %2890 = vperm.xlu0 %2889, %v2856
        %v2891 = vpop.permute.xlu0 %2890
        %2894 = vset.pattern.permute.xlu0 0
        %2895 = vperm.xlu0 %2894, %v2857
        %v2896 = vpop.permute.xlu0 %2895
        %2899 = vset.pattern.permute.xlu0 0
        %2900 = vperm.xlu0 %2899, %v2858
        %v2901 = vpop.permute.xlu0 %2900
        %2904 = vset.pattern.permute.xlu0 0
        %2905 = vperm.xlu0 %2904, %v2859
        %v2906 = vpop.permute.xlu0 %2905
        %v2908 = vadd.f32 %v2880, %v2891
        %v2909 = vadd.f32 %v2881, %v2891
        %v2910 = vadd.f32 %v2882, %v2896
        %v2911 = vadd.f32 %v2883, %v2896
        %v2912 = vadd.f32 %v2884, %v2901
        %v2913 = vadd.f32 %v2885, %v2901
        %v2914 = vadd.f32 %v2886, %v2906
        %v2915 = vadd.f32 %v2887, %v2906
        %v2916 = vmax.f32 %v2908, 0.0
        %v2917 = vmax.f32 %v2909, 0.0
        %v2918 = vmax.f32 %v2910, 0.0
        %v2919 = vmax.f32 %v2911, 0.0
        %v2920 = vmax.f32 %v2912, 0.0
        %v2921 = vmax.f32 %v2913, 0.0
        %v2922 = vmax.f32 %v2914, 0.0
        %v2923 = vmax.f32 %v2915, 0.0
        %v2924 = vpack.c.bf16 %v2918, %v2916
        %v2925 = vpack.c.bf16 %v2919, %v2917
        %v2926 = vpack.c.bf16 %v2922, %v2920
        %v2927 = vpack.c.bf16 %v2923, %v2921
        %v2932 = vunpack.c.l.b16 %v2924
        %v2933 = vunpack.c.l.b16 %v2925
        %v2934 = vunpack.c.h.b16 %v2924
        %v2935 = vunpack.c.h.b16 %v2925
        %v2936 = vunpack.c.l.b16 %v2926
        %v2937 = vunpack.c.l.b16 %v2927
        %v2938 = vunpack.c.h.b16 %v2926
        %v2939 = vunpack.c.h.b16 %v2927
        %v2940 = vpack.c.b16 %v2933, %v2932
        %v2941 = vpack.c.b16 %v2935, %v2934
        %v2942 = vpack.c.b16 %v2937, %v2936
        %v2943 = vpack.c.b16 %v2939, %v2938
        %2948 = vst [vmem:[#allocation2 + $0x4] sm:$0xff] %v2940
        %2949 = vst [vmem:[#allocation2 + $0x14] sm:$0xff] %v2941
        %2950 = vst [vmem:[#allocation2 + $0x24] sm:$0xff] %v2942
        %2951 = vst [vmem:[#allocation2 + $0x34] sm:$0xff] %v2943
        %v2952 = vld [vmem:[#allocation2] sm:$0xff]
        %v2953 = vld [vmem:[#allocation2 + $0x8] sm:$0xf]
        %v2954 = vld [vmem:[#allocation2 + $0x10] sm:$0xff]
        %v2955 = vld [vmem:[#allocation2 + $0x18] sm:$0xf]
        %v2956 = vld [vmem:[#allocation2 + $0x20] sm:$0xff]
        %v2957 = vld [vmem:[#allocation2 + $0x28] sm:$0xf]
        %v2958 = vld [vmem:[#allocation2 + $0x30] sm:$0xff]
        %v2959 = vld [vmem:[#allocation2 + $0x38] sm:$0xf]
        %s2960 = scalar_lea.vmem [#allocation3], 144
        %v2961 = vld [vmem:[%s2960] sm:$0xf]
        %v2962 = vld [vmem:[%s2960 + $0x4] sm:$0xf]
        %v2963 = vld [vmem:[%s2960 + $0x8] sm:$0xf]
        %v2964 = vld [vmem:[%s2960 + $0xc] sm:$0xf]
        %v2969 = vunpack.c.l.b16 %v2961
        %v2970 = vunpack.c.l.b16 %v2962
        %v2971 = vunpack.c.l.b16 %v2963
        %v2972 = vunpack.c.l.b16 %v2964
        %v2973 = vpack.c.b16 %v2970, %v2969
        %v2974 = vpack.c.b16 %v2972, %v2971
        %v2983 = vunpack.c.l.b16 %v2952
        %v2984 = vunpack.c.h.b16 %v2952
        %v2985 = vunpack.c.l.b16 %v2953
        %v2986 = vunpack.c.l.b16 %v2954
        %v2987 = vunpack.c.h.b16 %v2954
        %v2988 = vunpack.c.l.b16 %v2955
        %v2989 = vunpack.c.l.b16 %v2956
        %v2990 = vunpack.c.h.b16 %v2956
        %v2991 = vunpack.c.l.b16 %v2957
        %v2992 = vunpack.c.l.b16 %v2958
        %v2993 = vunpack.c.h.b16 %v2958
        %v2994 = vunpack.c.l.b16 %v2959
        %v2995 = vpack.c.b16 %v2986, %v2983
        %v2996 = vpack.c.b16 %v2987, %v2984
        %v2997 = vpack.c.b16 %v2988, %v2985
        %v2998 = vpack.c.b16 %v2992, %v2989
        %v2999 = vpack.c.b16 %v2993, %v2990
        %v3000 = vpack.c.b16 %v2994, %v2991
        %3001 = vrot.lane.b32.xlu0 %v2995, 17
        %v3002 = vpop.permute.xlu0 %3001
        %3003 = vrot.lane.b32.xlu0 %v2996, 17
        %v3004 = vpop.permute.xlu0 %3003
        %3005 = vrot.lane.b32.xlu0 %v2997, 17
        %v3006 = vpop.permute.xlu0 %3005
        %3007 = vrot.lane.b32.xlu0 %v2998, 17
        %v3008 = vpop.permute.xlu0 %3007
        %3009 = vrot.lane.b32.xlu0 %v2999, 17
        %v3010 = vpop.permute.xlu0 %3009
        %3011 = vrot.lane.b32.xlu0 %v3000, 17
        %v3012 = vpop.permute.xlu0 %3011
        %v3013 = vsel %vm446, %v3002, %v3004
        %v3014 = vsel %vm446, %v3004, %v3006
        %v3015 = vsel %vm446, %v3008, %v3010
        %v3016 = vsel %vm446, %v3010, %v3012
        %v3022 = vsel %vm1816, %v2973, 0
        %v3025 = vsel %vm1816, %v2974, 0
        %3027 = vmatprep.subr.bf16.mxu0 0
        %3028 = vmatpush1.bf16.msra.mxu0 0
        %3029 = vmatprep.subr.bf16.mxu0 0
        %3030 = vmatpush1.bf16.msra.mxu0 0
        %3031 = vmatprep.subr.bf16.mxu0 0
        %3032 = vmatpush1.bf16.msra.mxu0 0
        %3033 = vmatprep.subr.bf16.mxu0 0
        %3034 = vmatpush1.bf16.msra.mxu0 0
        %3035 = vmatprep.subr.bf16.mxu0 0
        %3036 = vmatpush1.bf16.msra.mxu0 0
        %3037 = vmatprep.subr.bf16.mxu0 0
        %3038 = vmatpush1.bf16.msra.mxu0 0
        %3039 = vmatprep.subr.bf16.mxu0 %v3016
        %3040 = vmatpush1.bf16.msra.mxu0 %v3015
        %3041 = vmatprep.subr.bf16.mxu0 %v3014
        %3042 = vmatpush1.bf16.msra.mxu0 %v3013
        %3043 = vmatprep.subr.bf16.mxu0 0
        %3044 = vmatpush2.bf16.msra.mxu0 0
        %3045 = vmatprep.subr.bf16.mxu0 0
        %3046 = vmatpush2.bf16.msra.mxu0 0
        %3047 = vmatprep.subr.bf16.mxu0 0
        %3048 = vmatpush2.bf16.msra.mxu0 0
        %3049 = vmatprep.subr.bf16.mxu0 0
        %3050 = vmatpush2.bf16.msra.mxu0 0
        %3051 = vmatprep.subr.bf16.mxu0 0
        %3052 = vmatpush2.bf16.msra.mxu0 0
        %3053 = vmatprep.subr.bf16.mxu0 0
        %3054 = vmatpush2.bf16.msra.mxu0 0
        %3055 = vmatprep.subr.bf16.mxu0 0
        %3056 = vmatpush2.bf16.msra.mxu0 0
        %3057 = vmatprep.subr.bf16.mxu0 0
        %3058 = vmatpush2.bf16.msra.mxu0 0
        %3059 = vmatprep.mubr.bf16.mxu0 0
        %3060 = vmatmul.mubr.bf16.gmra.mxu0 %v3022
        %v3061 = vpop.f32.mrf.mxu0
        %v3062 = vadd.f32 0.0, %v3061
        %v3063 = vpop.f32.mrf.mxu0
        %v3064 = vadd.f32 0.0, %v3063
        %v3065 = vpop.f32.mrf.mxu0
        %v3066 = vadd.f32 0.0, %v3065
        %v3067 = vpop.f32.mrf.mxu0
        %v3068 = vadd.f32 0.0, %v3067
        %3069 = vmatprep.mubr.bf16.mxu0 0
        %3070 = vmatmul.mubr.bf16.gmra.mxu0 %v3025
        %v3071 = vpop.f32.mrf.mxu0
        %v3072 = vadd.f32 0.0, %v3071
        %v3073 = vpop.f32.mrf.mxu0
        %v3074 = vadd.f32 0.0, %v3073
        %v3075 = vpop.f32.mrf.mxu0
        %v3076 = vadd.f32 0.0, %v3075
        %v3077 = vpop.f32.mrf.mxu0
        %v3078 = vadd.f32 0.0, %v3077
        %3079 = vdwg.mxu0
        %v3080 = vmul.f32 %v3062, %v528
        %v3081 = vmul.f32 %v3064, %v532
        %v3082 = vmul.f32 %v3066, %v528
        %v3083 = vmul.f32 %v3068, %v532
        %v3084 = vmul.f32 %v3072, %v528
        %v3085 = vmul.f32 %v3074, %v532
        %v3086 = vmul.f32 %v3076, %v528
        %v3087 = vmul.f32 %v3078, %v532
        %s3088 = scalar_lea.vmem [#allocation3], 160
        %v3089 = vld [vmem:[%s3088] sm:$0xf]
        %v3090 = vld [vmem:[%s3088 + $0x4] sm:$0xf]
        %v3091 = vld [vmem:[%s3088 + $0x8] sm:$0xf]
        %v3092 = vld [vmem:[%s3088 + $0xc] sm:$0xf]
        %v3097 = vunpack.c.l.b16 %v3089
        %v3098 = vunpack.c.l.b16 %v3090
        %v3099 = vunpack.c.l.b16 %v3091
        %v3100 = vunpack.c.l.b16 %v3092
        %v3101 = vpack.c.b16 %v3098, %v3097
        %v3102 = vpack.c.b16 %v3100, %v3099
        %3103 = vrot.lane.b32.xlu0 %v2995, 16
        %v3104 = vpop.permute.xlu0 %3103
        %3105 = vrot.lane.b32.xlu0 %v2996, 16
        %v3106 = vpop.permute.xlu0 %3105
        %3107 = vrot.lane.b32.xlu0 %v2997, 16
        %v3108 = vpop.permute.xlu0 %3107
        %3109 = vrot.lane.b32.xlu0 %v2998, 16
        %v3110 = vpop.permute.xlu0 %3109
        %3111 = vrot.lane.b32.xlu0 %v2999, 16
        %v3112 = vpop.permute.xlu0 %3111
        %3113 = vrot.lane.b32.xlu0 %v3000, 16
        %v3114 = vpop.permute.xlu0 %3113
        %v3115 = vsel %vm576, %v3104, %v3106
        %v3116 = vsel %vm576, %v3106, %v3108
        %v3117 = vsel %vm576, %v3110, %v3112
        %v3118 = vsel %vm576, %v3112, %v3114
        %v3124 = vsel %vm1816, %v3101, 0
        %v3127 = vsel %vm1816, %v3102, 0
        %3129 = vmatprep.subr.bf16.mxu0 0
        %3130 = vmatpush1.bf16.msra.mxu0 0
        %3131 = vmatprep.subr.bf16.mxu0 0
        %3132 = vmatpush1.bf16.msra.mxu0 0
        %3133 = vmatprep.subr.bf16.mxu0 0
        %3134 = vmatpush1.bf16.msra.mxu0 0
        %3135 = vmatprep.subr.bf16.mxu0 0
        %3136 = vmatpush1.bf16.msra.mxu0 0
        %3137 = vmatprep.subr.bf16.mxu0 0
        %3138 = vmatpush1.bf16.msra.mxu0 0
        %3139 = vmatprep.subr.bf16.mxu0 0
        %3140 = vmatpush1.bf16.msra.mxu0 0
        %3141 = vmatprep.subr.bf16.mxu0 %v3118
        %3142 = vmatpush1.bf16.msra.mxu0 %v3117
        %3143 = vmatprep.subr.bf16.mxu0 %v3116
        %3144 = vmatpush1.bf16.msra.mxu0 %v3115
        %3145 = vmatprep.subr.bf16.mxu0 0
        %3146 = vmatpush2.bf16.msra.mxu0 0
        %3147 = vmatprep.subr.bf16.mxu0 0
        %3148 = vmatpush2.bf16.msra.mxu0 0
        %3149 = vmatprep.subr.bf16.mxu0 0
        %3150 = vmatpush2.bf16.msra.mxu0 0
        %3151 = vmatprep.subr.bf16.mxu0 0
        %3152 = vmatpush2.bf16.msra.mxu0 0
        %3153 = vmatprep.subr.bf16.mxu0 0
        %3154 = vmatpush2.bf16.msra.mxu0 0
        %3155 = vmatprep.subr.bf16.mxu0 0
        %3156 = vmatpush2.bf16.msra.mxu0 0
        %3157 = vmatprep.subr.bf16.mxu0 0
        %3158 = vmatpush2.bf16.msra.mxu0 0
        %3159 = vmatprep.subr.bf16.mxu0 0
        %3160 = vmatpush2.bf16.msra.mxu0 0
        %3161 = vmatprep.mubr.bf16.mxu0 0
        %3162 = vmatmul.mubr.bf16.gmra.mxu0 %v3124
        %v3163 = vpop.f32.mrf.mxu0
        %v3164 = vadd.f32 0.0, %v3163
        %v3165 = vpop.f32.mrf.mxu0
        %v3166 = vadd.f32 0.0, %v3165
        %v3167 = vpop.f32.mrf.mxu0
        %v3168 = vadd.f32 0.0, %v3167
        %v3169 = vpop.f32.mrf.mxu0
        %v3170 = vadd.f32 0.0, %v3169
        %3171 = vmatprep.mubr.bf16.mxu0 0
        %3172 = vmatmul.mubr.bf16.gmra.mxu0 %v3127
        %v3173 = vpop.f32.mrf.mxu0
        %v3174 = vadd.f32 0.0, %v3173
        %v3175 = vpop.f32.mrf.mxu0
        %v3176 = vadd.f32 0.0, %v3175
        %v3177 = vpop.f32.mrf.mxu0
        %v3178 = vadd.f32 0.0, %v3177
        %v3179 = vpop.f32.mrf.mxu0
        %v3180 = vadd.f32 0.0, %v3179
        %3181 = vdwg.mxu0
        %v3182 = vadd.f32 %v3080, %v3164
        %v3183 = vadd.f32 %v3081, %v3166
        %v3184 = vadd.f32 %v3082, %v3168
        %v3185 = vadd.f32 %v3083, %v3170
        %v3186 = vadd.f32 %v3084, %v3174
        %v3187 = vadd.f32 %v3085, %v3176
        %v3188 = vadd.f32 %v3086, %v3178
        %v3189 = vadd.f32 %v3087, %v3180
        %s3190 = scalar_lea.vmem [#allocation3], 176
        %v3191 = vld [vmem:[%s3190] sm:$0xf]
        %v3192 = vld [vmem:[%s3190 + $0x4] sm:$0xf]
        %v3193 = vld [vmem:[%s3190 + $0x8] sm:$0xf]
        %v3194 = vld [vmem:[%s3190 + $0xc] sm:$0xf]
        %v3199 = vunpack.c.l.b16 %v3191
        %v3200 = vunpack.c.l.b16 %v3192
        %v3201 = vunpack.c.l.b16 %v3193
        %v3202 = vunpack.c.l.b16 %v3194
        %v3203 = vpack.c.b16 %v3200, %v3199
        %v3204 = vpack.c.b16 %v3202, %v3201
        %3205 = vrot.lane.b32.xlu0 %v2995, 15
        %v3206 = vpop.permute.xlu0 %3205
        %3207 = vrot.lane.b32.xlu0 %v2996, 15
        %v3208 = vpop.permute.xlu0 %3207
        %3209 = vrot.lane.b32.xlu0 %v2997, 15
        %v3210 = vpop.permute.xlu0 %3209
        %3211 = vrot.lane.b32.xlu0 %v2998, 15
        %v3212 = vpop.permute.xlu0 %3211
        %3213 = vrot.lane.b32.xlu0 %v2999, 15
        %v3214 = vpop.permute.xlu0 %3213
        %3215 = vrot.lane.b32.xlu0 %v3000, 15
        %v3216 = vpop.permute.xlu0 %3215
        %v3217 = vsel %vm693, %v3206, %v3208
        %v3218 = vsel %vm693, %v3208, %v3210
        %v3219 = vsel %vm693, %v3212, %v3214
        %v3220 = vsel %vm693, %v3214, %v3216
        %v3226 = vsel %vm1816, %v3203, 0
        %v3229 = vsel %vm1816, %v3204, 0
        %3231 = vmatprep.subr.bf16.mxu0 0
        %3232 = vmatpush1.bf16.msra.mxu0 0
        %3233 = vmatprep.subr.bf16.mxu0 0
        %3234 = vmatpush1.bf16.msra.mxu0 0
        %3235 = vmatprep.subr.bf16.mxu0 0
        %3236 = vmatpush1.bf16.msra.mxu0 0
        %3237 = vmatprep.subr.bf16.mxu0 0
        %3238 = vmatpush1.bf16.msra.mxu0 0
        %3239 = vmatprep.subr.bf16.mxu0 0
        %3240 = vmatpush1.bf16.msra.mxu0 0
        %3241 = vmatprep.subr.bf16.mxu0 0
        %3242 = vmatpush1.bf16.msra.mxu0 0
        %3243 = vmatprep.subr.bf16.mxu0 %v3220
        %3244 = vmatpush1.bf16.msra.mxu0 %v3219
        %3245 = vmatprep.subr.bf16.mxu0 %v3218
        %3246 = vmatpush1.bf16.msra.mxu0 %v3217
        %3247 = vmatprep.subr.bf16.mxu0 0
        %3248 = vmatpush2.bf16.msra.mxu0 0
        %3249 = vmatprep.subr.bf16.mxu0 0
        %3250 = vmatpush2.bf16.msra.mxu0 0
        %3251 = vmatprep.subr.bf16.mxu0 0
        %3252 = vmatpush2.bf16.msra.mxu0 0
        %3253 = vmatprep.subr.bf16.mxu0 0
        %3254 = vmatpush2.bf16.msra.mxu0 0
        %3255 = vmatprep.subr.bf16.mxu0 0
        %3256 = vmatpush2.bf16.msra.mxu0 0
        %3257 = vmatprep.subr.bf16.mxu0 0
        %3258 = vmatpush2.bf16.msra.mxu0 0
        %3259 = vmatprep.subr.bf16.mxu0 0
        %3260 = vmatpush2.bf16.msra.mxu0 0
        %3261 = vmatprep.subr.bf16.mxu0 0
        %3262 = vmatpush2.bf16.msra.mxu0 0
        %3263 = vmatprep.mubr.bf16.mxu0 0
        %3264 = vmatmul.mubr.bf16.gmra.mxu0 %v3226
        %v3265 = vpop.f32.mrf.mxu0
        %v3266 = vadd.f32 0.0, %v3265
        %v3267 = vpop.f32.mrf.mxu0
        %v3268 = vadd.f32 0.0, %v3267
        %v3269 = vpop.f32.mrf.mxu0
        %v3270 = vadd.f32 0.0, %v3269
        %v3271 = vpop.f32.mrf.mxu0
        %v3272 = vadd.f32 0.0, %v3271
        %3273 = vmatprep.mubr.bf16.mxu0 0
        %3274 = vmatmul.mubr.bf16.gmra.mxu0 %v3229
        %v3275 = vpop.f32.mrf.mxu0
        %v3276 = vadd.f32 0.0, %v3275
        %v3277 = vpop.f32.mrf.mxu0
        %v3278 = vadd.f32 0.0, %v3277
        %v3279 = vpop.f32.mrf.mxu0
        %v3280 = vadd.f32 0.0, %v3279
        %v3281 = vpop.f32.mrf.mxu0
        %v3282 = vadd.f32 0.0, %v3281
        %3283 = vdwg.mxu0
        %v3284 = vmul.f32 %v3266, %v773
        %v3285 = vmul.f32 %v3268, %v777
        %v3286 = vmul.f32 %v3270, %v773
        %v3287 = vmul.f32 %v3272, %v777
        %v3288 = vmul.f32 %v3276, %v773
        %v3289 = vmul.f32 %v3278, %v777
        %v3290 = vmul.f32 %v3280, %v773
        %v3291 = vmul.f32 %v3282, %v777
        %v3292 = vadd.f32 %v3182, %v3284
        %v3293 = vadd.f32 %v3183, %v3285
        %v3294 = vadd.f32 %v3184, %v3286
        %v3295 = vadd.f32 %v3185, %v3287
        %v3296 = vadd.f32 %v3186, %v3288
        %v3297 = vadd.f32 %v3187, %v3289
        %v3298 = vadd.f32 %v3188, %v3290
        %v3299 = vadd.f32 %v3189, %v3291
        %s3300 = scalar_lea.vmem [#allocation3], 192
        %v3301 = vld [vmem:[%s3300] sm:$0xf]
        %v3302 = vld [vmem:[%s3300 + $0x4] sm:$0xf]
        %v3303 = vld [vmem:[%s3300 + $0x8] sm:$0xf]
        %v3304 = vld [vmem:[%s3300 + $0xc] sm:$0xf]
        %v3309 = vunpack.c.l.b16 %v3301
        %v3310 = vunpack.c.l.b16 %v3302
        %v3311 = vunpack.c.l.b16 %v3303
        %v3312 = vunpack.c.l.b16 %v3304
        %v3313 = vpack.c.b16 %v3310, %v3309
        %v3314 = vpack.c.b16 %v3312, %v3311
        %3315 = vrot.lane.b32.xlu0 %v2995, 1
        %v3316 = vpop.permute.xlu0 %3315
        %3317 = vrot.lane.b32.xlu0 %v2996, 1
        %v3318 = vpop.permute.xlu0 %3317
        %3319 = vrot.lane.b32.xlu0 %v2997, 1
        %v3320 = vpop.permute.xlu0 %3319
        %3321 = vrot.lane.b32.xlu0 %v2998, 1
        %v3322 = vpop.permute.xlu0 %3321
        %3323 = vrot.lane.b32.xlu0 %v2999, 1
        %v3324 = vpop.permute.xlu0 %3323
        %3325 = vrot.lane.b32.xlu0 %v3000, 1
        %v3326 = vpop.permute.xlu0 %3325
        %v3327 = vsel %vm829, %v3316, %v3318
        %v3328 = vsel %vm829, %v3318, %v3320
        %v3329 = vsel %vm829, %v3322, %v3324
        %v3330 = vsel %vm829, %v3324, %v3326
        %v3336 = vsel %vm1816, %v3313, 0
        %v3339 = vsel %vm1816, %v3314, 0
        %3341 = vmatprep.subr.bf16.mxu0 0
        %3342 = vmatpush1.bf16.msra.mxu0 0
        %3343 = vmatprep.subr.bf16.mxu0 0
        %3344 = vmatpush1.bf16.msra.mxu0 0
        %3345 = vmatprep.subr.bf16.mxu0 0
        %3346 = vmatpush1.bf16.msra.mxu0 0
        %3347 = vmatprep.subr.bf16.mxu0 0
        %3348 = vmatpush1.bf16.msra.mxu0 0
        %3349 = vmatprep.subr.bf16.mxu0 0
        %3350 = vmatpush1.bf16.msra.mxu0 0
        %3351 = vmatprep.subr.bf16.mxu0 0
        %3352 = vmatpush1.bf16.msra.mxu0 0
        %3353 = vmatprep.subr.bf16.mxu0 %v3330
        %3354 = vmatpush1.bf16.msra.mxu0 %v3329
        %3355 = vmatprep.subr.bf16.mxu0 %v3328
        %3356 = vmatpush1.bf16.msra.mxu0 %v3327
        %3357 = vmatprep.subr.bf16.mxu0 0
        %3358 = vmatpush2.bf16.msra.mxu0 0
        %3359 = vmatprep.subr.bf16.mxu0 0
        %3360 = vmatpush2.bf16.msra.mxu0 0
        %3361 = vmatprep.subr.bf16.mxu0 0
        %3362 = vmatpush2.bf16.msra.mxu0 0
        %3363 = vmatprep.subr.bf16.mxu0 0
        %3364 = vmatpush2.bf16.msra.mxu0 0
        %3365 = vmatprep.subr.bf16.mxu0 0
        %3366 = vmatpush2.bf16.msra.mxu0 0
        %3367 = vmatprep.subr.bf16.mxu0 0
        %3368 = vmatpush2.bf16.msra.mxu0 0
        %3369 = vmatprep.subr.bf16.mxu0 0
        %3370 = vmatpush2.bf16.msra.mxu0 0
        %3371 = vmatprep.subr.bf16.mxu0 0
        %3372 = vmatpush2.bf16.msra.mxu0 0
        %3373 = vmatprep.mubr.bf16.mxu0 0
        %3374 = vmatmul.mubr.bf16.gmra.mxu0 %v3336
        %v3375 = vpop.f32.mrf.mxu0
        %v3376 = vadd.f32 0.0, %v3375
        %v3377 = vpop.f32.mrf.mxu0
        %v3378 = vadd.f32 0.0, %v3377
        %v3379 = vpop.f32.mrf.mxu0
        %v3380 = vadd.f32 0.0, %v3379
        %v3381 = vpop.f32.mrf.mxu0
        %v3382 = vadd.f32 0.0, %v3381
        %3383 = vmatprep.mubr.bf16.mxu0 0
        %3384 = vmatmul.mubr.bf16.gmra.mxu0 %v3339
        %v3385 = vpop.f32.mrf.mxu0
        %v3386 = vadd.f32 0.0, %v3385
        %v3387 = vpop.f32.mrf.mxu0
        %v3388 = vadd.f32 0.0, %v3387
        %v3389 = vpop.f32.mrf.mxu0
        %v3390 = vadd.f32 0.0, %v3389
        %v3391 = vpop.f32.mrf.mxu0
        %v3392 = vadd.f32 0.0, %v3391
        %3393 = vdwg.mxu0
        %v3394 = vmul.f32 %v3376, %v528
        %v3395 = vmul.f32 %v3378, %v532
        %v3396 = vmul.f32 %v3380, %v528
        %v3397 = vmul.f32 %v3382, %v532
        %v3398 = vmul.f32 %v3386, %v528
        %v3399 = vmul.f32 %v3388, %v532
        %v3400 = vmul.f32 %v3390, %v528
        %v3401 = vmul.f32 %v3392, %v532
        %v3402 = vadd.f32 %v3292, %v3394
        %v3403 = vadd.f32 %v3293, %v3395
        %v3404 = vadd.f32 %v3294, %v3396
        %v3405 = vadd.f32 %v3295, %v3397
        %v3406 = vadd.f32 %v3296, %v3398
        %v3407 = vadd.f32 %v3297, %v3399
        %v3408 = vadd.f32 %v3298, %v3400
        %v3409 = vadd.f32 %v3299, %v3401
        %v3410 = vld [vmem:[#allocation2 + $0x4] sm:$0xff]
        %v3411 = vld [vmem:[#allocation2 + $0x14] sm:$0xff]
        %v3412 = vld [vmem:[#allocation2 + $0x24] sm:$0xff]
        %v3413 = vld [vmem:[#allocation2 + $0x34] sm:$0xff]
        %s3414 = scalar_lea.vmem [#allocation3], 208
        %v3415 = vld [vmem:[%s3414] sm:$0xf]
        %v3416 = vld [vmem:[%s3414 + $0x4] sm:$0xf]
        %v3417 = vld [vmem:[%s3414 + $0x8] sm:$0xf]
        %v3418 = vld [vmem:[%s3414 + $0xc] sm:$0xf]
        %v3423 = vunpack.c.l.b16 %v3415
        %v3424 = vunpack.c.l.b16 %v3416
        %v3425 = vunpack.c.l.b16 %v3417
        %v3426 = vunpack.c.l.b16 %v3418
        %v3427 = vpack.c.b16 %v3424, %v3423
        %v3428 = vpack.c.b16 %v3426, %v3425
        %v3433 = vunpack.c.l.b16 %v3410
        %v3434 = vunpack.c.h.b16 %v3410
        %v3435 = vunpack.c.l.b16 %v3411
        %v3436 = vunpack.c.h.b16 %v3411
        %v3437 = vunpack.c.l.b16 %v3412
        %v3438 = vunpack.c.h.b16 %v3412
        %v3439 = vunpack.c.l.b16 %v3413
        %v3440 = vunpack.c.h.b16 %v3413
        %v3441 = vpack.c.b16 %v3435, %v3433
        %v3442 = vpack.c.b16 %v3436, %v3434
        %v3443 = vpack.c.b16 %v3439, %v3437
        %v3444 = vpack.c.b16 %v3440, %v3438
        %v3450 = vsel %vm1816, %v3427, 0
        %v3453 = vsel %vm1816, %v3428, 0
        %3455 = vmatprep.subr.bf16.mxu0 0
        %3456 = vmatpush1.bf16.msra.mxu0 0
        %3457 = vmatprep.subr.bf16.mxu0 0
        %3458 = vmatpush1.bf16.msra.mxu0 0
        %3459 = vmatprep.subr.bf16.mxu0 0
        %3460 = vmatpush1.bf16.msra.mxu0 0
        %3461 = vmatprep.subr.bf16.mxu0 0
        %3462 = vmatpush1.bf16.msra.mxu0 0
        %3463 = vmatprep.subr.bf16.mxu0 0
        %3464 = vmatpush1.bf16.msra.mxu0 0
        %3465 = vmatprep.subr.bf16.mxu0 0
        %3466 = vmatpush1.bf16.msra.mxu0 0
        %3467 = vmatprep.subr.bf16.mxu0 %v3444
        %3468 = vmatpush1.bf16.msra.mxu0 %v3443
        %3469 = vmatprep.subr.bf16.mxu0 %v3442
        %3470 = vmatpush1.bf16.msra.mxu0 %v3441
        %3471 = vmatprep.subr.bf16.mxu0 0
        %3472 = vmatpush2.bf16.msra.mxu0 0
        %3473 = vmatprep.subr.bf16.mxu0 0
        %3474 = vmatpush2.bf16.msra.mxu0 0
        %3475 = vmatprep.subr.bf16.mxu0 0
        %3476 = vmatpush2.bf16.msra.mxu0 0
        %3477 = vmatprep.subr.bf16.mxu0 0
        %3478 = vmatpush2.bf16.msra.mxu0 0
        %3479 = vmatprep.subr.bf16.mxu0 0
        %3480 = vmatpush2.bf16.msra.mxu0 0
        %3481 = vmatprep.subr.bf16.mxu0 0
        %3482 = vmatpush2.bf16.msra.mxu0 0
        %3483 = vmatprep.subr.bf16.mxu0 0
        %3484 = vmatpush2.bf16.msra.mxu0 0
        %3485 = vmatprep.subr.bf16.mxu0 0
        %3486 = vmatpush2.bf16.msra.mxu0 0
        %3487 = vmatprep.mubr.bf16.mxu0 0
        %3488 = vmatmul.mubr.bf16.gmra.mxu0 %v3450
        %v3489 = vpop.f32.mrf.mxu0
        %v3490 = vadd.f32 0.0, %v3489
        %v3491 = vpop.f32.mrf.mxu0
        %v3492 = vadd.f32 0.0, %v3491
        %v3493 = vpop.f32.mrf.mxu0
        %v3494 = vadd.f32 0.0, %v3493
        %v3495 = vpop.f32.mrf.mxu0
        %v3496 = vadd.f32 0.0, %v3495
        %3497 = vmatprep.mubr.bf16.mxu0 0
        %3498 = vmatmul.mubr.bf16.gmra.mxu0 %v3453
        %v3499 = vpop.f32.mrf.mxu0
        %v3500 = vadd.f32 0.0, %v3499
        %v3501 = vpop.f32.mrf.mxu0
        %v3502 = vadd.f32 0.0, %v3501
        %v3503 = vpop.f32.mrf.mxu0
        %v3504 = vadd.f32 0.0, %v3503
        %v3505 = vpop.f32.mrf.mxu0
        %v3506 = vadd.f32 0.0, %v3505
        %3507 = vdwg.mxu0
        %v3508 = vadd.f32 %v3402, %v3490
        %v3509 = vadd.f32 %v3403, %v3492
        %v3510 = vadd.f32 %v3404, %v3494
        %v3511 = vadd.f32 %v3405, %v3496
        %v3512 = vadd.f32 %v3406, %v3500
        %v3513 = vadd.f32 %v3407, %v3502
        %v3514 = vadd.f32 %v3408, %v3504
        %v3515 = vadd.f32 %v3409, %v3506
        %v3516 = vld [vmem:[#allocation2 + $0x4] sm:$0xff]
        %v3517 = vld [vmem:[#allocation2 + $0xc] sm:$0xf]
        %v3518 = vld [vmem:[#allocation2 + $0x14] sm:$0xff]
        %v3519 = vld [vmem:[#allocation2 + $0x1c] sm:$0xf]
        %v3520 = vld [vmem:[#allocation2 + $0x24] sm:$0xff]
        %v3521 = vld [vmem:[#allocation2 + $0x2c] sm:$0xf]
        %v3522 = vld [vmem:[#allocation2 + $0x34] sm:$0xff]
        %v3523 = vld [vmem:[#allocation2 + $0x3c] sm:$0xf]
        %s3524 = scalar_lea.vmem [#allocation3], 224
        %v3525 = vld [vmem:[%s3524] sm:$0xf]
        %v3526 = vld [vmem:[%s3524 + $0x4] sm:$0xf]
        %v3527 = vld [vmem:[%s3524 + $0x8] sm:$0xf]
        %v3528 = vld [vmem:[%s3524 + $0xc] sm:$0xf]
        %v3533 = vunpack.c.l.b16 %v3525
        %v3534 = vunpack.c.l.b16 %v3526
        %v3535 = vunpack.c.l.b16 %v3527
        %v3536 = vunpack.c.l.b16 %v3528
        %v3537 = vpack.c.b16 %v3534, %v3533
        %v3538 = vpack.c.b16 %v3536, %v3535
        %v3547 = vunpack.c.l.b16 %v3516
        %v3548 = vunpack.c.h.b16 %v3516
        %v3549 = vunpack.c.l.b16 %v3517
        %v3550 = vunpack.c.l.b16 %v3518
        %v3551 = vunpack.c.h.b16 %v3518
        %v3552 = vunpack.c.l.b16 %v3519
        %v3553 = vunpack.c.l.b16 %v3520
        %v3554 = vunpack.c.h.b16 %v3520
        %v3555 = vunpack.c.l.b16 %v3521
        %v3556 = vunpack.c.l.b16 %v3522
        %v3557 = vunpack.c.h.b16 %v3522
        %v3558 = vunpack.c.l.b16 %v3523
        %v3559 = vpack.c.b16 %v3550, %v3547
        %v3560 = vpack.c.b16 %v3551, %v3548
        %v3561 = vpack.c.b16 %v3552, %v3549
        %v3562 = vpack.c.b16 %v3556, %v3553
        %v3563 = vpack.c.b16 %v3557, %v3554
        %v3564 = vpack.c.b16 %v3558, %v3555
        %3565 = vrot.lane.b32.xlu0 %v3559, 127
        %v3566 = vpop.permute.xlu0 %3565
        %3567 = vrot.lane.b32.xlu0 %v3560, 127
        %v3568 = vpop.permute.xlu0 %3567
        %3569 = vrot.lane.b32.xlu0 %v3561, 127
        %v3570 = vpop.permute.xlu0 %3569
        %3571 = vrot.lane.b32.xlu0 %v3562, 127
        %v3572 = vpop.permute.xlu0 %3571
        %3573 = vrot.lane.b32.xlu0 %v3563, 127
        %v3574 = vpop.permute.xlu0 %3573
        %3575 = vrot.lane.b32.xlu0 %v3564, 127
        %v3576 = vpop.permute.xlu0 %3575
        %v3577 = vsel %vm1116, %v3566, %v3568
        %v3578 = vsel %vm1116, %v3568, %v3570
        %v3579 = vsel %vm1116, %v3572, %v3574
        %v3580 = vsel %vm1116, %v3574, %v3576
        %v3586 = vsel %vm1816, %v3537, 0
        %v3589 = vsel %vm1816, %v3538, 0
        %3591 = vmatprep.subr.bf16.mxu0 0
        %3592 = vmatpush1.bf16.msra.mxu0 0
        %3593 = vmatprep.subr.bf16.mxu0 0
        %3594 = vmatpush1.bf16.msra.mxu0 0
        %3595 = vmatprep.subr.bf16.mxu0 0
        %3596 = vmatpush1.bf16.msra.mxu0 0
        %3597 = vmatprep.subr.bf16.mxu0 0
        %3598 = vmatpush1.bf16.msra.mxu0 0
        %3599 = vmatprep.subr.bf16.mxu0 0
        %3600 = vmatpush1.bf16.msra.mxu0 0
        %3601 = vmatprep.subr.bf16.mxu0 0
        %3602 = vmatpush1.bf16.msra.mxu0 0
        %3603 = vmatprep.subr.bf16.mxu0 %v3580
        %3604 = vmatpush1.bf16.msra.mxu0 %v3579
        %3605 = vmatprep.subr.bf16.mxu0 %v3578
        %3606 = vmatpush1.bf16.msra.mxu0 %v3577
        %3607 = vmatprep.subr.bf16.mxu0 0
        %3608 = vmatpush2.bf16.msra.mxu0 0
        %3609 = vmatprep.subr.bf16.mxu0 0
        %3610 = vmatpush2.bf16.msra.mxu0 0
        %3611 = vmatprep.subr.bf16.mxu0 0
        %3612 = vmatpush2.bf16.msra.mxu0 0
        %3613 = vmatprep.subr.bf16.mxu0 0
        %3614 = vmatpush2.bf16.msra.mxu0 0
        %3615 = vmatprep.subr.bf16.mxu0 0
        %3616 = vmatpush2.bf16.msra.mxu0 0
        %3617 = vmatprep.subr.bf16.mxu0 0
        %3618 = vmatpush2.bf16.msra.mxu0 0
        %3619 = vmatprep.subr.bf16.mxu0 0
        %3620 = vmatpush2.bf16.msra.mxu0 0
        %3621 = vmatprep.subr.bf16.mxu0 0
        %3622 = vmatpush2.bf16.msra.mxu0 0
        %3623 = vmatprep.mubr.bf16.mxu0 0
        %3624 = vmatmul.mubr.bf16.gmra.mxu0 %v3586
        %v3625 = vpop.f32.mrf.mxu0
        %v3626 = vadd.f32 0.0, %v3625
        %v3627 = vpop.f32.mrf.mxu0
        %v3628 = vadd.f32 0.0, %v3627
        %v3629 = vpop.f32.mrf.mxu0
        %v3630 = vadd.f32 0.0, %v3629
        %v3631 = vpop.f32.mrf.mxu0
        %v3632 = vadd.f32 0.0, %v3631
        %3633 = vmatprep.mubr.bf16.mxu0 0
        %3634 = vmatmul.mubr.bf16.gmra.mxu0 %v3589
        %v3635 = vpop.f32.mrf.mxu0
        %v3636 = vadd.f32 0.0, %v3635
        %v3637 = vpop.f32.mrf.mxu0
        %v3638 = vadd.f32 0.0, %v3637
        %v3639 = vpop.f32.mrf.mxu0
        %v3640 = vadd.f32 0.0, %v3639
        %v3641 = vpop.f32.mrf.mxu0
        %v3642 = vadd.f32 0.0, %v3641
        %3643 = vdwg.mxu0
        %v3644 = vmul.f32 %v3626, %v773
        %v3645 = vmul.f32 %v3628, %v777
        %v3646 = vmul.f32 %v3630, %v773
        %v3647 = vmul.f32 %v3632, %v777
        %v3648 = vmul.f32 %v3636, %v773
        %v3649 = vmul.f32 %v3638, %v777
        %v3650 = vmul.f32 %v3640, %v773
        %v3651 = vmul.f32 %v3642, %v777
        %v3652 = vadd.f32 %v3508, %v3644
        %v3653 = vadd.f32 %v3509, %v3645
        %v3654 = vadd.f32 %v3510, %v3646
        %v3655 = vadd.f32 %v3511, %v3647
        %v3656 = vadd.f32 %v3512, %v3648
        %v3657 = vadd.f32 %v3513, %v3649
        %v3658 = vadd.f32 %v3514, %v3650
        %v3659 = vadd.f32 %v3515, %v3651
        %s3660 = scalar_lea.vmem [#allocation3], 240
        %v3661 = vld [vmem:[%s3660] sm:$0xf]
        %v3662 = vld [vmem:[%s3660 + $0x4] sm:$0xf]
        %v3663 = vld [vmem:[%s3660 + $0x8] sm:$0xf]
        %v3664 = vld [vmem:[%s3660 + $0xc] sm:$0xf]
        %v3669 = vunpack.c.l.b16 %v3661
        %v3670 = vunpack.c.l.b16 %v3662
        %v3671 = vunpack.c.l.b16 %v3663
        %v3672 = vunpack.c.l.b16 %v3664
        %v3673 = vpack.c.b16 %v3670, %v3669
        %v3674 = vpack.c.b16 %v3672, %v3671
        %3675 = vrot.lane.b32.xlu0 %v3559, 113
        %v3676 = vpop.permute.xlu0 %3675
        %3677 = vrot.lane.b32.xlu0 %v3560, 113
        %v3678 = vpop.permute.xlu0 %3677
        %3679 = vrot.lane.b32.xlu0 %v3561, 113
        %v3680 = vpop.permute.xlu0 %3679
        %3681 = vrot.lane.b32.xlu0 %v3562, 113
        %v3682 = vpop.permute.xlu0 %3681
        %3683 = vrot.lane.b32.xlu0 %v3563, 113
        %v3684 = vpop.permute.xlu0 %3683
        %3685 = vrot.lane.b32.xlu0 %v3564, 113
        %v3686 = vpop.permute.xlu0 %3685
        %v3687 = vsel %vm1241, %v3676, %v3678
        %v3688 = vsel %vm1241, %v3678, %v3680
        %v3689 = vsel %vm1241, %v3682, %v3684
        %v3690 = vsel %vm1241, %v3684, %v3686
        %v3696 = vsel %vm1816, %v3673, 0
        %v3699 = vsel %vm1816, %v3674, 0
        %3701 = vmatprep.subr.bf16.mxu0 0
        %3702 = vmatpush1.bf16.msra.mxu0 0
        %3703 = vmatprep.subr.bf16.mxu0 0
        %3704 = vmatpush1.bf16.msra.mxu0 0
        %3705 = vmatprep.subr.bf16.mxu0 0
        %3706 = vmatpush1.bf16.msra.mxu0 0
        %3707 = vmatprep.subr.bf16.mxu0 0
        %3708 = vmatpush1.bf16.msra.mxu0 0
        %3709 = vmatprep.subr.bf16.mxu0 0
        %3710 = vmatpush1.bf16.msra.mxu0 0
        %3711 = vmatprep.subr.bf16.mxu0 0
        %3712 = vmatpush1.bf16.msra.mxu0 0
        %3713 = vmatprep.subr.bf16.mxu0 %v3690
        %3714 = vmatpush1.bf16.msra.mxu0 %v3689
        %3715 = vmatprep.subr.bf16.mxu0 %v3688
        %3716 = vmatpush1.bf16.msra.mxu0 %v3687
        %3717 = vmatprep.subr.bf16.mxu0 0
        %3718 = vmatpush2.bf16.msra.mxu0 0
        %3719 = vmatprep.subr.bf16.mxu0 0
        %3720 = vmatpush2.bf16.msra.mxu0 0
        %3721 = vmatprep.subr.bf16.mxu0 0
        %3722 = vmatpush2.bf16.msra.mxu0 0
        %3723 = vmatprep.subr.bf16.mxu0 0
        %3724 = vmatpush2.bf16.msra.mxu0 0
        %3725 = vmatprep.subr.bf16.mxu0 0
        %3726 = vmatpush2.bf16.msra.mxu0 0
        %3727 = vmatprep.subr.bf16.mxu0 0
        %3728 = vmatpush2.bf16.msra.mxu0 0
        %3729 = vmatprep.subr.bf16.mxu0 0
        %3730 = vmatpush2.bf16.msra.mxu0 0
        %3731 = vmatprep.subr.bf16.mxu0 0
        %3732 = vmatpush2.bf16.msra.mxu0 0
        %3733 = vmatprep.mubr.bf16.mxu0 0
        %3734 = vmatmul.mubr.bf16.gmra.mxu0 %v3696
        %v3735 = vpop.f32.mrf.mxu0
        %v3736 = vadd.f32 0.0, %v3735
        %v3737 = vpop.f32.mrf.mxu0
        %v3738 = vadd.f32 0.0, %v3737
        %v3739 = vpop.f32.mrf.mxu0
        %v3740 = vadd.f32 0.0, %v3739
        %v3741 = vpop.f32.mrf.mxu0
        %v3742 = vadd.f32 0.0, %v3741
        %3743 = vmatprep.mubr.bf16.mxu0 0
        %3744 = vmatmul.mubr.bf16.gmra.mxu0 %v3699
        %v3745 = vpop.f32.mrf.mxu0
        %v3746 = vadd.f32 0.0, %v3745
        %v3747 = vpop.f32.mrf.mxu0
        %v3748 = vadd.f32 0.0, %v3747
        %v3749 = vpop.f32.mrf.mxu0
        %v3750 = vadd.f32 0.0, %v3749
        %v3751 = vpop.f32.mrf.mxu0
        %v3752 = vadd.f32 0.0, %v3751
        %3753 = vdwg.mxu0
        %v3754 = vmul.f32 %v3736, %v528
        %v3755 = vmul.f32 %v3738, %v532
        %v3756 = vmul.f32 %v3740, %v528
        %v3757 = vmul.f32 %v3742, %v532
        %v3758 = vmul.f32 %v3746, %v528
        %v3759 = vmul.f32 %v3748, %v532
        %v3760 = vmul.f32 %v3750, %v528
        %v3761 = vmul.f32 %v3752, %v532
        %v3762 = vadd.f32 %v3652, %v3754
        %v3763 = vadd.f32 %v3653, %v3755
        %v3764 = vadd.f32 %v3654, %v3756
        %v3765 = vadd.f32 %v3655, %v3757
        %v3766 = vadd.f32 %v3656, %v3758
        %v3767 = vadd.f32 %v3657, %v3759
        %v3768 = vadd.f32 %v3658, %v3760
        %v3769 = vadd.f32 %v3659, %v3761
        %s3770 = scalar_lea.vmem [#allocation3], 256
        %v3771 = vld [vmem:[%s3770] sm:$0xf]
        %v3772 = vld [vmem:[%s3770 + $0x4] sm:$0xf]
        %v3773 = vld [vmem:[%s3770 + $0x8] sm:$0xf]
        %v3774 = vld [vmem:[%s3770 + $0xc] sm:$0xf]
        %v3779 = vunpack.c.l.b16 %v3771
        %v3780 = vunpack.c.l.b16 %v3772
        %v3781 = vunpack.c.l.b16 %v3773
        %v3782 = vunpack.c.l.b16 %v3774
        %v3783 = vpack.c.b16 %v3780, %v3779
        %v3784 = vpack.c.b16 %v3782, %v3781
        %3785 = vrot.lane.b32.xlu0 %v3559, 112
        %v3786 = vpop.permute.xlu0 %3785
        %3787 = vrot.lane.b32.xlu0 %v3560, 112
        %v3788 = vpop.permute.xlu0 %3787
        %3789 = vrot.lane.b32.xlu0 %v3561, 112
        %v3790 = vpop.permute.xlu0 %3789
        %3791 = vrot.lane.b32.xlu0 %v3562, 112
        %v3792 = vpop.permute.xlu0 %3791
        %3793 = vrot.lane.b32.xlu0 %v3563, 112
        %v3794 = vpop.permute.xlu0 %3793
        %3795 = vrot.lane.b32.xlu0 %v3564, 112
        %v3796 = vpop.permute.xlu0 %3795
        %v3797 = vsel %vm1366, %v3786, %v3788
        %v3798 = vsel %vm1366, %v3788, %v3790
        %v3799 = vsel %vm1366, %v3792, %v3794
        %v3800 = vsel %vm1366, %v3794, %v3796
        %v3806 = vsel %vm1816, %v3783, 0
        %v3809 = vsel %vm1816, %v3784, 0
        %3811 = vmatprep.subr.bf16.mxu0 0
        %3812 = vmatpush1.bf16.msra.mxu0 0
        %3813 = vmatprep.subr.bf16.mxu0 0
        %3814 = vmatpush1.bf16.msra.mxu0 0
        %3815 = vmatprep.subr.bf16.mxu0 0
        %3816 = vmatpush1.bf16.msra.mxu0 0
        %3817 = vmatprep.subr.bf16.mxu0 0
        %3818 = vmatpush1.bf16.msra.mxu0 0
        %3819 = vmatprep.subr.bf16.mxu0 0
        %3820 = vmatpush1.bf16.msra.mxu0 0
        %3821 = vmatprep.subr.bf16.mxu0 0
        %3822 = vmatpush1.bf16.msra.mxu0 0
        %3823 = vmatprep.subr.bf16.mxu0 %v3800
        %3824 = vmatpush1.bf16.msra.mxu0 %v3799
        %3825 = vmatprep.subr.bf16.mxu0 %v3798
        %3826 = vmatpush1.bf16.msra.mxu0 %v3797
        %3827 = vmatprep.subr.bf16.mxu0 0
        %3828 = vmatpush2.bf16.msra.mxu0 0
        %3829 = vmatprep.subr.bf16.mxu0 0
        %3830 = vmatpush2.bf16.msra.mxu0 0
        %3831 = vmatprep.subr.bf16.mxu0 0
        %3832 = vmatpush2.bf16.msra.mxu0 0
        %3833 = vmatprep.subr.bf16.mxu0 0
        %3834 = vmatpush2.bf16.msra.mxu0 0
        %3835 = vmatprep.subr.bf16.mxu0 0
        %3836 = vmatpush2.bf16.msra.mxu0 0
        %3837 = vmatprep.subr.bf16.mxu0 0
        %3838 = vmatpush2.bf16.msra.mxu0 0
        %3839 = vmatprep.subr.bf16.mxu0 0
        %3840 = vmatpush2.bf16.msra.mxu0 0
        %3841 = vmatprep.subr.bf16.mxu0 0
        %3842 = vmatpush2.bf16.msra.mxu0 0
        %3843 = vmatprep.mubr.bf16.mxu0 0
        %3844 = vmatmul.mubr.bf16.gmra.mxu0 %v3806
        %v3845 = vpop.f32.mrf.mxu0
        %v3846 = vadd.f32 0.0, %v3845
        %v3847 = vpop.f32.mrf.mxu0
        %v3848 = vadd.f32 0.0, %v3847
        %v3849 = vpop.f32.mrf.mxu0
        %v3850 = vadd.f32 0.0, %v3849
        %v3851 = vpop.f32.mrf.mxu0
        %v3852 = vadd.f32 0.0, %v3851
        %3853 = vmatprep.mubr.bf16.mxu0 0
        %3854 = vmatmul.mubr.bf16.gmra.mxu0 %v3809
        %v3855 = vpop.f32.mrf.mxu0
        %v3856 = vadd.f32 0.0, %v3855
        %v3857 = vpop.f32.mrf.mxu0
        %v3858 = vadd.f32 0.0, %v3857
        %v3859 = vpop.f32.mrf.mxu0
        %v3860 = vadd.f32 0.0, %v3859
        %v3861 = vpop.f32.mrf.mxu0
        %v3862 = vadd.f32 0.0, %v3861
        %3863 = vdwg.mxu0
        %v3864 = vadd.f32 %v3762, %v3846
        %v3865 = vadd.f32 %v3763, %v3848
        %v3866 = vadd.f32 %v3764, %v3850
        %v3867 = vadd.f32 %v3765, %v3852
        %v3868 = vadd.f32 %v3766, %v3856
        %v3869 = vadd.f32 %v3767, %v3858
        %v3870 = vadd.f32 %v3768, %v3860
        %v3871 = vadd.f32 %v3769, %v3862
        %s3872 = scalar_lea.vmem [#allocation3], 272
        %v3873 = vld [vmem:[%s3872] sm:$0xf]
        %v3874 = vld [vmem:[%s3872 + $0x4] sm:$0xf]
        %v3875 = vld [vmem:[%s3872 + $0x8] sm:$0xf]
        %v3876 = vld [vmem:[%s3872 + $0xc] sm:$0xf]
        %v3881 = vunpack.c.l.b16 %v3873
        %v3882 = vunpack.c.l.b16 %v3874
        %v3883 = vunpack.c.l.b16 %v3875
        %v3884 = vunpack.c.l.b16 %v3876
        %v3885 = vpack.c.b16 %v3882, %v3881
        %v3886 = vpack.c.b16 %v3884, %v3883
        %3887 = vrot.lane.b32.xlu0 %v3559, 111
        %v3888 = vpop.permute.xlu0 %3887
        %3889 = vrot.lane.b32.xlu0 %v3560, 111
        %v3890 = vpop.permute.xlu0 %3889
        %3891 = vrot.lane.b32.xlu0 %v3561, 111
        %v3892 = vpop.permute.xlu0 %3891
        %3893 = vrot.lane.b32.xlu0 %v3562, 111
        %v3894 = vpop.permute.xlu0 %3893
        %3895 = vrot.lane.b32.xlu0 %v3563, 111
        %v3896 = vpop.permute.xlu0 %3895
        %3897 = vrot.lane.b32.xlu0 %v3564, 111
        %v3898 = vpop.permute.xlu0 %3897
        %v3899 = vsel %vm1483, %v3888, %v3890
        %v3900 = vsel %vm1483, %v3890, %v3892
        %v3901 = vsel %vm1483, %v3894, %v3896
        %v3902 = vsel %vm1483, %v3896, %v3898
        %v3908 = vsel %vm1816, %v3885, 0
        %v3911 = vsel %vm1816, %v3886, 0
        %3913 = vmatprep.subr.bf16.mxu0 0
        %3914 = vmatpush1.bf16.msra.mxu0 0
        %3915 = vmatprep.subr.bf16.mxu0 0
        %3916 = vmatpush1.bf16.msra.mxu0 0
        %3917 = vmatprep.subr.bf16.mxu0 0
        %3918 = vmatpush1.bf16.msra.mxu0 0
        %3919 = vmatprep.subr.bf16.mxu0 0
        %3920 = vmatpush1.bf16.msra.mxu0 0
        %3921 = vmatprep.subr.bf16.mxu0 0
        %3922 = vmatpush1.bf16.msra.mxu0 0
        %3923 = vmatprep.subr.bf16.mxu0 0
        %3924 = vmatpush1.bf16.msra.mxu0 0
        %3925 = vmatprep.subr.bf16.mxu0 %v3902
        %3926 = vmatpush1.bf16.msra.mxu0 %v3901
        %3927 = vmatprep.subr.bf16.mxu0 %v3900
        %3928 = vmatpush1.bf16.msra.mxu0 %v3899
        %3929 = vmatprep.subr.bf16.mxu0 0
        %3930 = vmatpush2.bf16.msra.mxu0 0
        %3931 = vmatprep.subr.bf16.mxu0 0
        %3932 = vmatpush2.bf16.msra.mxu0 0
        %3933 = vmatprep.subr.bf16.mxu0 0
        %3934 = vmatpush2.bf16.msra.mxu0 0
        %3935 = vmatprep.subr.bf16.mxu0 0
        %3936 = vmatpush2.bf16.msra.mxu0 0
        %3937 = vmatprep.subr.bf16.mxu0 0
        %3938 = vmatpush2.bf16.msra.mxu0 0
        %3939 = vmatprep.subr.bf16.mxu0 0
        %3940 = vmatpush2.bf16.msra.mxu0 0
        %3941 = vmatprep.subr.bf16.mxu0 0
        %3942 = vmatpush2.bf16.msra.mxu0 0
        %3943 = vmatprep.subr.bf16.mxu0 0
        %3944 = vmatpush2.bf16.msra.mxu0 0
        %3945 = vmatprep.mubr.bf16.mxu0 0
        %3946 = vmatmul.mubr.bf16.gmra.mxu0 %v3908
        %v3947 = vpop.f32.mrf.mxu0
        %v3948 = vadd.f32 0.0, %v3947
        %v3949 = vpop.f32.mrf.mxu0
        %v3950 = vadd.f32 0.0, %v3949
        %v3951 = vpop.f32.mrf.mxu0
        %v3952 = vadd.f32 0.0, %v3951
        %v3953 = vpop.f32.mrf.mxu0
        %v3954 = vadd.f32 0.0, %v3953
        %3955 = vmatprep.mubr.bf16.mxu0 0
        %3956 = vmatmul.mubr.bf16.gmra.mxu0 %v3911
        %v3957 = vpop.f32.mrf.mxu0
        %v3958 = vadd.f32 0.0, %v3957
        %v3959 = vpop.f32.mrf.mxu0
        %v3960 = vadd.f32 0.0, %v3959
        %v3961 = vpop.f32.mrf.mxu0
        %v3962 = vadd.f32 0.0, %v3961
        %v3963 = vpop.f32.mrf.mxu0
        %v3964 = vadd.f32 0.0, %v3963
        %3965 = vdwg.mxu0
        %v3966 = vmul.f32 %v3948, %v773
        %v3967 = vmul.f32 %v3950, %v777
        %v3968 = vmul.f32 %v3952, %v773
        %v3969 = vmul.f32 %v3954, %v777
        %v3970 = vmul.f32 %v3958, %v773
        %v3971 = vmul.f32 %v3960, %v777
        %v3972 = vmul.f32 %v3962, %v773
        %v3973 = vmul.f32 %v3964, %v777
        %v3974 = vadd.f32 %v3864, %v3966
        %v3975 = vadd.f32 %v3865, %v3967
        %v3976 = vadd.f32 %v3866, %v3968
        %v3977 = vadd.f32 %v3867, %v3969
        %v3978 = vadd.f32 %v3868, %v3970
        %v3979 = vadd.f32 %v3869, %v3971
        %v3980 = vadd.f32 %v3870, %v3972
        %v3981 = vadd.f32 %v3871, %v3973
        %s3982 = scalar_lea.vmem %s4, 64
        %v3983 = vld [vmem:[%s3982] sm:$0xff]
        %v3984 = vld [vmem:[%s3982 + $0x8] sm:$0xff]
        %v3985 = vld [vmem:[%s3982 + $0x10] sm:$0xff]
        %v3986 = vld [vmem:[%s3982 + $0x18] sm:$0xff]
        %s3987 = scalar_lea.vmem %s5, 64
        %v3988 = vld [vmem:[%s3987] sm:$0xff]
        %v3989 = vld [vmem:[%s3987 + $0x8] sm:$0xff]
        %v3990 = vld [vmem:[%s3987 + $0x10] sm:$0xff]
        %v3991 = vld [vmem:[%s3987 + $0x18] sm:$0xff]
        %v3992 = vadd.f32 %v3974, %v3975
        %3993 = vadd.xlane.f32.xlu0 %v3992
        %v3994 = vpop.xlane.xlu0 %3993
        %v3995 = vadd.f32 %v3976, %v3977
        %3996 = vadd.xlane.f32.xlu0 %v3995
        %v3997 = vpop.xlane.xlu0 %3996
        %v3998 = vadd.f32 %v3978, %v3979
        %3999 = vadd.xlane.f32.xlu0 %v3998
        %v4000 = vpop.xlane.xlu0 %3999
        %v4001 = vadd.f32 %v3980, %v3981
        %4002 = vadd.xlane.f32.xlu0 %v4001
        %v4003 = vpop.xlane.xlu0 %4002
        %v4004 = vmul.f32 %v3994, %v1595
        %v4005 = vmul.f32 %v3997, %v1595
        %v4006 = vmul.f32 %v4000, %v1595
        %v4007 = vmul.f32 %v4003, %v1595
        %v4008 = vmul.f32 %v3974, %v3974
        %v4009 = vmul.f32 %v3975, %v3975
        %v4010 = vmul.f32 %v3976, %v3976
        %v4011 = vmul.f32 %v3977, %v3977
        %v4012 = vmul.f32 %v3978, %v3978
        %v4013 = vmul.f32 %v3979, %v3979
        %v4014 = vmul.f32 %v3980, %v3980
        %v4015 = vmul.f32 %v3981, %v3981
        %v4016 = vadd.f32 %v4008, %v4009
        %4017 = vadd.xlane.f32.xlu0 %v4016
        %v4018 = vpop.xlane.xlu0 %4017
        %v4019 = vadd.f32 %v4010, %v4011
        %4020 = vadd.xlane.f32.xlu0 %v4019
        %v4021 = vpop.xlane.xlu0 %4020
        %v4022 = vadd.f32 %v4012, %v4013
        %4023 = vadd.xlane.f32.xlu0 %v4022
        %v4024 = vpop.xlane.xlu0 %4023
        %v4025 = vadd.f32 %v4014, %v4015
        %4026 = vadd.xlane.f32.xlu0 %v4025
        %v4027 = vpop.xlane.xlu0 %4026
        %v4028 = vmul.f32 %v4018, %v1595
        %v4029 = vmul.f32 %v4021, %v1595
        %v4030 = vmul.f32 %v4024, %v1595
        %v4031 = vmul.f32 %v4027, %v1595
        %v4032 = vmul.f32 %v4004, %v4004
        %v4033 = vmul.f32 %v4005, %v4005
        %v4034 = vmul.f32 %v4006, %v4006
        %v4035 = vmul.f32 %v4007, %v4007
        %v4036 = vsub.f32 %v4028, %v4032
        %v4037 = vsub.f32 %v4029, %v4033
        %v4038 = vsub.f32 %v4030, %v4034
        %v4039 = vsub.f32 %v4031, %v4035
        %v4040 = vmax.f32 %v4036, 0.0
        %v4041 = vmax.f32 %v4037, 0.0
        %v4042 = vmax.f32 %v4038, 0.0
        %v4043 = vmax.f32 %v4039, 0.0
        %v4044 = vadd.f32 %v4040, 1e-05
        %v4045 = vadd.f32 %v4041, 1e-05
        %v4046 = vadd.f32 %v4042, 1e-05
        %v4047 = vadd.f32 %v4043, 1e-05
        %v4048 = vrsqrt.pop %v4044
        %v4049 = vrsqrt.pop %v4045
        %v4050 = vrsqrt.pop %v4046
        %v4051 = vrsqrt.pop %v4047
        %v4052 = vmul.f32 %v4048, %v3983
        %v4053 = vmul.f32 %v4049, %v3984
        %v4054 = vmul.f32 %v4050, %v3985
        %v4055 = vmul.f32 %v4051, %v3986
        %v4056 = vmul.f32 %v4004, %v4052
        %v4057 = vmul.f32 %v4005, %v4053
        %v4058 = vmul.f32 %v4006, %v4054
        %v4059 = vmul.f32 %v4007, %v4055
        %v4060 = vsub.f32 %v3988, %v4056
        %v4061 = vsub.f32 %v3989, %v4057
        %v4062 = vsub.f32 %v3990, %v4058
        %v4063 = vsub.f32 %v3991, %v4059
        %4065 = vset.pattern.permute.xlu0 0
        %4066 = vperm.xlu0 %4065, %v4052
        %v4067 = vpop.permute.xlu0 %4066
        %4070 = vset.pattern.permute.xlu0 0
        %4071 = vperm.xlu0 %4070, %v4053
        %v4072 = vpop.permute.xlu0 %4071
        %4075 = vset.pattern.permute.xlu0 0
        %4076 = vperm.xlu0 %4075, %v4054
        %v4077 = vpop.permute.xlu0 %4076
        %4080 = vset.pattern.permute.xlu0 0
        %4081 = vperm.xlu0 %4080, %v4055
        %v4082 = vpop.permute.xlu0 %4081
        %v4084 = vmul.f32 %v3974, %v4067
        %v4085 = vmul.f32 %v3975, %v4067
        %v4086 = vmul.f32 %v3976, %v4072
        %v4087 = vmul.f32 %v3977, %v4072
        %v4088 = vmul.f32 %v3978, %v4077
        %v4089 = vmul.f32 %v3979, %v4077
        %v4090 = vmul.f32 %v3980, %v4082
        %v4091 = vmul.f32 %v3981, %v4082
        %4093 = vset.pattern.permute.xlu0 0
        %4094 = vperm.xlu0 %4093, %v4060
        %v4095 = vpop.permute.xlu0 %4094
        %4098 = vset.pattern.permute.xlu0 0
        %4099 = vperm.xlu0 %4098, %v4061
        %v4100 = vpop.permute.xlu0 %4099
        %4103 = vset.pattern.permute.xlu0 0
        %4104 = vperm.xlu0 %4103, %v4062
        %v4105 = vpop.permute.xlu0 %4104
        %4108 = vset.pattern.permute.xlu0 0
        %4109 = vperm.xlu0 %4108, %v4063
        %v4110 = vpop.permute.xlu0 %4109
        %v4112 = vadd.f32 %v4084, %v4095
        %v4113 = vadd.f32 %v4085, %v4095
        %v4114 = vadd.f32 %v4086, %v4100
        %v4115 = vadd.f32 %v4087, %v4100
        %v4116 = vadd.f32 %v4088, %v4105
        %v4117 = vadd.f32 %v4089, %v4105
        %v4118 = vadd.f32 %v4090, %v4110
        %v4119 = vadd.f32 %v4091, %v4110
        %v4120 = vmax.f32 %v4112, 0.0
        %v4121 = vmax.f32 %v4113, 0.0
        %v4122 = vmax.f32 %v4114, 0.0
        %v4123 = vmax.f32 %v4115, 0.0
        %v4124 = vmax.f32 %v4116, 0.0
        %v4125 = vmax.f32 %v4117, 0.0
        %v4126 = vmax.f32 %v4118, 0.0
        %v4127 = vmax.f32 %v4119, 0.0
        %v4128 = vpack.c.bf16 %v4122, %v4120
        %v4129 = vpack.c.bf16 %v4123, %v4121
        %v4130 = vpack.c.bf16 %v4126, %v4124
        %v4131 = vpack.c.bf16 %v4127, %v4125
        %v4136 = vunpack.c.l.b16 %v4128
        %v4137 = vunpack.c.l.b16 %v4129
        %v4138 = vunpack.c.h.b16 %v4128
        %v4139 = vunpack.c.h.b16 %v4129
        %v4140 = vunpack.c.l.b16 %v4130
        %v4141 = vunpack.c.l.b16 %v4131
        %v4142 = vunpack.c.h.b16 %v4130
        %v4143 = vunpack.c.h.b16 %v4131
        %v4144 = vpack.c.b16 %v4137, %v4136
        %v4145 = vpack.c.b16 %v4139, %v4138
        %v4146 = vpack.c.b16 %v4141, %v4140
        %v4147 = vpack.c.b16 %v4143, %v4142
        %4152 = vst [vmem:[#allocation2 + $0x4] sm:$0xff] %v4144
        %4153 = vst [vmem:[#allocation2 + $0x14] sm:$0xff] %v4145
        %4154 = vst [vmem:[#allocation2 + $0x24] sm:$0xff] %v4146
        %4155 = vst [vmem:[#allocation2 + $0x34] sm:$0xff] %v4147
        %v4156 = vld [vmem:[#allocation2] sm:$0xff]
        %v4157 = vld [vmem:[#allocation2 + $0x8] sm:$0xf]
        %v4158 = vld [vmem:[#allocation2 + $0x10] sm:$0xff]
        %v4159 = vld [vmem:[#allocation2 + $0x18] sm:$0xf]
        %v4160 = vld [vmem:[#allocation2 + $0x20] sm:$0xff]
        %v4161 = vld [vmem:[#allocation2 + $0x28] sm:$0xf]
        %v4162 = vld [vmem:[#allocation2 + $0x30] sm:$0xff]
        %v4163 = vld [vmem:[#allocation2 + $0x38] sm:$0xf]
        %s4164 = scalar_lea.vmem [#allocation3], 288
        %v4165 = vld [vmem:[%s4164] sm:$0xf]
        %v4166 = vld [vmem:[%s4164 + $0x4] sm:$0xf]
        %v4167 = vld [vmem:[%s4164 + $0x8] sm:$0xf]
        %v4168 = vld [vmem:[%s4164 + $0xc] sm:$0xf]
        %v4173 = vunpack.c.l.b16 %v4165
        %v4174 = vunpack.c.l.b16 %v4166
        %v4175 = vunpack.c.l.b16 %v4167
        %v4176 = vunpack.c.l.b16 %v4168
        %v4177 = vpack.c.b16 %v4174, %v4173
        %v4178 = vpack.c.b16 %v4176, %v4175
        %v4187 = vunpack.c.l.b16 %v4156
        %v4188 = vunpack.c.h.b16 %v4156
        %v4189 = vunpack.c.l.b16 %v4157
        %v4190 = vunpack.c.l.b16 %v4158
        %v4191 = vunpack.c.h.b16 %v4158
        %v4192 = vunpack.c.l.b16 %v4159
        %v4193 = vunpack.c.l.b16 %v4160
        %v4194 = vunpack.c.h.b16 %v4160
        %v4195 = vunpack.c.l.b16 %v4161
        %v4196 = vunpack.c.l.b16 %v4162
        %v4197 = vunpack.c.h.b16 %v4162
        %v4198 = vunpack.c.l.b16 %v4163
        %v4199 = vpack.c.b16 %v4190, %v4187
        %v4200 = vpack.c.b16 %v4191, %v4188
        %v4201 = vpack.c.b16 %v4192, %v4189
        %v4202 = vpack.c.b16 %v4196, %v4193
        %v4203 = vpack.c.b16 %v4197, %v4194
        %v4204 = vpack.c.b16 %v4198, %v4195
        %4205 = vrot.lane.b32.xlu0 %v4199, 17
        %v4206 = vpop.permute.xlu0 %4205
        %4207 = vrot.lane.b32.xlu0 %v4200, 17
        %v4208 = vpop.permute.xlu0 %4207
        %4209 = vrot.lane.b32.xlu0 %v4201, 17
        %v4210 = vpop.permute.xlu0 %4209
        %4211 = vrot.lane.b32.xlu0 %v4202, 17
        %v4212 = vpop.permute.xlu0 %4211
        %4213 = vrot.lane.b32.xlu0 %v4203, 17
        %v4214 = vpop.permute.xlu0 %4213
        %4215 = vrot.lane.b32.xlu0 %v4204, 17
        %v4216 = vpop.permute.xlu0 %4215
        %v4217 = vsel %vm446, %v4206, %v4208
        %v4218 = vsel %vm446, %v4208, %v4210
        %v4219 = vsel %vm446, %v4212, %v4214
        %v4220 = vsel %vm446, %v4214, %v4216
        %v4226 = vsel %vm1816, %v4177, 0
        %v4229 = vsel %vm1816, %v4178, 0
        %4231 = vmatprep.subr.bf16.mxu0 0
        %4232 = vmatpush1.bf16.msra.mxu0 0
        %4233 = vmatprep.subr.bf16.mxu0 0
        %4234 = vmatpush1.bf16.msra.mxu0 0
        %4235 = vmatprep.subr.bf16.mxu0 0
        %4236 = vmatpush1.bf16.msra.mxu0 0
        %4237 = vmatprep.subr.bf16.mxu0 0
        %4238 = vmatpush1.bf16.msra.mxu0 0
        %4239 = vmatprep.subr.bf16.mxu0 0
        %4240 = vmatpush1.bf16.msra.mxu0 0
        %4241 = vmatprep.subr.bf16.mxu0 0
        %4242 = vmatpush1.bf16.msra.mxu0 0
        %4243 = vmatprep.subr.bf16.mxu0 %v4220
        %4244 = vmatpush1.bf16.msra.mxu0 %v4219
        %4245 = vmatprep.subr.bf16.mxu0 %v4218
        %4246 = vmatpush1.bf16.msra.mxu0 %v4217
        %4247 = vmatprep.subr.bf16.mxu0 0
        %4248 = vmatpush2.bf16.msra.mxu0 0
        %4249 = vmatprep.subr.bf16.mxu0 0
        %4250 = vmatpush2.bf16.msra.mxu0 0
        %4251 = vmatprep.subr.bf16.mxu0 0
        %4252 = vmatpush2.bf16.msra.mxu0 0
        %4253 = vmatprep.subr.bf16.mxu0 0
        %4254 = vmatpush2.bf16.msra.mxu0 0
        %4255 = vmatprep.subr.bf16.mxu0 0
        %4256 = vmatpush2.bf16.msra.mxu0 0
        %4257 = vmatprep.subr.bf16.mxu0 0
        %4258 = vmatpush2.bf16.msra.mxu0 0
        %4259 = vmatprep.subr.bf16.mxu0 0
        %4260 = vmatpush2.bf16.msra.mxu0 0
        %4261 = vmatprep.subr.bf16.mxu0 0
        %4262 = vmatpush2.bf16.msra.mxu0 0
        %4263 = vmatprep.mubr.bf16.mxu0 0
        %4264 = vmatmul.mubr.bf16.gmra.mxu0 %v4226
        %v4265 = vpop.f32.mrf.mxu0
        %v4266 = vadd.f32 0.0, %v4265
        %v4267 = vpop.f32.mrf.mxu0
        %v4268 = vadd.f32 0.0, %v4267
        %v4269 = vpop.f32.mrf.mxu0
        %v4270 = vadd.f32 0.0, %v4269
        %v4271 = vpop.f32.mrf.mxu0
        %v4272 = vadd.f32 0.0, %v4271
        %4273 = vmatprep.mubr.bf16.mxu0 0
        %4274 = vmatmul.mubr.bf16.gmra.mxu0 %v4229
        %v4275 = vpop.f32.mrf.mxu0
        %v4276 = vadd.f32 0.0, %v4275
        %v4277 = vpop.f32.mrf.mxu0
        %v4278 = vadd.f32 0.0, %v4277
        %v4279 = vpop.f32.mrf.mxu0
        %v4280 = vadd.f32 0.0, %v4279
        %v4281 = vpop.f32.mrf.mxu0
        %v4282 = vadd.f32 0.0, %v4281
        %4283 = vdwg.mxu0
        %v4284 = vmul.f32 %v4266, %v528
        %v4285 = vmul.f32 %v4268, %v532
        %v4286 = vmul.f32 %v4270, %v528
        %v4287 = vmul.f32 %v4272, %v532
        %v4288 = vmul.f32 %v4276, %v528
        %v4289 = vmul.f32 %v4278, %v532
        %v4290 = vmul.f32 %v4280, %v528
        %v4291 = vmul.f32 %v4282, %v532
        %s4292 = scalar_lea.vmem [#allocation3], 304
        %v4293 = vld [vmem:[%s4292] sm:$0xf]
        %v4294 = vld [vmem:[%s4292 + $0x4] sm:$0xf]
        %v4295 = vld [vmem:[%s4292 + $0x8] sm:$0xf]
        %v4296 = vld [vmem:[%s4292 + $0xc] sm:$0xf]
        %v4301 = vunpack.c.l.b16 %v4293
        %v4302 = vunpack.c.l.b16 %v4294
        %v4303 = vunpack.c.l.b16 %v4295
        %v4304 = vunpack.c.l.b16 %v4296
        %v4305 = vpack.c.b16 %v4302, %v4301
        %v4306 = vpack.c.b16 %v4304, %v4303
        %4307 = vrot.lane.b32.xlu0 %v4199, 16
        %v4308 = vpop.permute.xlu0 %4307
        %4309 = vrot.lane.b32.xlu0 %v4200, 16
        %v4310 = vpop.permute.xlu0 %4309
        %4311 = vrot.lane.b32.xlu0 %v4201, 16
        %v4312 = vpop.permute.xlu0 %4311
        %4313 = vrot.lane.b32.xlu0 %v4202, 16
        %v4314 = vpop.permute.xlu0 %4313
        %4315 = vrot.lane.b32.xlu0 %v4203, 16
        %v4316 = vpop.permute.xlu0 %4315
        %4317 = vrot.lane.b32.xlu0 %v4204, 16
        %v4318 = vpop.permute.xlu0 %4317
        %v4319 = vsel %vm576, %v4308, %v4310
        %v4320 = vsel %vm576, %v4310, %v4312
        %v4321 = vsel %vm576, %v4314, %v4316
        %v4322 = vsel %vm576, %v4316, %v4318
        %v4328 = vsel %vm1816, %v4305, 0
        %v4331 = vsel %vm1816, %v4306, 0
        %4333 = vmatprep.subr.bf16.mxu0 0
        %4334 = vmatpush1.bf16.msra.mxu0 0
        %4335 = vmatprep.subr.bf16.mxu0 0
        %4336 = vmatpush1.bf16.msra.mxu0 0
        %4337 = vmatprep.subr.bf16.mxu0 0
        %4338 = vmatpush1.bf16.msra.mxu0 0
        %4339 = vmatprep.subr.bf16.mxu0 0
        %4340 = vmatpush1.bf16.msra.mxu0 0
        %4341 = vmatprep.subr.bf16.mxu0 0
        %4342 = vmatpush1.bf16.msra.mxu0 0
        %4343 = vmatprep.subr.bf16.mxu0 0
        %4344 = vmatpush1.bf16.msra.mxu0 0
        %4345 = vmatprep.subr.bf16.mxu0 %v4322
        %4346 = vmatpush1.bf16.msra.mxu0 %v4321
        %4347 = vmatprep.subr.bf16.mxu0 %v4320
        %4348 = vmatpush1.bf16.msra.mxu0 %v4319
        %4349 = vmatprep.subr.bf16.mxu0 0
        %4350 = vmatpush2.bf16.msra.mxu0 0
        %4351 = vmatprep.subr.bf16.mxu0 0
        %4352 = vmatpush2.bf16.msra.mxu0 0
        %4353 = vmatprep.subr.bf16.mxu0 0
        %4354 = vmatpush2.bf16.msra.mxu0 0
        %4355 = vmatprep.subr.bf16.mxu0 0
        %4356 = vmatpush2.bf16.msra.mxu0 0
        %4357 = vmatprep.subr.bf16.mxu0 0
        %4358 = vmatpush2.bf16.msra.mxu0 0
        %4359 = vmatprep.subr.bf16.mxu0 0
        %4360 = vmatpush2.bf16.msra.mxu0 0
        %4361 = vmatprep.subr.bf16.mxu0 0
        %4362 = vmatpush2.bf16.msra.mxu0 0
        %4363 = vmatprep.subr.bf16.mxu0 0
        %4364 = vmatpush2.bf16.msra.mxu0 0
        %4365 = vmatprep.mubr.bf16.mxu0 0
        %4366 = vmatmul.mubr.bf16.gmra.mxu0 %v4328
        %v4367 = vpop.f32.mrf.mxu0
        %v4368 = vadd.f32 0.0, %v4367
        %v4369 = vpop.f32.mrf.mxu0
        %v4370 = vadd.f32 0.0, %v4369
        %v4371 = vpop.f32.mrf.mxu0
        %v4372 = vadd.f32 0.0, %v4371
        %v4373 = vpop.f32.mrf.mxu0
        %v4374 = vadd.f32 0.0, %v4373
        %4375 = vmatprep.mubr.bf16.mxu0 0
        %4376 = vmatmul.mubr.bf16.gmra.mxu0 %v4331
        %v4377 = vpop.f32.mrf.mxu0
        %v4378 = vadd.f32 0.0, %v4377
        %v4379 = vpop.f32.mrf.mxu0
        %v4380 = vadd.f32 0.0, %v4379
        %v4381 = vpop.f32.mrf.mxu0
        %v4382 = vadd.f32 0.0, %v4381
        %v4383 = vpop.f32.mrf.mxu0
        %v4384 = vadd.f32 0.0, %v4383
        %4385 = vdwg.mxu0
        %v4386 = vadd.f32 %v4284, %v4368
        %v4387 = vadd.f32 %v4285, %v4370
        %v4388 = vadd.f32 %v4286, %v4372
        %v4389 = vadd.f32 %v4287, %v4374
        %v4390 = vadd.f32 %v4288, %v4378
        %v4391 = vadd.f32 %v4289, %v4380
        %v4392 = vadd.f32 %v4290, %v4382
        %v4393 = vadd.f32 %v4291, %v4384
        %s4394 = scalar_lea.vmem [#allocation3], 320
        %v4395 = vld [vmem:[%s4394] sm:$0xf]
        %v4396 = vld [vmem:[%s4394 + $0x4] sm:$0xf]
        %v4397 = vld [vmem:[%s4394 + $0x8] sm:$0xf]
        %v4398 = vld [vmem:[%s4394 + $0xc] sm:$0xf]
        %v4403 = vunpack.c.l.b16 %v4395
        %v4404 = vunpack.c.l.b16 %v4396
        %v4405 = vunpack.c.l.b16 %v4397
        %v4406 = vunpack.c.l.b16 %v4398
        %v4407 = vpack.c.b16 %v4404, %v4403
        %v4408 = vpack.c.b16 %v4406, %v4405
        %4409 = vrot.lane.b32.xlu0 %v4199, 15
        %v4410 = vpop.permute.xlu0 %4409
        %4411 = vrot.lane.b32.xlu0 %v4200, 15
        %v4412 = vpop.permute.xlu0 %4411
        %4413 = vrot.lane.b32.xlu0 %v4201, 15
        %v4414 = vpop.permute.xlu0 %4413
        %4415 = vrot.lane.b32.xlu0 %v4202, 15
        %v4416 = vpop.permute.xlu0 %4415
        %4417 = vrot.lane.b32.xlu0 %v4203, 15
        %v4418 = vpop.permute.xlu0 %4417
        %4419 = vrot.lane.b32.xlu0 %v4204, 15
        %v4420 = vpop.permute.xlu0 %4419
        %v4421 = vsel %vm693, %v4410, %v4412
        %v4422 = vsel %vm693, %v4412, %v4414
        %v4423 = vsel %vm693, %v4416, %v4418
        %v4424 = vsel %vm693, %v4418, %v4420
        %v4430 = vsel %vm1816, %v4407, 0
        %v4433 = vsel %vm1816, %v4408, 0
        %4435 = vmatprep.subr.bf16.mxu0 0
        %4436 = vmatpush1.bf16.msra.mxu0 0
        %4437 = vmatprep.subr.bf16.mxu0 0
        %4438 = vmatpush1.bf16.msra.mxu0 0
        %4439 = vmatprep.subr.bf16.mxu0 0
        %4440 = vmatpush1.bf16.msra.mxu0 0
        %4441 = vmatprep.subr.bf16.mxu0 0
        %4442 = vmatpush1.bf16.msra.mxu0 0
        %4443 = vmatprep.subr.bf16.mxu0 0
        %4444 = vmatpush1.bf16.msra.mxu0 0
        %4445 = vmatprep.subr.bf16.mxu0 0
        %4446 = vmatpush1.bf16.msra.mxu0 0
        %4447 = vmatprep.subr.bf16.mxu0 %v4424
        %4448 = vmatpush1.bf16.msra.mxu0 %v4423
        %4449 = vmatprep.subr.bf16.mxu0 %v4422
        %4450 = vmatpush1.bf16.msra.mxu0 %v4421
        %4451 = vmatprep.subr.bf16.mxu0 0
        %4452 = vmatpush2.bf16.msra.mxu0 0
        %4453 = vmatprep.subr.bf16.mxu0 0
        %4454 = vmatpush2.bf16.msra.mxu0 0
        %4455 = vmatprep.subr.bf16.mxu0 0
        %4456 = vmatpush2.bf16.msra.mxu0 0
        %4457 = vmatprep.subr.bf16.mxu0 0
        %4458 = vmatpush2.bf16.msra.mxu0 0
        %4459 = vmatprep.subr.bf16.mxu0 0
        %4460 = vmatpush2.bf16.msra.mxu0 0
        %4461 = vmatprep.subr.bf16.mxu0 0
        %4462 = vmatpush2.bf16.msra.mxu0 0
        %4463 = vmatprep.subr.bf16.mxu0 0
        %4464 = vmatpush2.bf16.msra.mxu0 0
        %4465 = vmatprep.subr.bf16.mxu0 0
        %4466 = vmatpush2.bf16.msra.mxu0 0
        %4467 = vmatprep.mubr.bf16.mxu0 0
        %4468 = vmatmul.mubr.bf16.gmra.mxu0 %v4430
        %v4469 = vpop.f32.mrf.mxu0
        %v4470 = vadd.f32 0.0, %v4469
        %v4471 = vpop.f32.mrf.mxu0
        %v4472 = vadd.f32 0.0, %v4471
        %v4473 = vpop.f32.mrf.mxu0
        %v4474 = vadd.f32 0.0, %v4473
        %v4475 = vpop.f32.mrf.mxu0
        %v4476 = vadd.f32 0.0, %v4475
        %4477 = vmatprep.mubr.bf16.mxu0 0
        %4478 = vmatmul.mubr.bf16.gmra.mxu0 %v4433
        %v4479 = vpop.f32.mrf.mxu0
        %v4480 = vadd.f32 0.0, %v4479
        %v4481 = vpop.f32.mrf.mxu0
        %v4482 = vadd.f32 0.0, %v4481
        %v4483 = vpop.f32.mrf.mxu0
        %v4484 = vadd.f32 0.0, %v4483
        %v4485 = vpop.f32.mrf.mxu0
        %v4486 = vadd.f32 0.0, %v4485
        %4487 = vdwg.mxu0
        %v4488 = vmul.f32 %v4470, %v773
        %v4489 = vmul.f32 %v4472, %v777
        %v4490 = vmul.f32 %v4474, %v773
        %v4491 = vmul.f32 %v4476, %v777
        %v4492 = vmul.f32 %v4480, %v773
        %v4493 = vmul.f32 %v4482, %v777
        %v4494 = vmul.f32 %v4484, %v773
        %v4495 = vmul.f32 %v4486, %v777
        %v4496 = vadd.f32 %v4386, %v4488
        %v4497 = vadd.f32 %v4387, %v4489
        %v4498 = vadd.f32 %v4388, %v4490
        %v4499 = vadd.f32 %v4389, %v4491
        %v4500 = vadd.f32 %v4390, %v4492
        %v4501 = vadd.f32 %v4391, %v4493
        %v4502 = vadd.f32 %v4392, %v4494
        %v4503 = vadd.f32 %v4393, %v4495
        %s4504 = scalar_lea.vmem [#allocation3], 336
        %v4505 = vld [vmem:[%s4504] sm:$0xf]
        %v4506 = vld [vmem:[%s4504 + $0x4] sm:$0xf]
        %v4507 = vld [vmem:[%s4504 + $0x8] sm:$0xf]
        %v4508 = vld [vmem:[%s4504 + $0xc] sm:$0xf]
        %v4513 = vunpack.c.l.b16 %v4505
        %v4514 = vunpack.c.l.b16 %v4506
        %v4515 = vunpack.c.l.b16 %v4507
        %v4516 = vunpack.c.l.b16 %v4508
        %v4517 = vpack.c.b16 %v4514, %v4513
        %v4518 = vpack.c.b16 %v4516, %v4515
        %4519 = vrot.lane.b32.xlu0 %v4199, 1
        %v4520 = vpop.permute.xlu0 %4519
        %4521 = vrot.lane.b32.xlu0 %v4200, 1
        %v4522 = vpop.permute.xlu0 %4521
        %4523 = vrot.lane.b32.xlu0 %v4201, 1
        %v4524 = vpop.permute.xlu0 %4523
        %4525 = vrot.lane.b32.xlu0 %v4202, 1
        %v4526 = vpop.permute.xlu0 %4525
        %4527 = vrot.lane.b32.xlu0 %v4203, 1
        %v4528 = vpop.permute.xlu0 %4527
        %4529 = vrot.lane.b32.xlu0 %v4204, 1
        %v4530 = vpop.permute.xlu0 %4529
        %v4531 = vsel %vm829, %v4520, %v4522
        %v4532 = vsel %vm829, %v4522, %v4524
        %v4533 = vsel %vm829, %v4526, %v4528
        %v4534 = vsel %vm829, %v4528, %v4530
        %v4540 = vsel %vm1816, %v4517, 0
        %v4543 = vsel %vm1816, %v4518, 0
        %4545 = vmatprep.subr.bf16.mxu0 0
        %4546 = vmatpush1.bf16.msra.mxu0 0
        %4547 = vmatprep.subr.bf16.mxu0 0
        %4548 = vmatpush1.bf16.msra.mxu0 0
        %4549 = vmatprep.subr.bf16.mxu0 0
        %4550 = vmatpush1.bf16.msra.mxu0 0
        %4551 = vmatprep.subr.bf16.mxu0 0
        %4552 = vmatpush1.bf16.msra.mxu0 0
        %4553 = vmatprep.subr.bf16.mxu0 0
        %4554 = vmatpush1.bf16.msra.mxu0 0
        %4555 = vmatprep.subr.bf16.mxu0 0
        %4556 = vmatpush1.bf16.msra.mxu0 0
        %4557 = vmatprep.subr.bf16.mxu0 %v4534
        %4558 = vmatpush1.bf16.msra.mxu0 %v4533
        %4559 = vmatprep.subr.bf16.mxu0 %v4532
        %4560 = vmatpush1.bf16.msra.mxu0 %v4531
        %4561 = vmatprep.subr.bf16.mxu0 0
        %4562 = vmatpush2.bf16.msra.mxu0 0
        %4563 = vmatprep.subr.bf16.mxu0 0
        %4564 = vmatpush2.bf16.msra.mxu0 0
        %4565 = vmatprep.subr.bf16.mxu0 0
        %4566 = vmatpush2.bf16.msra.mxu0 0
        %4567 = vmatprep.subr.bf16.mxu0 0
        %4568 = vmatpush2.bf16.msra.mxu0 0
        %4569 = vmatprep.subr.bf16.mxu0 0
        %4570 = vmatpush2.bf16.msra.mxu0 0
        %4571 = vmatprep.subr.bf16.mxu0 0
        %4572 = vmatpush2.bf16.msra.mxu0 0
        %4573 = vmatprep.subr.bf16.mxu0 0
        %4574 = vmatpush2.bf16.msra.mxu0 0
        %4575 = vmatprep.subr.bf16.mxu0 0
        %4576 = vmatpush2.bf16.msra.mxu0 0
        %4577 = vmatprep.mubr.bf16.mxu0 0
        %4578 = vmatmul.mubr.bf16.gmra.mxu0 %v4540
        %v4579 = vpop.f32.mrf.mxu0
        %v4580 = vadd.f32 0.0, %v4579
        %v4581 = vpop.f32.mrf.mxu0
        %v4582 = vadd.f32 0.0, %v4581
        %v4583 = vpop.f32.mrf.mxu0
        %v4584 = vadd.f32 0.0, %v4583
        %v4585 = vpop.f32.mrf.mxu0
        %v4586 = vadd.f32 0.0, %v4585
        %4587 = vmatprep.mubr.bf16.mxu0 0
        %4588 = vmatmul.mubr.bf16.gmra.mxu0 %v4543
        %v4589 = vpop.f32.mrf.mxu0
        %v4590 = vadd.f32 0.0, %v4589
        %v4591 = vpop.f32.mrf.mxu0
        %v4592 = vadd.f32 0.0, %v4591
        %v4593 = vpop.f32.mrf.mxu0
        %v4594 = vadd.f32 0.0, %v4593
        %v4595 = vpop.f32.mrf.mxu0
        %v4596 = vadd.f32 0.0, %v4595
        %4597 = vdwg.mxu0
        %v4598 = vmul.f32 %v4580, %v528
        %v4599 = vmul.f32 %v4582, %v532
        %v4600 = vmul.f32 %v4584, %v528
        %v4601 = vmul.f32 %v4586, %v532
        %v4602 = vmul.f32 %v4590, %v528
        %v4603 = vmul.f32 %v4592, %v532
        %v4604 = vmul.f32 %v4594, %v528
        %v4605 = vmul.f32 %v4596, %v532
        %v4606 = vadd.f32 %v4496, %v4598
        %v4607 = vadd.f32 %v4497, %v4599
        %v4608 = vadd.f32 %v4498, %v4600
        %v4609 = vadd.f32 %v4499, %v4601
        %v4610 = vadd.f32 %v4500, %v4602
        %v4611 = vadd.f32 %v4501, %v4603
        %v4612 = vadd.f32 %v4502, %v4604
        %v4613 = vadd.f32 %v4503, %v4605
        %v4614 = vld [vmem:[#allocation2 + $0x4] sm:$0xff]
        %v4615 = vld [vmem:[#allocation2 + $0x14] sm:$0xff]
        %v4616 = vld [vmem:[#allocation2 + $0x24] sm:$0xff]
        %v4617 = vld [vmem:[#allocation2 + $0x34] sm:$0xff]
        %s4618 = scalar_lea.vmem [#allocation3], 352
        %v4619 = vld [vmem:[%s4618] sm:$0xf]
        %v4620 = vld [vmem:[%s4618 + $0x4] sm:$0xf]
        %v4621 = vld [vmem:[%s4618 + $0x8] sm:$0xf]
        %v4622 = vld [vmem:[%s4618 + $0xc] sm:$0xf]
        %v4627 = vunpack.c.l.b16 %v4619
        %v4628 = vunpack.c.l.b16 %v4620
        %v4629 = vunpack.c.l.b16 %v4621
        %v4630 = vunpack.c.l.b16 %v4622
        %v4631 = vpack.c.b16 %v4628, %v4627
        %v4632 = vpack.c.b16 %v4630, %v4629
        %v4637 = vunpack.c.l.b16 %v4614
        %v4638 = vunpack.c.h.b16 %v4614
        %v4639 = vunpack.c.l.b16 %v4615
        %v4640 = vunpack.c.h.b16 %v4615
        %v4641 = vunpack.c.l.b16 %v4616
        %v4642 = vunpack.c.h.b16 %v4616
        %v4643 = vunpack.c.l.b16 %v4617
        %v4644 = vunpack.c.h.b16 %v4617
        %v4645 = vpack.c.b16 %v4639, %v4637
        %v4646 = vpack.c.b16 %v4640, %v4638
        %v4647 = vpack.c.b16 %v4643, %v4641
        %v4648 = vpack.c.b16 %v4644, %v4642
        %v4654 = vsel %vm1816, %v4631, 0
        %v4657 = vsel %vm1816, %v4632, 0
        %4659 = vmatprep.subr.bf16.mxu0 0
        %4660 = vmatpush1.bf16.msra.mxu0 0
        %4661 = vmatprep.subr.bf16.mxu0 0
        %4662 = vmatpush1.bf16.msra.mxu0 0
        %4663 = vmatprep.subr.bf16.mxu0 0
        %4664 = vmatpush1.bf16.msra.mxu0 0
        %4665 = vmatprep.subr.bf16.mxu0 0
        %4666 = vmatpush1.bf16.msra.mxu0 0
        %4667 = vmatprep.subr.bf16.mxu0 0
        %4668 = vmatpush1.bf16.msra.mxu0 0
        %4669 = vmatprep.subr.bf16.mxu0 0
        %4670 = vmatpush1.bf16.msra.mxu0 0
        %4671 = vmatprep.subr.bf16.mxu0 %v4648
        %4672 = vmatpush1.bf16.msra.mxu0 %v4647
        %4673 = vmatprep.subr.bf16.mxu0 %v4646
        %4674 = vmatpush1.bf16.msra.mxu0 %v4645
        %4675 = vmatprep.subr.bf16.mxu0 0
        %4676 = vmatpush2.bf16.msra.mxu0 0
        %4677 = vmatprep.subr.bf16.mxu0 0
        %4678 = vmatpush2.bf16.msra.mxu0 0
        %4679 = vmatprep.subr.bf16.mxu0 0
        %4680 = vmatpush2.bf16.msra.mxu0 0
        %4681 = vmatprep.subr.bf16.mxu0 0
        %4682 = vmatpush2.bf16.msra.mxu0 0
        %4683 = vmatprep.subr.bf16.mxu0 0
        %4684 = vmatpush2.bf16.msra.mxu0 0
        %4685 = vmatprep.subr.bf16.mxu0 0
        %4686 = vmatpush2.bf16.msra.mxu0 0
        %4687 = vmatprep.subr.bf16.mxu0 0
        %4688 = vmatpush2.bf16.msra.mxu0 0
        %4689 = vmatprep.subr.bf16.mxu0 0
        %4690 = vmatpush2.bf16.msra.mxu0 0
        %4691 = vmatprep.mubr.bf16.mxu0 0
        %4692 = vmatmul.mubr.bf16.gmra.mxu0 %v4654
        %v4693 = vpop.f32.mrf.mxu0
        %v4694 = vadd.f32 0.0, %v4693
        %v4695 = vpop.f32.mrf.mxu0
        %v4696 = vadd.f32 0.0, %v4695
        %v4697 = vpop.f32.mrf.mxu0
        %v4698 = vadd.f32 0.0, %v4697
        %v4699 = vpop.f32.mrf.mxu0
        %v4700 = vadd.f32 0.0, %v4699
        %4701 = vmatprep.mubr.bf16.mxu0 0
        %4702 = vmatmul.mubr.bf16.gmra.mxu0 %v4657
        %v4703 = vpop.f32.mrf.mxu0
        %v4704 = vadd.f32 0.0, %v4703
        %v4705 = vpop.f32.mrf.mxu0
        %v4706 = vadd.f32 0.0, %v4705
        %v4707 = vpop.f32.mrf.mxu0
        %v4708 = vadd.f32 0.0, %v4707
        %v4709 = vpop.f32.mrf.mxu0
        %v4710 = vadd.f32 0.0, %v4709
        %4711 = vdwg.mxu0
        %v4712 = vadd.f32 %v4606, %v4694
        %v4713 = vadd.f32 %v4607, %v4696
        %v4714 = vadd.f32 %v4608, %v4698
        %v4715 = vadd.f32 %v4609, %v4700
        %v4716 = vadd.f32 %v4610, %v4704
        %v4717 = vadd.f32 %v4611, %v4706
        %v4718 = vadd.f32 %v4612, %v4708
        %v4719 = vadd.f32 %v4613, %v4710
        %v4720 = vld [vmem:[#allocation2 + $0x4] sm:$0xff]
        %v4721 = vld [vmem:[#allocation2 + $0xc] sm:$0xf]
        %v4722 = vld [vmem:[#allocation2 + $0x14] sm:$0xff]
        %v4723 = vld [vmem:[#allocation2 + $0x1c] sm:$0xf]
        %v4724 = vld [vmem:[#allocation2 + $0x24] sm:$0xff]
        %v4725 = vld [vmem:[#allocation2 + $0x2c] sm:$0xf]
        %v4726 = vld [vmem:[#allocation2 + $0x34] sm:$0xff]
        %v4727 = vld [vmem:[#allocation2 + $0x3c] sm:$0xf]
        %s4728 = scalar_lea.vmem [#allocation3], 368
        %v4729 = vld [vmem:[%s4728] sm:$0xf]
        %v4730 = vld [vmem:[%s4728 + $0x4] sm:$0xf]
        %v4731 = vld [vmem:[%s4728 + $0x8] sm:$0xf]
        %v4732 = vld [vmem:[%s4728 + $0xc] sm:$0xf]
        %v4737 = vunpack.c.l.b16 %v4729
        %v4738 = vunpack.c.l.b16 %v4730
        %v4739 = vunpack.c.l.b16 %v4731
        %v4740 = vunpack.c.l.b16 %v4732
        %v4741 = vpack.c.b16 %v4738, %v4737
        %v4742 = vpack.c.b16 %v4740, %v4739
        %v4751 = vunpack.c.l.b16 %v4720
        %v4752 = vunpack.c.h.b16 %v4720
        %v4753 = vunpack.c.l.b16 %v4721
        %v4754 = vunpack.c.l.b16 %v4722
        %v4755 = vunpack.c.h.b16 %v4722
        %v4756 = vunpack.c.l.b16 %v4723
        %v4757 = vunpack.c.l.b16 %v4724
        %v4758 = vunpack.c.h.b16 %v4724
        %v4759 = vunpack.c.l.b16 %v4725
        %v4760 = vunpack.c.l.b16 %v4726
        %v4761 = vunpack.c.h.b16 %v4726
        %v4762 = vunpack.c.l.b16 %v4727
        %v4763 = vpack.c.b16 %v4754, %v4751
        %v4764 = vpack.c.b16 %v4755, %v4752
        %v4765 = vpack.c.b16 %v4756, %v4753
        %v4766 = vpack.c.b16 %v4760, %v4757
        %v4767 = vpack.c.b16 %v4761, %v4758
        %v4768 = vpack.c.b16 %v4762, %v4759
        %4769 = vrot.lane.b32.xlu0 %v4763, 127
        %v4770 = vpop.permute.xlu0 %4769
        %4771 = vrot.lane.b32.xlu0 %v4764, 127
        %v4772 = vpop.permute.xlu0 %4771
        %4773 = vrot.lane.b32.xlu0 %v4765, 127
        %v4774 = vpop.permute.xlu0 %4773
        %4775 = vrot.lane.b32.xlu0 %v4766, 127
        %v4776 = vpop.permute.xlu0 %4775
        %4777 = vrot.lane.b32.xlu0 %v4767, 127
        %v4778 = vpop.permute.xlu0 %4777
        %4779 = vrot.lane.b32.xlu0 %v4768, 127
        %v4780 = vpop.permute.xlu0 %4779
        %v4781 = vsel %vm1116, %v4770, %v4772
        %v4782 = vsel %vm1116, %v4772, %v4774
        %v4783 = vsel %vm1116, %v4776, %v4778
        %v4784 = vsel %vm1116, %v4778, %v4780
        %v4790 = vsel %vm1816, %v4741, 0
        %v4793 = vsel %vm1816, %v4742, 0
        %4795 = vmatprep.subr.bf16.mxu0 0
        %4796 = vmatpush1.bf16.msra.mxu0 0
        %4797 = vmatprep.subr.bf16.mxu0 0
        %4798 = vmatpush1.bf16.msra.mxu0 0
        %4799 = vmatprep.subr.bf16.mxu0 0
        %4800 = vmatpush1.bf16.msra.mxu0 0
        %4801 = vmatprep.subr.bf16.mxu0 0
        %4802 = vmatpush1.bf16.msra.mxu0 0
        %4803 = vmatprep.subr.bf16.mxu0 0
        %4804 = vmatpush1.bf16.msra.mxu0 0
        %4805 = vmatprep.subr.bf16.mxu0 0
        %4806 = vmatpush1.bf16.msra.mxu0 0
        %4807 = vmatprep.subr.bf16.mxu0 %v4784
        %4808 = vmatpush1.bf16.msra.mxu0 %v4783
        %4809 = vmatprep.subr.bf16.mxu0 %v4782
        %4810 = vmatpush1.bf16.msra.mxu0 %v4781
        %4811 = vmatprep.subr.bf16.mxu0 0
        %4812 = vmatpush2.bf16.msra.mxu0 0
        %4813 = vmatprep.subr.bf16.mxu0 0
        %4814 = vmatpush2.bf16.msra.mxu0 0
        %4815 = vmatprep.subr.bf16.mxu0 0
        %4816 = vmatpush2.bf16.msra.mxu0 0
        %4817 = vmatprep.subr.bf16.mxu0 0
        %4818 = vmatpush2.bf16.msra.mxu0 0
        %4819 = vmatprep.subr.bf16.mxu0 0
        %4820 = vmatpush2.bf16.msra.mxu0 0
        %4821 = vmatprep.subr.bf16.mxu0 0
        %4822 = vmatpush2.bf16.msra.mxu0 0
        %4823 = vmatprep.subr.bf16.mxu0 0
        %4824 = vmatpush2.bf16.msra.mxu0 0
        %4825 = vmatprep.subr.bf16.mxu0 0
        %4826 = vmatpush2.bf16.msra.mxu0 0
        %4827 = vmatprep.mubr.bf16.mxu0 0
        %4828 = vmatmul.mubr.bf16.gmra.mxu0 %v4790
        %v4829 = vpop.f32.mrf.mxu0
        %v4830 = vadd.f32 0.0, %v4829
        %v4831 = vpop.f32.mrf.mxu0
        %v4832 = vadd.f32 0.0, %v4831
        %v4833 = vpop.f32.mrf.mxu0
        %v4834 = vadd.f32 0.0, %v4833
        %v4835 = vpop.f32.mrf.mxu0
        %v4836 = vadd.f32 0.0, %v4835
        %4837 = vmatprep.mubr.bf16.mxu0 0
        %4838 = vmatmul.mubr.bf16.gmra.mxu0 %v4793
        %v4839 = vpop.f32.mrf.mxu0
        %v4840 = vadd.f32 0.0, %v4839
        %v4841 = vpop.f32.mrf.mxu0
        %v4842 = vadd.f32 0.0, %v4841
        %v4843 = vpop.f32.mrf.mxu0
        %v4844 = vadd.f32 0.0, %v4843
        %v4845 = vpop.f32.mrf.mxu0
        %v4846 = vadd.f32 0.0, %v4845
        %4847 = vdwg.mxu0
        %v4848 = vmul.f32 %v4830, %v773
        %v4849 = vmul.f32 %v4832, %v777
        %v4850 = vmul.f32 %v4834, %v773
        %v4851 = vmul.f32 %v4836, %v777
        %v4852 = vmul.f32 %v4840, %v773
        %v4853 = vmul.f32 %v4842, %v777
        %v4854 = vmul.f32 %v4844, %v773
        %v4855 = vmul.f32 %v4846, %v777
        %v4856 = vadd.f32 %v4712, %v4848
        %v4857 = vadd.f32 %v4713, %v4849
        %v4858 = vadd.f32 %v4714, %v4850
        %v4859 = vadd.f32 %v4715, %v4851
        %v4860 = vadd.f32 %v4716, %v4852
        %v4861 = vadd.f32 %v4717, %v4853
        %v4862 = vadd.f32 %v4718, %v4854
        %v4863 = vadd.f32 %v4719, %v4855
        %s4864 = scalar_lea.vmem [#allocation3], 384
        %v4865 = vld [vmem:[%s4864] sm:$0xf]
        %v4866 = vld [vmem:[%s4864 + $0x4] sm:$0xf]
        %v4867 = vld [vmem:[%s4864 + $0x8] sm:$0xf]
        %v4868 = vld [vmem:[%s4864 + $0xc] sm:$0xf]
        %v4873 = vunpack.c.l.b16 %v4865
        %v4874 = vunpack.c.l.b16 %v4866
        %v4875 = vunpack.c.l.b16 %v4867
        %v4876 = vunpack.c.l.b16 %v4868
        %v4877 = vpack.c.b16 %v4874, %v4873
        %v4878 = vpack.c.b16 %v4876, %v4875
        %4879 = vrot.lane.b32.xlu0 %v4763, 113
        %v4880 = vpop.permute.xlu0 %4879
        %4881 = vrot.lane.b32.xlu0 %v4764, 113
        %v4882 = vpop.permute.xlu0 %4881
        %4883 = vrot.lane.b32.xlu0 %v4765, 113
        %v4884 = vpop.permute.xlu0 %4883
        %4885 = vrot.lane.b32.xlu0 %v4766, 113
        %v4886 = vpop.permute.xlu0 %4885
        %4887 = vrot.lane.b32.xlu0 %v4767, 113
        %v4888 = vpop.permute.xlu0 %4887
        %4889 = vrot.lane.b32.xlu0 %v4768, 113
        %v4890 = vpop.permute.xlu0 %4889
        %v4891 = vsel %vm1241, %v4880, %v4882
        %v4892 = vsel %vm1241, %v4882, %v4884
        %v4893 = vsel %vm1241, %v4886, %v4888
        %v4894 = vsel %vm1241, %v4888, %v4890
        %v4900 = vsel %vm1816, %v4877, 0
        %v4903 = vsel %vm1816, %v4878, 0
        %4905 = vmatprep.subr.bf16.mxu0 0
        %4906 = vmatpush1.bf16.msra.mxu0 0
        %4907 = vmatprep.subr.bf16.mxu0 0
        %4908 = vmatpush1.bf16.msra.mxu0 0
        %4909 = vmatprep.subr.bf16.mxu0 0
        %4910 = vmatpush1.bf16.msra.mxu0 0
        %4911 = vmatprep.subr.bf16.mxu0 0
        %4912 = vmatpush1.bf16.msra.mxu0 0
        %4913 = vmatprep.subr.bf16.mxu0 0
        %4914 = vmatpush1.bf16.msra.mxu0 0
        %4915 = vmatprep.subr.bf16.mxu0 0
        %4916 = vmatpush1.bf16.msra.mxu0 0
        %4917 = vmatprep.subr.bf16.mxu0 %v4894
        %4918 = vmatpush1.bf16.msra.mxu0 %v4893
        %4919 = vmatprep.subr.bf16.mxu0 %v4892
        %4920 = vmatpush1.bf16.msra.mxu0 %v4891
        %4921 = vmatprep.subr.bf16.mxu0 0
        %4922 = vmatpush2.bf16.msra.mxu0 0
        %4923 = vmatprep.subr.bf16.mxu0 0
        %4924 = vmatpush2.bf16.msra.mxu0 0
        %4925 = vmatprep.subr.bf16.mxu0 0
        %4926 = vmatpush2.bf16.msra.mxu0 0
        %4927 = vmatprep.subr.bf16.mxu0 0
        %4928 = vmatpush2.bf16.msra.mxu0 0
        %4929 = vmatprep.subr.bf16.mxu0 0
        %4930 = vmatpush2.bf16.msra.mxu0 0
        %4931 = vmatprep.subr.bf16.mxu0 0
        %4932 = vmatpush2.bf16.msra.mxu0 0
        %4933 = vmatprep.subr.bf16.mxu0 0
        %4934 = vmatpush2.bf16.msra.mxu0 0
        %4935 = vmatprep.subr.bf16.mxu0 0
        %4936 = vmatpush2.bf16.msra.mxu0 0
        %4937 = vmatprep.mubr.bf16.mxu0 0
        %4938 = vmatmul.mubr.bf16.gmra.mxu0 %v4900
        %v4939 = vpop.f32.mrf.mxu0
        %v4940 = vadd.f32 0.0, %v4939
        %v4941 = vpop.f32.mrf.mxu0
        %v4942 = vadd.f32 0.0, %v4941
        %v4943 = vpop.f32.mrf.mxu0
        %v4944 = vadd.f32 0.0, %v4943
        %v4945 = vpop.f32.mrf.mxu0
        %v4946 = vadd.f32 0.0, %v4945
        %4947 = vmatprep.mubr.bf16.mxu0 0
        %4948 = vmatmul.mubr.bf16.gmra.mxu0 %v4903
        %v4949 = vpop.f32.mrf.mxu0
        %v4950 = vadd.f32 0.0, %v4949
        %v4951 = vpop.f32.mrf.mxu0
        %v4952 = vadd.f32 0.0, %v4951
        %v4953 = vpop.f32.mrf.mxu0
        %v4954 = vadd.f32 0.0, %v4953
        %v4955 = vpop.f32.mrf.mxu0
        %v4956 = vadd.f32 0.0, %v4955
        %4957 = vdwg.mxu0
        %v4958 = vmul.f32 %v4940, %v528
        %v4959 = vmul.f32 %v4942, %v532
        %v4960 = vmul.f32 %v4944, %v528
        %v4961 = vmul.f32 %v4946, %v532
        %v4962 = vmul.f32 %v4950, %v528
        %v4963 = vmul.f32 %v4952, %v532
        %v4964 = vmul.f32 %v4954, %v528
        %v4965 = vmul.f32 %v4956, %v532
        %v4966 = vadd.f32 %v4856, %v4958
        %v4967 = vadd.f32 %v4857, %v4959
        %v4968 = vadd.f32 %v4858, %v4960
        %v4969 = vadd.f32 %v4859, %v4961
        %v4970 = vadd.f32 %v4860, %v4962
        %v4971 = vadd.f32 %v4861, %v4963
        %v4972 = vadd.f32 %v4862, %v4964
        %v4973 = vadd.f32 %v4863, %v4965
        %s4974 = scalar_lea.vmem [#allocation3], 400
        %v4975 = vld [vmem:[%s4974] sm:$0xf]
        %v4976 = vld [vmem:[%s4974 + $0x4] sm:$0xf]
        %v4977 = vld [vmem:[%s4974 + $0x8] sm:$0xf]
        %v4978 = vld [vmem:[%s4974 + $0xc] sm:$0xf]
        %v4983 = vunpack.c.l.b16 %v4975
        %v4984 = vunpack.c.l.b16 %v4976
        %v4985 = vunpack.c.l.b16 %v4977
        %v4986 = vunpack.c.l.b16 %v4978
        %v4987 = vpack.c.b16 %v4984, %v4983
        %v4988 = vpack.c.b16 %v4986, %v4985
        %4989 = vrot.lane.b32.xlu0 %v4763, 112
        %v4990 = vpop.permute.xlu0 %4989
        %4991 = vrot.lane.b32.xlu0 %v4764, 112
        %v4992 = vpop.permute.xlu0 %4991
        %4993 = vrot.lane.b32.xlu0 %v4765, 112
        %v4994 = vpop.permute.xlu0 %4993
        %4995 = vrot.lane.b32.xlu0 %v4766, 112
        %v4996 = vpop.permute.xlu0 %4995
        %4997 = vrot.lane.b32.xlu0 %v4767, 112
        %v4998 = vpop.permute.xlu0 %4997
        %4999 = vrot.lane.b32.xlu0 %v4768, 112
        %v5000 = vpop.permute.xlu0 %4999
        %v5001 = vsel %vm1366, %v4990, %v4992
        %v5002 = vsel %vm1366, %v4992, %v4994
        %v5003 = vsel %vm1366, %v4996, %v4998
        %v5004 = vsel %vm1366, %v4998, %v5000
        %v5010 = vsel %vm1816, %v4987, 0
        %v5013 = vsel %vm1816, %v4988, 0
        %5015 = vmatprep.subr.bf16.mxu0 0
        %5016 = vmatpush1.bf16.msra.mxu0 0
        %5017 = vmatprep.subr.bf16.mxu0 0
        %5018 = vmatpush1.bf16.msra.mxu0 0
        %5019 = vmatprep.subr.bf16.mxu0 0
        %5020 = vmatpush1.bf16.msra.mxu0 0
        %5021 = vmatprep.subr.bf16.mxu0 0
        %5022 = vmatpush1.bf16.msra.mxu0 0
        %5023 = vmatprep.subr.bf16.mxu0 0
        %5024 = vmatpush1.bf16.msra.mxu0 0
        %5025 = vmatprep.subr.bf16.mxu0 0
        %5026 = vmatpush1.bf16.msra.mxu0 0
        %5027 = vmatprep.subr.bf16.mxu0 %v5004
        %5028 = vmatpush1.bf16.msra.mxu0 %v5003
        %5029 = vmatprep.subr.bf16.mxu0 %v5002
        %5030 = vmatpush1.bf16.msra.mxu0 %v5001
        %5031 = vmatprep.subr.bf16.mxu0 0
        %5032 = vmatpush2.bf16.msra.mxu0 0
        %5033 = vmatprep.subr.bf16.mxu0 0
        %5034 = vmatpush2.bf16.msra.mxu0 0
        %5035 = vmatprep.subr.bf16.mxu0 0
        %5036 = vmatpush2.bf16.msra.mxu0 0
        %5037 = vmatprep.subr.bf16.mxu0 0
        %5038 = vmatpush2.bf16.msra.mxu0 0
        %5039 = vmatprep.subr.bf16.mxu0 0
        %5040 = vmatpush2.bf16.msra.mxu0 0
        %5041 = vmatprep.subr.bf16.mxu0 0
        %5042 = vmatpush2.bf16.msra.mxu0 0
        %5043 = vmatprep.subr.bf16.mxu0 0
        %5044 = vmatpush2.bf16.msra.mxu0 0
        %5045 = vmatprep.subr.bf16.mxu0 0
        %5046 = vmatpush2.bf16.msra.mxu0 0
        %5047 = vmatprep.mubr.bf16.mxu0 0
        %5048 = vmatmul.mubr.bf16.gmra.mxu0 %v5010
        %v5049 = vpop.f32.mrf.mxu0
        %v5050 = vadd.f32 0.0, %v5049
        %v5051 = vpop.f32.mrf.mxu0
        %v5052 = vadd.f32 0.0, %v5051
        %v5053 = vpop.f32.mrf.mxu0
        %v5054 = vadd.f32 0.0, %v5053
        %v5055 = vpop.f32.mrf.mxu0
        %v5056 = vadd.f32 0.0, %v5055
        %5057 = vmatprep.mubr.bf16.mxu0 0
        %5058 = vmatmul.mubr.bf16.gmra.mxu0 %v5013
        %v5059 = vpop.f32.mrf.mxu0
        %v5060 = vadd.f32 0.0, %v5059
        %v5061 = vpop.f32.mrf.mxu0
        %v5062 = vadd.f32 0.0, %v5061
        %v5063 = vpop.f32.mrf.mxu0
        %v5064 = vadd.f32 0.0, %v5063
        %v5065 = vpop.f32.mrf.mxu0
        %v5066 = vadd.f32 0.0, %v5065
        %5067 = vdwg.mxu0
        %v5068 = vadd.f32 %v4966, %v5050
        %v5069 = vadd.f32 %v4967, %v5052
        %v5070 = vadd.f32 %v4968, %v5054
        %v5071 = vadd.f32 %v4969, %v5056
        %v5072 = vadd.f32 %v4970, %v5060
        %v5073 = vadd.f32 %v4971, %v5062
        %v5074 = vadd.f32 %v4972, %v5064
        %v5075 = vadd.f32 %v4973, %v5066
        %s5076 = scalar_lea.vmem [#allocation3], 416
        %v5077 = vld [vmem:[%s5076] sm:$0xf]
        %v5078 = vld [vmem:[%s5076 + $0x4] sm:$0xf]
        %v5079 = vld [vmem:[%s5076 + $0x8] sm:$0xf]
        %v5080 = vld [vmem:[%s5076 + $0xc] sm:$0xf]
        %v5085 = vunpack.c.l.b16 %v5077
        %v5086 = vunpack.c.l.b16 %v5078
        %v5087 = vunpack.c.l.b16 %v5079
        %v5088 = vunpack.c.l.b16 %v5080
        %v5089 = vpack.c.b16 %v5086, %v5085
        %v5090 = vpack.c.b16 %v5088, %v5087
        %5091 = vrot.lane.b32.xlu0 %v4763, 111
        %v5092 = vpop.permute.xlu0 %5091
        %5093 = vrot.lane.b32.xlu0 %v4764, 111
        %v5094 = vpop.permute.xlu0 %5093
        %5095 = vrot.lane.b32.xlu0 %v4765, 111
        %v5096 = vpop.permute.xlu0 %5095
        %5097 = vrot.lane.b32.xlu0 %v4766, 111
        %v5098 = vpop.permute.xlu0 %5097
        %5099 = vrot.lane.b32.xlu0 %v4767, 111
        %v5100 = vpop.permute.xlu0 %5099
        %5101 = vrot.lane.b32.xlu0 %v4768, 111
        %v5102 = vpop.permute.xlu0 %5101
        %v5103 = vsel %vm1483, %v5092, %v5094
        %v5104 = vsel %vm1483, %v5094, %v5096
        %v5105 = vsel %vm1483, %v5098, %v5100
        %v5106 = vsel %vm1483, %v5100, %v5102
        %v5112 = vsel %vm1816, %v5089, 0
        %v5115 = vsel %vm1816, %v5090, 0
        %5117 = vmatprep.subr.bf16.mxu0 0
        %5118 = vmatpush1.bf16.msra.mxu0 0
        %5119 = vmatprep.subr.bf16.mxu0 0
        %5120 = vmatpush1.bf16.msra.mxu0 0
        %5121 = vmatprep.subr.bf16.mxu0 0
        %5122 = vmatpush1.bf16.msra.mxu0 0
        %5123 = vmatprep.subr.bf16.mxu0 0
        %5124 = vmatpush1.bf16.msra.mxu0 0
        %5125 = vmatprep.subr.bf16.mxu0 0
        %5126 = vmatpush1.bf16.msra.mxu0 0
        %5127 = vmatprep.subr.bf16.mxu0 0
        %5128 = vmatpush1.bf16.msra.mxu0 0
        %5129 = vmatprep.subr.bf16.mxu0 %v5106
        %5130 = vmatpush1.bf16.msra.mxu0 %v5105
        %5131 = vmatprep.subr.bf16.mxu0 %v5104
        %5132 = vmatpush1.bf16.msra.mxu0 %v5103
        %5133 = vmatprep.subr.bf16.mxu0 0
        %5134 = vmatpush2.bf16.msra.mxu0 0
        %5135 = vmatprep.subr.bf16.mxu0 0
        %5136 = vmatpush2.bf16.msra.mxu0 0
        %5137 = vmatprep.subr.bf16.mxu0 0
        %5138 = vmatpush2.bf16.msra.mxu0 0
        %5139 = vmatprep.subr.bf16.mxu0 0
        %5140 = vmatpush2.bf16.msra.mxu0 0
        %5141 = vmatprep.subr.bf16.mxu0 0
        %5142 = vmatpush2.bf16.msra.mxu0 0
        %5143 = vmatprep.subr.bf16.mxu0 0
        %5144 = vmatpush2.bf16.msra.mxu0 0
        %5145 = vmatprep.subr.bf16.mxu0 0
        %5146 = vmatpush2.bf16.msra.mxu0 0
        %5147 = vmatprep.subr.bf16.mxu0 0
        %5148 = vmatpush2.bf16.msra.mxu0 0
        %5149 = vmatprep.mubr.bf16.mxu0 0
        %5150 = vmatmul.mubr.bf16.gmra.mxu0 %v5112
        %v5151 = vpop.f32.mrf.mxu0
        %v5152 = vadd.f32 0.0, %v5151
        %v5153 = vpop.f32.mrf.mxu0
        %v5154 = vadd.f32 0.0, %v5153
        %v5155 = vpop.f32.mrf.mxu0
        %v5156 = vadd.f32 0.0, %v5155
        %v5157 = vpop.f32.mrf.mxu0
        %v5158 = vadd.f32 0.0, %v5157
        %5159 = vmatprep.mubr.bf16.mxu0 0
        %5160 = vmatmul.mubr.bf16.gmra.mxu0 %v5115
        %v5161 = vpop.f32.mrf.mxu0
        %v5162 = vadd.f32 0.0, %v5161
        %v5163 = vpop.f32.mrf.mxu0
        %v5164 = vadd.f32 0.0, %v5163
        %v5165 = vpop.f32.mrf.mxu0
        %v5166 = vadd.f32 0.0, %v5165
        %v5167 = vpop.f32.mrf.mxu0
        %v5168 = vadd.f32 0.0, %v5167
        %5169 = vdwg.mxu0
        %v5170 = vmul.f32 %v5152, %v773
        %v5171 = vmul.f32 %v5154, %v777
        %v5172 = vmul.f32 %v5156, %v773
        %v5173 = vmul.f32 %v5158, %v777
        %v5174 = vmul.f32 %v5162, %v773
        %v5175 = vmul.f32 %v5164, %v777
        %v5176 = vmul.f32 %v5166, %v773
        %v5177 = vmul.f32 %v5168, %v777
        %v5178 = vadd.f32 %v5068, %v5170
        %v5179 = vadd.f32 %v5069, %v5171
        %v5180 = vadd.f32 %v5070, %v5172
        %v5181 = vadd.f32 %v5071, %v5173
        %v5182 = vadd.f32 %v5072, %v5174
        %v5183 = vadd.f32 %v5073, %v5175
        %v5184 = vadd.f32 %v5074, %v5176
        %v5185 = vadd.f32 %v5075, %v5177
        %s5186 = scalar_lea.vmem %s4, 96
        %v5187 = vld [vmem:[%s5186] sm:$0xff]
        %v5188 = vld [vmem:[%s5186 + $0x8] sm:$0xff]
        %v5189 = vld [vmem:[%s5186 + $0x10] sm:$0xff]
        %v5190 = vld [vmem:[%s5186 + $0x18] sm:$0xff]
        %s5191 = scalar_lea.vmem %s5, 96
        %v5192 = vld [vmem:[%s5191] sm:$0xff]
        %v5193 = vld [vmem:[%s5191 + $0x8] sm:$0xff]
        %v5194 = vld [vmem:[%s5191 + $0x10] sm:$0xff]
        %v5195 = vld [vmem:[%s5191 + $0x18] sm:$0xff]
        %v5196 = vadd.f32 %v5178, %v5179
        %5197 = vadd.xlane.f32.xlu0 %v5196
        %v5198 = vpop.xlane.xlu0 %5197
        %v5199 = vadd.f32 %v5180, %v5181
        %5200 = vadd.xlane.f32.xlu0 %v5199
        %v5201 = vpop.xlane.xlu0 %5200
        %v5202 = vadd.f32 %v5182, %v5183
        %5203 = vadd.xlane.f32.xlu0 %v5202
        %v5204 = vpop.xlane.xlu0 %5203
        %v5205 = vadd.f32 %v5184, %v5185
        %5206 = vadd.xlane.f32.xlu0 %v5205
        %v5207 = vpop.xlane.xlu0 %5206
        %v5208 = vmul.f32 %v5198, %v1595
        %v5209 = vmul.f32 %v5201, %v1595
        %v5210 = vmul.f32 %v5204, %v1595
        %v5211 = vmul.f32 %v5207, %v1595
        %v5212 = vmul.f32 %v5178, %v5178
        %v5213 = vmul.f32 %v5179, %v5179
        %v5214 = vmul.f32 %v5180, %v5180
        %v5215 = vmul.f32 %v5181, %v5181
        %v5216 = vmul.f32 %v5182, %v5182
        %v5217 = vmul.f32 %v5183, %v5183
        %v5218 = vmul.f32 %v5184, %v5184
        %v5219 = vmul.f32 %v5185, %v5185
        %v5220 = vadd.f32 %v5212, %v5213
        %5221 = vadd.xlane.f32.xlu0 %v5220
        %v5222 = vpop.xlane.xlu0 %5221
        %v5223 = vadd.f32 %v5214, %v5215
        %5224 = vadd.xlane.f32.xlu0 %v5223
        %v5225 = vpop.xlane.xlu0 %5224
        %v5226 = vadd.f32 %v5216, %v5217
        %5227 = vadd.xlane.f32.xlu0 %v5226
        %v5228 = vpop.xlane.xlu0 %5227
        %v5229 = vadd.f32 %v5218, %v5219
        %5230 = vadd.xlane.f32.xlu0 %v5229
        %v5231 = vpop.xlane.xlu0 %5230
        %v5232 = vmul.f32 %v5222, %v1595
        %v5233 = vmul.f32 %v5225, %v1595
        %v5234 = vmul.f32 %v5228, %v1595
        %v5235 = vmul.f32 %v5231, %v1595
        %v5236 = vmul.f32 %v5208, %v5208
        %v5237 = vmul.f32 %v5209, %v5209
        %v5238 = vmul.f32 %v5210, %v5210
        %v5239 = vmul.f32 %v5211, %v5211
        %v5240 = vsub.f32 %v5232, %v5236
        %v5241 = vsub.f32 %v5233, %v5237
        %v5242 = vsub.f32 %v5234, %v5238
        %v5243 = vsub.f32 %v5235, %v5239
        %v5244 = vmax.f32 %v5240, 0.0
        %v5245 = vmax.f32 %v5241, 0.0
        %v5246 = vmax.f32 %v5242, 0.0
        %v5247 = vmax.f32 %v5243, 0.0
        %v5248 = vadd.f32 %v5244, 1e-05
        %v5249 = vadd.f32 %v5245, 1e-05
        %v5250 = vadd.f32 %v5246, 1e-05
        %v5251 = vadd.f32 %v5247, 1e-05
        %v5252 = vrsqrt.pop %v5248
        %v5253 = vrsqrt.pop %v5249
        %v5254 = vrsqrt.pop %v5250
        %v5255 = vrsqrt.pop %v5251
        %v5256 = vmul.f32 %v5252, %v5187
        %v5257 = vmul.f32 %v5253, %v5188
        %v5258 = vmul.f32 %v5254, %v5189
        %v5259 = vmul.f32 %v5255, %v5190
        %v5260 = vmul.f32 %v5208, %v5256
        %v5261 = vmul.f32 %v5209, %v5257
        %v5262 = vmul.f32 %v5210, %v5258
        %v5263 = vmul.f32 %v5211, %v5259
        %v5264 = vsub.f32 %v5192, %v5260
        %v5265 = vsub.f32 %v5193, %v5261
        %v5266 = vsub.f32 %v5194, %v5262
        %v5267 = vsub.f32 %v5195, %v5263
        %5269 = vset.pattern.permute.xlu0 0
        %5270 = vperm.xlu0 %5269, %v5256
        %v5271 = vpop.permute.xlu0 %5270
        %5274 = vset.pattern.permute.xlu0 0
        %5275 = vperm.xlu0 %5274, %v5257
        %v5276 = vpop.permute.xlu0 %5275
        %5279 = vset.pattern.permute.xlu0 0
        %5280 = vperm.xlu0 %5279, %v5258
        %v5281 = vpop.permute.xlu0 %5280
        %5284 = vset.pattern.permute.xlu0 0
        %5285 = vperm.xlu0 %5284, %v5259
        %v5286 = vpop.permute.xlu0 %5285
        %v5288 = vmul.f32 %v5178, %v5271
        %v5289 = vmul.f32 %v5179, %v5271
        %v5290 = vmul.f32 %v5180, %v5276
        %v5291 = vmul.f32 %v5181, %v5276
        %v5292 = vmul.f32 %v5182, %v5281
        %v5293 = vmul.f32 %v5183, %v5281
        %v5294 = vmul.f32 %v5184, %v5286
        %v5295 = vmul.f32 %v5185, %v5286
        %5297 = vset.pattern.permute.xlu0 0
        %5298 = vperm.xlu0 %5297, %v5264
        %v5299 = vpop.permute.xlu0 %5298
        %5302 = vset.pattern.permute.xlu0 0
        %5303 = vperm.xlu0 %5302, %v5265
        %v5304 = vpop.permute.xlu0 %5303
        %5307 = vset.pattern.permute.xlu0 0
        %5308 = vperm.xlu0 %5307, %v5266
        %v5309 = vpop.permute.xlu0 %5308
        %5312 = vset.pattern.permute.xlu0 0
        %5313 = vperm.xlu0 %5312, %v5267
        %v5314 = vpop.permute.xlu0 %5313
        %v5316 = vadd.f32 %v5288, %v5299
        %v5317 = vadd.f32 %v5289, %v5299
        %v5318 = vadd.f32 %v5290, %v5304
        %v5319 = vadd.f32 %v5291, %v5304
        %v5320 = vadd.f32 %v5292, %v5309
        %v5321 = vadd.f32 %v5293, %v5309
        %v5322 = vadd.f32 %v5294, %v5314
        %v5323 = vadd.f32 %v5295, %v5314
        %v5324 = vmax.f32 %v5316, 0.0
        %v5325 = vmax.f32 %v5317, 0.0
        %v5326 = vmax.f32 %v5318, 0.0
        %v5327 = vmax.f32 %v5319, 0.0
        %v5328 = vmax.f32 %v5320, 0.0
        %v5329 = vmax.f32 %v5321, 0.0
        %v5330 = vmax.f32 %v5322, 0.0
        %v5331 = vmax.f32 %v5323, 0.0
        %v5332 = vpack.c.bf16 %v5326, %v5324
        %v5333 = vpack.c.bf16 %v5327, %v5325
        %v5334 = vpack.c.bf16 %v5330, %v5328
        %v5335 = vpack.c.bf16 %v5331, %v5329
        %v5336 = vld [vmem:[%s6] sm:$0xf]
        %v5337 = vld [vmem:[%s6 + $0x4] sm:$0xf]
        %v5338 = vld [vmem:[%s6 + $0x8] sm:$0xf]
        %v5339 = vld [vmem:[%s6 + $0xc] sm:$0xf]
        %v5344 = vunpack.c.l.b16 %v5336
        %v5345 = vunpack.c.l.b16 %v5337
        %v5346 = vunpack.c.l.b16 %v5338
        %v5347 = vunpack.c.l.b16 %v5339
        %v5348 = vpack.c.b16 %v5345, %v5344
        %v5349 = vpack.c.b16 %v5347, %v5346
        %v5351 = vsel %vm1816, %v5348, 0
        %v5354 = vsel %vm1816, %v5349, 0
        %5356 = vmatprep.subr.bf16.mxu0 0
        %5357 = vmatpush1.bf16.msra.mxu0 0
        %5358 = vmatprep.subr.bf16.mxu0 0
        %5359 = vmatpush1.bf16.msra.mxu0 0
        %5360 = vmatprep.subr.bf16.mxu0 0
        %5361 = vmatpush1.bf16.msra.mxu0 0
        %5362 = vmatprep.subr.bf16.mxu0 0
        %5363 = vmatpush1.bf16.msra.mxu0 0
        %5364 = vmatprep.subr.bf16.mxu0 0
        %5365 = vmatpush1.bf16.msra.mxu0 0
        %5366 = vmatprep.subr.bf16.mxu0 0
        %5367 = vmatpush1.bf16.msra.mxu0 0
        %5368 = vmatprep.subr.bf16.mxu0 %v5335
        %5369 = vmatpush1.bf16.msra.mxu0 %v5334
        %5370 = vmatprep.subr.bf16.mxu0 %v5333
        %5371 = vmatpush1.bf16.msra.mxu0 %v5332
        %5372 = vmatprep.subr.bf16.mxu0 0
        %5373 = vmatpush2.bf16.msra.mxu0 0
        %5374 = vmatprep.subr.bf16.mxu0 0
        %5375 = vmatpush2.bf16.msra.mxu0 0
        %5376 = vmatprep.subr.bf16.mxu0 0
        %5377 = vmatpush2.bf16.msra.mxu0 0
        %5378 = vmatprep.subr.bf16.mxu0 0
        %5379 = vmatpush2.bf16.msra.mxu0 0
        %5380 = vmatprep.subr.bf16.mxu0 0
        %5381 = vmatpush2.bf16.msra.mxu0 0
        %5382 = vmatprep.subr.bf16.mxu0 0
        %5383 = vmatpush2.bf16.msra.mxu0 0
        %5384 = vmatprep.subr.bf16.mxu0 0
        %5385 = vmatpush2.bf16.msra.mxu0 0
        %5386 = vmatprep.subr.bf16.mxu0 0
        %5387 = vmatpush2.bf16.msra.mxu0 0
        %5388 = vmatprep.mubr.bf16.mxu0 0
        %5389 = vmatmul.mubr.bf16.gmra.mxu0 %v5351
        %v5390 = vpop.f32.mrf.mxu0
        %v5391 = vadd.f32 0.0, %v5390
        %v5392 = vpop.f32.mrf.mxu0
        %v5393 = vadd.f32 0.0, %v5392
        %v5394 = vpop.f32.mrf.mxu0
        %v5395 = vadd.f32 0.0, %v5394
        %v5396 = vpop.f32.mrf.mxu0
        %v5397 = vadd.f32 0.0, %v5396
        %5398 = vmatprep.mubr.bf16.mxu0 0
        %5399 = vmatmul.mubr.bf16.gmra.mxu0 %v5354
        %v5400 = vpop.f32.mrf.mxu0
        %v5401 = vadd.f32 0.0, %v5400
        %v5402 = vpop.f32.mrf.mxu0
        %v5403 = vadd.f32 0.0, %v5402
        %v5404 = vpop.f32.mrf.mxu0
        %v5405 = vadd.f32 0.0, %v5404
        %v5406 = vpop.f32.mrf.mxu0
        %v5407 = vadd.f32 0.0, %v5406
        %5408 = vdwg.mxu0
        %v5409 = vld [vmem:[%s7] sm:$0xff]
        %v5410 = vld [vmem:[%s7 + $0x8] sm:$0xff]
        %v5411 = vld [vmem:[%s7 + $0x10] sm:$0xff]
        %v5412 = vld [vmem:[%s7 + $0x18] sm:$0xff]
        %v5413 = vld [vmem:[%s8] sm:$0xff]
        %v5414 = vld [vmem:[%s8 + $0x8] sm:$0xff]
        %v5415 = vld [vmem:[%s8 + $0x10] sm:$0xff]
        %v5416 = vld [vmem:[%s8 + $0x18] sm:$0xff]
        %v5417 = vadd.f32 %v5391, %v5393
        %5418 = vadd.xlane.f32.xlu0 %v5417
        %v5419 = vpop.xlane.xlu0 %5418
        %v5420 = vadd.f32 %v5395, %v5397
        %5421 = vadd.xlane.f32.xlu0 %v5420
        %v5422 = vpop.xlane.xlu0 %5421
        %v5423 = vadd.f32 %v5401, %v5403
        %5424 = vadd.xlane.f32.xlu0 %v5423
        %v5425 = vpop.xlane.xlu0 %5424
        %v5426 = vadd.f32 %v5405, %v5407
        %5427 = vadd.xlane.f32.xlu0 %v5426
        %v5428 = vpop.xlane.xlu0 %5427
        %v5429 = vmul.f32 %v5419, %v1595
        %v5430 = vmul.f32 %v5422, %v1595
        %v5431 = vmul.f32 %v5425, %v1595
        %v5432 = vmul.f32 %v5428, %v1595
        %v5433 = vmul.f32 %v5391, %v5391
        %v5434 = vmul.f32 %v5393, %v5393
        %v5435 = vmul.f32 %v5395, %v5395
        %v5436 = vmul.f32 %v5397, %v5397
        %v5437 = vmul.f32 %v5401, %v5401
        %v5438 = vmul.f32 %v5403, %v5403
        %v5439 = vmul.f32 %v5405, %v5405
        %v5440 = vmul.f32 %v5407, %v5407
        %v5441 = vadd.f32 %v5433, %v5434
        %5442 = vadd.xlane.f32.xlu0 %v5441
        %v5443 = vpop.xlane.xlu0 %5442
        %v5444 = vadd.f32 %v5435, %v5436
        %5445 = vadd.xlane.f32.xlu0 %v5444
        %v5446 = vpop.xlane.xlu0 %5445
        %v5447 = vadd.f32 %v5437, %v5438
        %5448 = vadd.xlane.f32.xlu0 %v5447
        %v5449 = vpop.xlane.xlu0 %5448
        %v5450 = vadd.f32 %v5439, %v5440
        %5451 = vadd.xlane.f32.xlu0 %v5450
        %v5452 = vpop.xlane.xlu0 %5451
        %v5453 = vmul.f32 %v5443, %v1595
        %v5454 = vmul.f32 %v5446, %v1595
        %v5455 = vmul.f32 %v5449, %v1595
        %v5456 = vmul.f32 %v5452, %v1595
        %v5457 = vmul.f32 %v5429, %v5429
        %v5458 = vmul.f32 %v5430, %v5430
        %v5459 = vmul.f32 %v5431, %v5431
        %v5460 = vmul.f32 %v5432, %v5432
        %v5461 = vsub.f32 %v5453, %v5457
        %v5462 = vsub.f32 %v5454, %v5458
        %v5463 = vsub.f32 %v5455, %v5459
        %v5464 = vsub.f32 %v5456, %v5460
        %v5465 = vmax.f32 %v5461, 0.0
        %v5466 = vmax.f32 %v5462, 0.0
        %v5467 = vmax.f32 %v5463, 0.0
        %v5468 = vmax.f32 %v5464, 0.0
        %v5469 = vadd.f32 %v5465, 1e-05
        %v5470 = vadd.f32 %v5466, 1e-05
        %v5471 = vadd.f32 %v5467, 1e-05
        %v5472 = vadd.f32 %v5468, 1e-05
        %v5473 = vrsqrt.pop %v5469
        %v5474 = vrsqrt.pop %v5470
        %v5475 = vrsqrt.pop %v5471
        %v5476 = vrsqrt.pop %v5472
        %v5477 = vmul.f32 %v5473, %v5409
        %v5478 = vmul.f32 %v5474, %v5410
        %v5479 = vmul.f32 %v5475, %v5411
        %v5480 = vmul.f32 %v5476, %v5412
        %v5481 = vmul.f32 %v5429, %v5477
        %v5482 = vmul.f32 %v5430, %v5478
        %v5483 = vmul.f32 %v5431, %v5479
        %v5484 = vmul.f32 %v5432, %v5480
        %v5485 = vsub.f32 %v5413, %v5481
        %v5486 = vsub.f32 %v5414, %v5482
        %v5487 = vsub.f32 %v5415, %v5483
        %v5488 = vsub.f32 %v5416, %v5484
        %5490 = vset.pattern.permute.xlu0 0
        %5491 = vperm.xlu0 %5490, %v5477
        %v5492 = vpop.permute.xlu0 %5491
        %5495 = vset.pattern.permute.xlu0 0
        %5496 = vperm.xlu0 %5495, %v5478
        %v5497 = vpop.permute.xlu0 %5496
        %5500 = vset.pattern.permute.xlu0 0
        %5501 = vperm.xlu0 %5500, %v5479
        %v5502 = vpop.permute.xlu0 %5501
        %5505 = vset.pattern.permute.xlu0 0
        %5506 = vperm.xlu0 %5505, %v5480
        %v5507 = vpop.permute.xlu0 %5506
        %v5509 = vmul.f32 %v5391, %v5492
        %v5510 = vmul.f32 %v5393, %v5492
        %v5511 = vmul.f32 %v5395, %v5497
        %v5512 = vmul.f32 %v5397, %v5497
        %v5513 = vmul.f32 %v5401, %v5502
        %v5514 = vmul.f32 %v5403, %v5502
        %v5515 = vmul.f32 %v5405, %v5507
        %v5516 = vmul.f32 %v5407, %v5507
        %5518 = vset.pattern.permute.xlu0 0
        %5519 = vperm.xlu0 %5518, %v5485
        %v5520 = vpop.permute.xlu0 %5519
        %5523 = vset.pattern.permute.xlu0 0
        %5524 = vperm.xlu0 %5523, %v5486
        %v5525 = vpop.permute.xlu0 %5524
        %5528 = vset.pattern.permute.xlu0 0
        %5529 = vperm.xlu0 %5528, %v5487
        %v5530 = vpop.permute.xlu0 %5529
        %5533 = vset.pattern.permute.xlu0 0
        %5534 = vperm.xlu0 %5533, %v5488
        %v5535 = vpop.permute.xlu0 %5534
        %v5537 = vadd.f32 %v5509, %v5520
        %v5538 = vadd.f32 %v5510, %v5520
        %v5539 = vadd.f32 %v5511, %v5525
        %v5540 = vadd.f32 %v5512, %v5525
        %v5541 = vadd.f32 %v5513, %v5530
        %v5542 = vadd.f32 %v5514, %v5530
        %v5543 = vadd.f32 %v5515, %v5535
        %v5544 = vadd.f32 %v5516, %v5535
        %v5545 = vmax.f32 %v5537, 0.0
        %v5546 = vmax.f32 %v5538, 0.0
        %v5547 = vmax.f32 %v5539, 0.0
        %v5548 = vmax.f32 %v5540, 0.0
        %v5549 = vmax.f32 %v5541, 0.0
        %v5550 = vmax.f32 %v5542, 0.0
        %v5551 = vmax.f32 %v5543, 0.0
        %v5552 = vmax.f32 %v5544, 0.0
        %v5553 = vpack.c.bf16 %v5547, %v5545
        %v5554 = vpack.c.bf16 %v5548, %v5546
        %v5555 = vpack.c.bf16 %v5551, %v5549
        %v5556 = vpack.c.bf16 %v5552, %v5550
        %v5561 = vunpack.c.l.b16 %v5553
        %v5562 = vunpack.c.l.b16 %v5554
        %v5563 = vunpack.c.h.b16 %v5553
        %v5564 = vunpack.c.h.b16 %v5554
        %v5565 = vunpack.c.l.b16 %v5555
        %v5566 = vunpack.c.l.b16 %v5556
        %v5567 = vunpack.c.h.b16 %v5555
        %v5568 = vunpack.c.h.b16 %v5556
        %v5569 = vpack.c.b16 %v5562, %v5561
        %v5570 = vpack.c.b16 %v5564, %v5563
        %v5571 = vpack.c.b16 %v5566, %v5565
        %v5572 = vpack.c.b16 %v5568, %v5567
        %5577 = vst [vmem:[%s340] sm:$0xff] %v5569
        %5578 = vst [vmem:[%s340 + $0x8] sm:$0xff] %v5570
        %5579 = vst [vmem:[%s340 + $0x10] sm:$0xff] %v5571
        %5580 = vst [vmem:[%s340 + $0x18] sm:$0xff] %v5572
        %s5581 = sand.u32 %s226, 1
        %s5582 = scalar_lea.sflag [#allocation5], %s5581
        %s5583 = sand.u32 %s226, 1
        %s5584 = smul.addr %s5583, 32
        %s5585 = scalar_lea.vmem [#allocation6], %s5584
        // Predicated region
        $region61: #{tpu_custom_call.1} parent=55 // pred_check
          %p5586 = pneg %p236
        $region62: #{tpu_custom_call.1} parent=55 // pred_check_branch
          %5588 = sbr.rel (%p5586) target = $region64
        $region63: #{tpu_custom_call.1} parent=55 // pred_region
          %s5590 = ssub.s32 512, 512
          %5591 = vsyncadd %s5582, %s5590
          %s5592 = smul.addr %s24, 8
          %s5593 = smul.addr %s5592, 64
          %s5594 = scalar_lea.hbm %s9, %s5593
          %s5595 = sshll.u32 %s5585, 4
          %s5596 = int_to_ptr.vmem [resolvable:$true] %s5595
          %5601 = dma.vmem_to_hbm [thread:$0]  %s5596, 512, %s5594, %s5582, 128, 128, 8
        $region64: #{tpu_custom_call.1} parent=55 // pred_fallthru
          _
      $region56: #{tpu_custom_call.1} parent=5 // pred_fallthru
        _
      %p5602 = scmp.le.s32.totalorder 2, %s19
      // Predicated region
      $region65: #{tpu_custom_call.1} parent=5 // pred_check
        %p5603 = pneg %p5602
      $region66: #{tpu_custom_call.1} parent=5 // pred_check_branch
        %5605 = sbr.rel (%p5603) target = $region68
      $region67: #{tpu_custom_call.1} parent=5 // pred_region
        %s5606 = ssub.s32 %s19, 2
        // Predicated region
        $region69: #{tpu_custom_call.1} parent=67 // pred_check
          %p5607 = pneg %p242
        $region70: #{tpu_custom_call.1} parent=67 // pred_check_branch
          %5609 = sbr.rel (%p5607) target = $region72
        $region71: #{tpu_custom_call.1} parent=67 // pred_region
          %s5610 = sand.u32 %s227, 1
          %s5611 = scalar_lea.sflag [#allocation5], %s5610
          %s5612 = sand.u32 %s227, 1
          %s5613 = smul.addr %s5612, 32
          %s5614 = scalar_lea.vmem [#allocation6], %s5613
          %5615 = dma.done %s5611, 512
        $region72: #{tpu_custom_call.1} parent=67 // pred_fallthru
          _
      $region68: #{tpu_custom_call.1} parent=5 // pred_fallthru
        _
    $region6: #{tpu_custom_call.1} parent=1 // loop_footer
      %s23 = sadd.s32 1, %s19
    $region7: #{tpu_custom_call.1} parent=1 // loop_footer_branch
      %18 = sbr.rel target = $region3
    $region8: #{tpu_custom_call.1} parent=1 // loop_exit
      _
    %5616 = vsyncpa [#allocation4], 1
    %s5617 = scalar_lea.sflag [#allocation4], 1
    %5618 = vsyncpa %s5617, 1
    %5619 = vsyncpa [#allocation5], 1
    %s5620 = scalar_lea.sflag [#allocation5], 1
    %5621 = vsyncpa %s5620, 1

</llo_original>
